<compile_context>
chip_gen: v7x
topology: tpu7x:2x2x1
jax: 0.10.0
libtpu: 0.0.40
codegen_flags: <defaults>
</compile_context>

<pallas_src>
import jax
import jax.numpy as jnp
from jax import lax
from jax.experimental import pallas as pl
from jax.experimental.pallas import tpu as pltpu
import numpy as np

# Problem sizes (small, consistent with the module; in_channels is a ctor arg).
N, CIN, H, W = 2, 32, 16, 16
CMID = 256                    # hidden channels of the 3x3 conv
CCLS = 2                      # cls_score output channels
CBOX = 4                      # bbox_pred output channels
KH = KW = 3
K_IM2COL = KH * KW * CIN      # 288
K_PAD = 384                   # contraction dim padded to a multiple of 128
M_ROWS = N * H * W            # 512
CHEAD = CCLS + CBOX           # 6
CHEAD_PAD = 128               # lane-dense padded head width


def rpn_kernel(patch_ref, w_ref, b_ref, out_ref):
    # patch_ref: (M_ROWS, K_PAD)      bf16  im2col'd input (zero-padded K)
    # w_ref:     (K_PAD, CHEAD_PAD)   bf16  fused conv+head weight
    # b_ref:     (1, CHEAD_PAD)       f32   fused bias
    # out_ref:   (M_ROWS, CHEAD_PAD)  bf16  lane-dense fused head output
    acc = jnp.dot(patch_ref[...], w_ref[...],
                  preferred_element_type=jnp.float32)          # (512, 128) f32
    out_ref[...] = (acc + b_ref[...]).astype(out_ref.dtype)


def _im2col(x_nhwc):
    # (N, H, W, CIN) -> (N*H*W, K_PAD); tap order (dy, dx, cin) matches
    # wconv.reshape(KH*KW*CIN, CMID).  Tail K columns are zero padding.
    x_pad = jnp.pad(x_nhwc, ((0, 0), (1, 1), (1, 1), (0, 0)))
    taps = [x_pad[:, dy:dy + H, dx:dx + W, :]
            for dy in range(KH) for dx in range(KW)]
    patches = jnp.concatenate(taps, axis=-1).reshape(M_ROWS, K_IM2COL)
    return jnp.pad(patches, ((0, 0), (0, K_PAD - K_IM2COL)))


def prepare_params(wconv, bconv, wcls, bcls, wbox, bbox):
    # One-time fusion of conv + the two 1x1 heads (module has no nonlinearity
    # between them).  Done in f32, single bf16 quantization of the result.
    wconv2 = wconv.reshape(K_IM2COL, CMID).astype(jnp.float32)      # (288, 256)
    w_head = jnp.concatenate([wcls, wbox], axis=1)                  # (256, 6)
    w_head = jnp.pad(w_head, ((0, 0), (0, CHEAD_PAD - CHEAD)))      # (256, 128)
    b_head = jnp.pad(jnp.concatenate([bcls, bbox]),
                     (0, CHEAD_PAD - CHEAD))                        # (128,)
    w_fused = wconv2 @ w_head                                       # (288, 128)
    w_fused = jnp.pad(w_fused, ((0, K_PAD - K_IM2COL), (0, 0)))
    w_fused = w_fused.astype(jnp.bfloat16)                          # (384, 128)
    b_fused = (bconv @ w_head + b_head).reshape(1, CHEAD_PAD)
    b_fused = b_fused.astype(jnp.float32)
    return w_fused, b_fused


@jax.jit
def rpn_forward(x_nhwc, w_fused, b_fused):
    patches = _im2col(x_nhwc).astype(jnp.bfloat16)                  # (512, 384)

    vmem = pl.BlockSpec(memory_space=pltpu.MemorySpace.VMEM)
    head = pl.pallas_call(
        rpn_kernel,
        out_shape=jax.ShapeDtypeStruct((M_ROWS, CHEAD_PAD), jnp.bfloat16),
        in_specs=[vmem, vmem, vmem],
        out_specs=vmem,
        compiler_params=pltpu.CompilerParams(
            # Let XLA fuse the im2col producer into the patches operand so it
            # is not materialized through HBM; weights/bias are plain params.
            allow_input_fusion=[True, False, False]),
    )(patches, w_fused, b_fused)

    # Split the lane-dense fused head back into the two module outputs (NHWC).
    head = head.reshape(N, H, W, CHEAD_PAD)
    cls = head[..., :CCLS]
    box = head[..., CCLS:CCLS + CBOX]
    return cls, box


def reference_forward(x_nhwc, wconv, bconv, wcls, bcls, wbox, bbox):
    # Full-f32 reference matching the PyTorch module semantics (NHWC layout).
    dn = ("NHWC", "HWIO", "NHWC")
    y = lax.conv_general_dilated(x_nhwc, wconv, (1, 1), "SAME",
                                 dimension_numbers=dn) + bconv
    cls = jnp.einsum("nhwc,co->nhwo", y, wcls) + bcls
    box = jnp.einsum("nhwc,co->nhwo", y, wbox) + bbox
    return cls, box


if __name__ == "__main__":
    key = jax.random.PRNGKey(0)
    kx, k1, k2, k3, k4, k5, k6 = jax.random.split(key, 7)

    # Deterministic synthetic parameters (shapes match the PyTorch module,
    # stored HWIO / (cin, cout) for the channels-last kernel).
    x = jax.random.normal(kx, (N, H, W, CIN), jnp.float32)
    wconv = jax.random.normal(k1, (KH, KW, CIN, CMID), jnp.float32) * 0.02
    bconv = jax.random.normal(k2, (CMID,), jnp.float32) * 0.02
    wcls = jax.random.normal(k3, (CMID, CCLS), jnp.float32) * 0.02
    bcls = jax.random.normal(k4, (CCLS,), jnp.float32) * 0.02
    wbox = jax.random.normal(k5, (CMID, CBOX), jnp.float32) * 0.02
    bbox = jax.random.normal(k6, (CBOX,), jnp.float32) * 0.02

    # One-time weight fusion (hoisted out of the per-forward path).
    w_fused, b_fused = prepare_params(wconv, bconv, wcls, bcls, wbox, bbox)
    w_fused = jax.block_until_ready(w_fused)
    b_fused = jax.block_until_ready(b_fused)

    cls_out, box_out = rpn_forward(x, w_fused, b_fused)
    cls_out = jax.block_until_ready(cls_out)
    box_out = jax.block_until_ready(box_out)

    cls_ref, box_ref = reference_forward(x, wconv, bconv, wcls, bcls, wbox, bbox)
    # bf16 operands/output with f32 accumulation => bf16-level tolerance.
    np.testing.assert_allclose(np.asarray(cls_out.astype(jnp.float32)),
                               np.asarray(cls_ref), rtol=2e-2, atol=2e-2)
    np.testing.assert_allclose(np.asarray(box_out.astype(jnp.float32)),
                               np.asarray(box_ref), rtol=2e-2, atol=2e-2)

    print("KERNEL_OK")
</pallas_src>

<mosaic_0001>
module attributes {stable_mosaic.version = 11 : i64} {
  func.func @rpn_kernel(%arg0: memref<512x384xbf16, #tpu.memory_space<vmem>>, %arg1: memref<384x128xbf16, #tpu.memory_space<vmem>>, %arg2: memref<1x128xf32, #tpu.memory_space<vmem>>, %arg3: memref<512x128xbf16, #tpu.memory_space<vmem>>) attributes {dimension_semantics = [], scalar_prefetch = 0 : i64, scratch_operands = 0 : i64, tpu.core_type = #tpu.core_type<tc>} {
    %c0 = arith.constant 0 : index
    %c0_0 = arith.constant 0 : index
    %0 = vector.load %arg0[%c0, %c0_0] : memref<512x384xbf16, #tpu.memory_space<vmem>>, vector<512x384xbf16>
    %c0_1 = arith.constant 0 : index
    %c0_2 = arith.constant 0 : index
    %1 = vector.load %arg1[%c0_1, %c0_2] : memref<384x128xbf16, #tpu.memory_space<vmem>>, vector<384x128xbf16>
    %cst = arith.constant dense<0.000000e+00> : vector<512x128xf32>
    %2 = tpu.matmul %0, %1, %cst {dimension_numbers = #tpu.dot_dimension_numbers<[1], [0], [0], [1], [0, 0, 1, 1], [], []>} : vector<512x384xbf16>, vector<384x128xbf16>, vector<512x128xf32> -> vector<512x128xf32>
    %c0_3 = arith.constant 0 : index
    %c0_4 = arith.constant 0 : index
    %3 = vector.load %arg2[%c0_3, %c0_4] : memref<1x128xf32, #tpu.memory_space<vmem>>, vector<1x128xf32>
    %4 = vector.broadcast %3 : vector<1x128xf32> to vector<512x128xf32>
    %5 = arith.addf %2, %4 : vector<512x128xf32>
    %6 = arith.truncf %5 : vector<512x128xf32> to vector<512x128xbf16>
    %c0_5 = arith.constant 0 : index
    %c0_6 = arith.constant 0 : index
    %7 = vector.load %arg3[%c0_5, %c0_6] : memref<512x128xbf16, #tpu.memory_space<vmem>>, vector<512x128xbf16>
    tpu.vector_store %arg3[%c0_5, %c0_6], %6 {strides = array<i32>} : memref<512x128xbf16, #tpu.memory_space<vmem>>, vector<512x128xbf16>,
    return
  }
}

</mosaic_0001>

<llo_original>
// kernel: rpn_forward.2
$region0: #{rpn_forward.2}
  #allocation0 [shape = 'u32[]', space=smem, size = 0x4, offset = 0x4, fixed_abs, tag = 'smem constant byte address 0x4 - core index']
  #allocation1 [shape = 'u32[144,128]{1,0:T(1,128)}', space=vmem, size = 0x12000, scoped, tag = 'internal scratch']
  #allocation2 [shape = 'u32[2048]{0}', space=vmem, size = 0x2000, scoped, tag = 'scoped memory for rpn_forward.2']
  #allocation3 [shape = 'u32[2048]{0}', space=vmem, size = 0x2000, scoped, tag = 'scoped memory for rpn_forward.2']
  #allocation4 [shape = 'u32[2048]{0}', space=vmem, size = 0x2000, scoped, tag = 'scoped memory for rpn_forward.2']
  #allocation5 [shape = 'u32[2048]{0}', space=vmem, size = 0x2000, scoped, tag = 'scoped memory for rpn_forward.2']
  #allocation6 [shape = 'u32[2048]{0}', space=vmem, size = 0x2000, scoped, tag = 'scoped memory for rpn_forward.2']
  %s0 = inlined_call_operand.vmem [shape: bf16[384,128], index: 0, kind: input, shape index: {}]
  %s1 = inlined_call_operand.vmem [shape: f32[1,128], index: 1, kind: input, shape index: {}]
  %s2 = inlined_call_operand.vmem [shape: bf16[512,288], index: 2, kind: input, shape index: {}]
  %s3 = inlined_call_operand.<no memory space> [shape: bf16[], index: 3, kind: input, shape index: {}]
  %s4 = inlined_call_operand.vmem [shape: bf16[512,128], index: 4, kind: output, shape index: {}]
  %s5 = sld [smem:[#allocation0]]
  $region22: #{rpn_forward.2} parent=0
    _
  %s7 = ssub.s32 1, %s5
  %s8 = scalar_select 0, %s7, %s5
  %v9 = vstv %s3
  %v10 = vunpack.i.l.bf16 %v9
  %v12 = vunpack.i.h.bf16 %v9
  $region1: #{rpn_forward.2} parent=0
    #allocation7 [shape = 'u8[393216]{0}', space=vmem, size = 0x60000, dematerialized = true, scoped, tag = 'FusionAdapter Buffer %fusion.1 = bf16[512,384]{1,0:T(8,128)(2,1)} fusion(%param_2.1, %param_3), kind=kLoop, calls=%fused_computation.2.clone, metadata={op_name="jit(rpn_forward)/jit(_pad)/pad" stack_frame_id=12}']
    // Predicated region
    $region2: #{rpn_forward.2} parent=1 // pred_check
      _
    $region3: #{rpn_forward.2} parent=1 // pred_check_branch
      %15 = sbr.rel (0) target = $region5
    $region4: #{rpn_forward.2} parent=1 // pred_region
      _
    $region5: #{rpn_forward.2} parent=1 // pred_fallthru
      _
    // Predicated region
    $region6: #{rpn_forward.2} parent=1 // pred_check
      _
    $region7: #{rpn_forward.2} parent=1 // pred_check_branch
      %17 = sbr.rel (0) target = $region9
    $region8: #{rpn_forward.2} parent=1 // pred_region
      _
    $region9: #{rpn_forward.2} parent=1 // pred_fallthru
      _
    // Predicated region
    $region10: #{rpn_forward.2} parent=1 // pred_check
      _
    $region11: #{rpn_forward.2} parent=1 // pred_check_branch
      %19 = sbr.rel (0) target = $region13
    $region12: #{rpn_forward.2} parent=1 // pred_region
      _
    $region13: #{rpn_forward.2} parent=1 // pred_fallthru
      _
    %v20 = vld [vmem:[%s2] sm:$0xf]
    %v21 = vunpack.c.l.bf16 %v20
    %v22 = vunpack.c.h.bf16 %v20
    %v23 = vlaneseq
    %v24 = vand.u32 %v23, 127
    %vm26 = vcmp.lt.s32.totalorder %v24, 288
    %v27 = vsel %vm26, %v21, %v10
    %v28 = vpack.c.bf16 0.0, %v27
    %30 = vst [vmem:[#allocation7] sm:$0xf] %v28
    %s31 = scalar_lea.vmem %s2, 4
    %v32 = vld [vmem:[%s31] sm:$0xf]
    %v33 = vunpack.c.l.bf16 %v32
    %v34 = vunpack.c.h.bf16 %v32
    %v35 = vlaneseq
    %v36 = vand.u32 %v35, 127
    %v37 = vadd.s32 %v36, 128
    %vm38 = vcmp.lt.s32.totalorder %v37, 288
    %v39 = vsel %vm38, %v33, %v10
    %s40 = scalar_lea.vmem [#allocation7], 4
    %v41 = vpack.c.bf16 0.0, %v39
    %43 = vst [vmem:[%s40] sm:$0xf] %v41
    %s44 = scalar_lea.vmem %s2, 8
    %s46 = sor.u32 255, 127
    %s47 = sand.u32 %s46, 85
    %s48 = sshrl.u32 %s47, 1
    %s49 = sor.u32 %s47, %s48
    %s50 = sand.u32 51, %s49
    %s51 = sshrl.u32 %s50, 2
    %s52 = sor.u32 %s50, %s51
    %s53 = sand.u32 15, %s52
    %v54 = vld [vmem:[%s44] sm:%s53]
    %v55 = vunpack.c.l.bf16 %v54
    %v56 = vunpack.c.h.bf16 %v54
    %v57 = vlaneseq
    %v58 = vand.u32 %v57, 127
    %v59 = vadd.s32 %v58, 256
    %vm60 = vcmp.lt.s32.totalorder %v59, 288
    %v61 = vsel %vm60, %v55, %v10
    %s62 = scalar_lea.vmem [#allocation7], 8
    %v63 = vpack.c.bf16 0.0, %v61
    %65 = vst [vmem:[%s62] sm:$0xf] %v63
    %s66 = scalar_lea.vmem %s2, 12
    %v67 = vld [vmem:[%s66] sm:$0xf]
    %v68 = vunpack.c.l.bf16 %v67
    %v69 = vunpack.c.h.bf16 %v67
    %v70 = vlaneseq
    %v71 = vand.u32 %v70, 127
    %vm73 = vcmp.lt.s32.totalorder %v71, 288
    %v74 = vsel %vm73, %v68, %v10
    %s75 = scalar_lea.vmem [#allocation7], 12
    %v76 = vpack.c.bf16 0.0, %v74
    %78 = vst [vmem:[%s75] sm:$0xf] %v76
    %s79 = scalar_lea.vmem %s2, 16
    %v80 = vld [vmem:[%s79] sm:$0xf]
    %v81 = vunpack.c.l.bf16 %v80
    %v82 = vunpack.c.h.bf16 %v80
    %v83 = vlaneseq
    %v84 = vand.u32 %v83, 127
    %v85 = vadd.s32 %v84, 128
    %vm86 = vcmp.lt.s32.totalorder %v85, 288
    %v87 = vsel %vm86, %v81, %v10
    %s88 = scalar_lea.vmem [#allocation7], 16
    %v89 = vpack.c.bf16 0.0, %v87
    %91 = vst [vmem:[%s88] sm:$0xf] %v89
    %s92 = scalar_lea.vmem %s2, 20
    %s94 = sor.u32 255, 127
    %s95 = sand.u32 %s94, 85
    %s96 = sshrl.u32 %s95, 1
    %s97 = sor.u32 %s95, %s96
    %s98 = sand.u32 51, %s97
    %s99 = sshrl.u32 %s98, 2
    %s100 = sor.u32 %s98, %s99
    %s101 = sand.u32 15, %s100
    %v102 = vld [vmem:[%s92] sm:%s101]
    %v103 = vunpack.c.l.bf16 %v102
    %v104 = vunpack.c.h.bf16 %v102
    %v105 = vlaneseq
    %v106 = vand.u32 %v105, 127
    %v107 = vadd.s32 %v106, 256
    %vm108 = vcmp.lt.s32.totalorder %v107, 288
    %v109 = vsel %vm108, %v103, %v10
    %s110 = scalar_lea.vmem [#allocation7], 20
    %v111 = vpack.c.bf16 0.0, %v109
    %113 = vst [vmem:[%s110] sm:$0xf] %v111
    %s114 = scalar_lea.vmem %s2, 24
    %v115 = vld [vmem:[%s114] sm:$0xf]
    %v116 = vunpack.c.l.bf16 %v115
    %v117 = vunpack.c.h.bf16 %v115
    %v118 = vlaneseq
    %v119 = vand.u32 %v118, 127
    %vm121 = vcmp.lt.s32.totalorder %v119, 288
    %v122 = vsel %vm121, %v116, %v10
    %s123 = scalar_lea.vmem [#allocation7], 24
    %v124 = vpack.c.bf16 0.0, %v122
    %126 = vst [vmem:[%s123] sm:$0xf] %v124
    %s127 = scalar_lea.vmem %s2, 28
    %v128 = vld [vmem:[%s127] sm:$0xf]
    %v129 = vunpack.c.l.bf16 %v128
    %v130 = vunpack.c.h.bf16 %v128
    %v131 = vlaneseq
    %v132 = vand.u32 %v131, 127
    %v133 = vadd.s32 %v132, 128
    %vm134 = vcmp.lt.s32.totalorder %v133, 288
    %v135 = vsel %vm134, %v129, %v10
    %s136 = scalar_lea.vmem [#allocation7], 28
    %v137 = vpack.c.bf16 0.0, %v135
    %139 = vst [vmem:[%s136] sm:$0xf] %v137
    %s140 = scalar_lea.vmem %s2, 32
    %s142 = sor.u32 255, 127
    %s143 = sand.u32 %s142, 85
    %s144 = sshrl.u32 %s143, 1
    %s145 = sor.u32 %s143, %s144
    %s146 = sand.u32 51, %s145
    %s147 = sshrl.u32 %s146, 2
    %s148 = sor.u32 %s146, %s147
    %s149 = sand.u32 15, %s148
    %v150 = vld [vmem:[%s140] sm:%s149]
    %v151 = vunpack.c.l.bf16 %v150
    %v152 = vunpack.c.h.bf16 %v150
    %v153 = vlaneseq
    %v154 = vand.u32 %v153, 127
    %v155 = vadd.s32 %v154, 256
    %vm156 = vcmp.lt.s32.totalorder %v155, 288
    %v157 = vsel %vm156, %v151, %v10
    %s158 = scalar_lea.vmem [#allocation7], 32
    %v159 = vpack.c.bf16 0.0, %v157
    %161 = vst [vmem:[%s158] sm:$0xf] %v159
    %s162 = scalar_lea.vmem %s2, 36
    %v163 = vld [vmem:[%s162] sm:$0xf]
    %v164 = vunpack.c.l.bf16 %v163
    %v165 = vunpack.c.h.bf16 %v163
    %v166 = vlaneseq
    %v167 = vand.u32 %v166, 127
    %vm169 = vcmp.lt.s32.totalorder %v167, 288
    %v170 = vsel %vm169, %v164, %v10
    %s171 = scalar_lea.vmem [#allocation7], 36
    %v172 = vpack.c.bf16 0.0, %v170
    %174 = vst [vmem:[%s171] sm:$0xf] %v172
    %s175 = scalar_lea.vmem %s2, 40
    %v176 = vld [vmem:[%s175] sm:$0xf]
    %v177 = vunpack.c.l.bf16 %v176
    %v178 = vunpack.c.h.bf16 %v176
    %v179 = vlaneseq
    %v180 = vand.u32 %v179, 127
    %v181 = vadd.s32 %v180, 128
    %vm182 = vcmp.lt.s32.totalorder %v181, 288
    %v183 = vsel %vm182, %v177, %v10
    %s184 = scalar_lea.vmem [#allocation7], 40
    %v185 = vpack.c.bf16 0.0, %v183
    %187 = vst [vmem:[%s184] sm:$0xf] %v185
    %s188 = scalar_lea.vmem %s2, 44
    %s190 = sor.u32 255, 127
    %s191 = sand.u32 %s190, 85
    %s192 = sshrl.u32 %s191, 1
    %s193 = sor.u32 %s191, %s192
    %s194 = sand.u32 51, %s193
    %s195 = sshrl.u32 %s194, 2
    %s196 = sor.u32 %s194, %s195
    %s197 = sand.u32 15, %s196
    %v198 = vld [vmem:[%s188] sm:%s197]
    %v199 = vunpack.c.l.bf16 %v198
    %v200 = vunpack.c.h.bf16 %v198
    %v201 = vlaneseq
    %v202 = vand.u32 %v201, 127
    %v203 = vadd.s32 %v202, 256
    %vm204 = vcmp.lt.s32.totalorder %v203, 288
    %v205 = vsel %vm204, %v199, %v10
    %s206 = scalar_lea.vmem [#allocation7], 44
    %v207 = vpack.c.bf16 0.0, %v205
    %209 = vst [vmem:[%s206] sm:$0xf] %v207
    %s210 = scalar_lea.vmem %s2, 48
    %v211 = vld [vmem:[%s210] sm:$0xf]
    %v212 = vunpack.c.l.bf16 %v211
    %v213 = vunpack.c.h.bf16 %v211
    %v214 = vlaneseq
    %v215 = vand.u32 %v214, 127
    %vm217 = vcmp.lt.s32.totalorder %v215, 288
    %v218 = vsel %vm217, %v212, %v10
    %s219 = scalar_lea.vmem [#allocation7], 48
    %v220 = vpack.c.bf16 0.0, %v218
    %222 = vst [vmem:[%s219] sm:$0xf] %v220
    %s223 = scalar_lea.vmem %s2, 52
    %v224 = vld [vmem:[%s223] sm:$0xf]
    %v225 = vunpack.c.l.bf16 %v224
    %v226 = vunpack.c.h.bf16 %v224
    %v227 = vlaneseq
    %v228 = vand.u32 %v227, 127
    %v229 = vadd.s32 %v228, 128
    %vm230 = vcmp.lt.s32.totalorder %v229, 288
    %v231 = vsel %vm230, %v225, %v10
    %s232 = scalar_lea.vmem [#allocation7], 52
    %v233 = vpack.c.bf16 0.0, %v231
    %235 = vst [vmem:[%s232] sm:$0xf] %v233
    %s236 = scalar_lea.vmem %s2, 56
    %s238 = sor.u32 255, 127
    %s239 = sand.u32 %s238, 85
    %s240 = sshrl.u32 %s239, 1
    %s241 = sor.u32 %s239, %s240
    %s242 = sand.u32 51, %s241
    %s243 = sshrl.u32 %s242, 2
    %s244 = sor.u32 %s242, %s243
    %s245 = sand.u32 15, %s244
    %v246 = vld [vmem:[%s236] sm:%s245]
    %v247 = vunpack.c.l.bf16 %v246
    %v248 = vunpack.c.h.bf16 %v246
    %v249 = vlaneseq
    %v250 = vand.u32 %v249, 127
    %v251 = vadd.s32 %v250, 256
    %vm252 = vcmp.lt.s32.totalorder %v251, 288
    %v253 = vsel %vm252, %v247, %v10
    %s254 = scalar_lea.vmem [#allocation7], 56
    %v255 = vpack.c.bf16 0.0, %v253
    %257 = vst [vmem:[%s254] sm:$0xf] %v255
    %s258 = scalar_lea.vmem %s2, 60
    %v259 = vld [vmem:[%s258] sm:$0xf]
    %v260 = vunpack.c.l.bf16 %v259
    %v261 = vunpack.c.h.bf16 %v259
    %v262 = vlaneseq
    %v263 = vand.u32 %v262, 127
    %vm265 = vcmp.lt.s32.totalorder %v263, 288
    %v266 = vsel %vm265, %v260, %v10
    %s267 = scalar_lea.vmem [#allocation7], 60
    %v268 = vpack.c.bf16 0.0, %v266
    %270 = vst [vmem:[%s267] sm:$0xf] %v268
    %s271 = scalar_lea.vmem %s2, 64
    %v272 = vld [vmem:[%s271] sm:$0xf]
    %v273 = vunpack.c.l.bf16 %v272
    %v274 = vunpack.c.h.bf16 %v272
    %v275 = vlaneseq
    %v276 = vand.u32 %v275, 127
    %v277 = vadd.s32 %v276, 128
    %vm278 = vcmp.lt.s32.totalorder %v277, 288
    %v279 = vsel %vm278, %v273, %v10
    %s280 = scalar_lea.vmem [#allocation7], 64
    %v281 = vpack.c.bf16 0.0, %v279
    %283 = vst [vmem:[%s280] sm:$0xf] %v281
    %s284 = scalar_lea.vmem %s2, 68
    %s286 = sor.u32 255, 127
    %s287 = sand.u32 %s286, 85
    %s288 = sshrl.u32 %s287, 1
    %s289 = sor.u32 %s287, %s288
    %s290 = sand.u32 51, %s289
    %s291 = sshrl.u32 %s290, 2
    %s292 = sor.u32 %s290, %s291
    %s293 = sand.u32 15, %s292
    %v294 = vld [vmem:[%s284] sm:%s293]
    %v295 = vunpack.c.l.bf16 %v294
    %v296 = vunpack.c.h.bf16 %v294
    %v297 = vlaneseq
    %v298 = vand.u32 %v297, 127
    %v299 = vadd.s32 %v298, 256
    %vm300 = vcmp.lt.s32.totalorder %v299, 288
    %v301 = vsel %vm300, %v295, %v10
    %s302 = scalar_lea.vmem [#allocation7], 68
    %v303 = vpack.c.bf16 0.0, %v301
    %305 = vst [vmem:[%s302] sm:$0xf] %v303
    %s306 = scalar_lea.vmem %s2, 72
    %v307 = vld [vmem:[%s306] sm:$0xf]
    %v308 = vunpack.c.l.bf16 %v307
    %v309 = vunpack.c.h.bf16 %v307
    %v310 = vlaneseq
    %v311 = vand.u32 %v310, 127
    %vm313 = vcmp.lt.s32.totalorder %v311, 288
    %v314 = vsel %vm313, %v308, %v10
    %s315 = scalar_lea.vmem [#allocation7], 72
    %v316 = vpack.c.bf16 0.0, %v314
    %318 = vst [vmem:[%s315] sm:$0xf] %v316
    %s319 = scalar_lea.vmem %s2, 76
    %v320 = vld [vmem:[%s319] sm:$0xf]
    %v321 = vunpack.c.l.bf16 %v320
    %v322 = vunpack.c.h.bf16 %v320
    %v323 = vlaneseq
    %v324 = vand.u32 %v323, 127
    %v325 = vadd.s32 %v324, 128
    %vm326 = vcmp.lt.s32.totalorder %v325, 288
    %v327 = vsel %vm326, %v321, %v10
    %s328 = scalar_lea.vmem [#allocation7], 76
    %v329 = vpack.c.bf16 0.0, %v327
    %331 = vst [vmem:[%s328] sm:$0xf] %v329
    %s332 = scalar_lea.vmem %s2, 80
    %s334 = sor.u32 255, 127
    %s335 = sand.u32 %s334, 85
    %s336 = sshrl.u32 %s335, 1
    %s337 = sor.u32 %s335, %s336
    %s338 = sand.u32 51, %s337
    %s339 = sshrl.u32 %s338, 2
    %s340 = sor.u32 %s338, %s339
    %s341 = sand.u32 15, %s340
    %v342 = vld [vmem:[%s332] sm:%s341]
    %v343 = vunpack.c.l.bf16 %v342
    %v344 = vunpack.c.h.bf16 %v342
    %v345 = vlaneseq
    %v346 = vand.u32 %v345, 127
    %v347 = vadd.s32 %v346, 256
    %vm348 = vcmp.lt.s32.totalorder %v347, 288
    %v349 = vsel %vm348, %v343, %v10
    %s350 = scalar_lea.vmem [#allocation7], 80
    %v351 = vpack.c.bf16 0.0, %v349
    %353 = vst [vmem:[%s350] sm:$0xf] %v351
    %s354 = scalar_lea.vmem %s2, 84
    %v355 = vld [vmem:[%s354] sm:$0xf]
    %v356 = vunpack.c.l.bf16 %v355
    %v357 = vunpack.c.h.bf16 %v355
    %v358 = vlaneseq
    %v359 = vand.u32 %v358, 127
    %vm361 = vcmp.lt.s32.totalorder %v359, 288
    %v362 = vsel %vm361, %v356, %v10
    %s363 = scalar_lea.vmem [#allocation7], 84
    %v364 = vpack.c.bf16 0.0, %v362
    %366 = vst [vmem:[%s363] sm:$0xf] %v364
    %s367 = scalar_lea.vmem %s2, 88
    %v368 = vld [vmem:[%s367] sm:$0xf]
    %v369 = vunpack.c.l.bf16 %v368
    %v370 = vunpack.c.h.bf16 %v368
    %v371 = vlaneseq
    %v372 = vand.u32 %v371, 127
    %v373 = vadd.s32 %v372, 128
    %vm374 = vcmp.lt.s32.totalorder %v373, 288
    %v375 = vsel %vm374, %v369, %v10
    %s376 = scalar_lea.vmem [#allocation7], 88
    %v377 = vpack.c.bf16 0.0, %v375
    %379 = vst [vmem:[%s376] sm:$0xf] %v377
    %s380 = scalar_lea.vmem %s2, 92
    %s382 = sor.u32 255, 127
    %s383 = sand.u32 %s382, 85
    %s384 = sshrl.u32 %s383, 1
    %s385 = sor.u32 %s383, %s384
    %s386 = sand.u32 51, %s385
    %s387 = sshrl.u32 %s386, 2
    %s388 = sor.u32 %s386, %s387
    %s389 = sand.u32 15, %s388
    %v390 = vld [vmem:[%s380] sm:%s389]
    %v391 = vunpack.c.l.bf16 %v390
    %v392 = vunpack.c.h.bf16 %v390
    %v393 = vlaneseq
    %v394 = vand.u32 %v393, 127
    %v395 = vadd.s32 %v394, 256
    %vm396 = vcmp.lt.s32.totalorder %v395, 288
    %v397 = vsel %vm396, %v391, %v10
    %s398 = scalar_lea.vmem [#allocation7], 92
    %v399 = vpack.c.bf16 0.0, %v397
    %401 = vst [vmem:[%s398] sm:$0xf] %v399
    %s402 = scalar_lea.vmem %s2, 96
    %v403 = vld [vmem:[%s402] sm:$0xf]
    %v404 = vunpack.c.l.bf16 %v403
    %v405 = vunpack.c.h.bf16 %v403
    %v406 = vlaneseq
    %v407 = vand.u32 %v406, 127
    %vm409 = vcmp.lt.s32.totalorder %v407, 288
    %v410 = vsel %vm409, %v404, %v10
    %s411 = scalar_lea.vmem [#allocation7], 96
    %v412 = vpack.c.bf16 0.0, %v410
    %414 = vst [vmem:[%s411] sm:$0xf] %v412
    %s415 = scalar_lea.vmem %s2, 100
    %v416 = vld [vmem:[%s415] sm:$0xf]
    %v417 = vunpack.c.l.bf16 %v416
    %v418 = vunpack.c.h.bf16 %v416
    %v419 = vlaneseq
    %v420 = vand.u32 %v419, 127
    %v421 = vadd.s32 %v420, 128
    %vm422 = vcmp.lt.s32.totalorder %v421, 288
    %v423 = vsel %vm422, %v417, %v10
    %s424 = scalar_lea.vmem [#allocation7], 100
    %v425 = vpack.c.bf16 0.0, %v423
    %427 = vst [vmem:[%s424] sm:$0xf] %v425
    %s428 = scalar_lea.vmem %s2, 104
    %s430 = sor.u32 255, 127
    %s431 = sand.u32 %s430, 85
    %s432 = sshrl.u32 %s431, 1
    %s433 = sor.u32 %s431, %s432
    %s434 = sand.u32 51, %s433
    %s435 = sshrl.u32 %s434, 2
    %s436 = sor.u32 %s434, %s435
    %s437 = sand.u32 15, %s436
    %v438 = vld [vmem:[%s428] sm:%s437]
    %v439 = vunpack.c.l.bf16 %v438
    %v440 = vunpack.c.h.bf16 %v438
    %v441 = vlaneseq
    %v442 = vand.u32 %v441, 127
    %v443 = vadd.s32 %v442, 256
    %vm444 = vcmp.lt.s32.totalorder %v443, 288
    %v445 = vsel %vm444, %v439, %v10
    %s446 = scalar_lea.vmem [#allocation7], 104
    %v447 = vpack.c.bf16 0.0, %v445
    %449 = vst [vmem:[%s446] sm:$0xf] %v447
    %s450 = scalar_lea.vmem %s2, 108
    %v451 = vld [vmem:[%s450] sm:$0xf]
    %v452 = vunpack.c.l.bf16 %v451
    %v453 = vunpack.c.h.bf16 %v451
    %v454 = vlaneseq
    %v455 = vand.u32 %v454, 127
    %vm457 = vcmp.lt.s32.totalorder %v455, 288
    %v458 = vsel %vm457, %v452, %v10
    %s459 = scalar_lea.vmem [#allocation7], 108
    %v460 = vpack.c.bf16 0.0, %v458
    %462 = vst [vmem:[%s459] sm:$0xf] %v460
    %s463 = scalar_lea.vmem %s2, 112
    %v464 = vld [vmem:[%s463] sm:$0xf]
    %v465 = vunpack.c.l.bf16 %v464
    %v466 = vunpack.c.h.bf16 %v464
    %v467 = vlaneseq
    %v468 = vand.u32 %v467, 127
    %v469 = vadd.s32 %v468, 128
    %vm470 = vcmp.lt.s32.totalorder %v469, 288
    %v471 = vsel %vm470, %v465, %v10
    %s472 = scalar_lea.vmem [#allocation7], 112
    %v473 = vpack.c.bf16 0.0, %v471
    %475 = vst [vmem:[%s472] sm:$0xf] %v473
    %s476 = scalar_lea.vmem %s2, 116
    %s478 = sor.u32 255, 127
    %s479 = sand.u32 %s478, 85
    %s480 = sshrl.u32 %s479, 1
    %s481 = sor.u32 %s479, %s480
    %s482 = sand.u32 51, %s481
    %s483 = sshrl.u32 %s482, 2
    %s484 = sor.u32 %s482, %s483
    %s485 = sand.u32 15, %s484
    %v486 = vld [vmem:[%s476] sm:%s485]
    %v487 = vunpack.c.l.bf16 %v486
    %v488 = vunpack.c.h.bf16 %v486
    %v489 = vlaneseq
    %v490 = vand.u32 %v489, 127
    %v491 = vadd.s32 %v490, 256
    %vm492 = vcmp.lt.s32.totalorder %v491, 288
    %v493 = vsel %vm492, %v487, %v10
    %s494 = scalar_lea.vmem [#allocation7], 116
    %v495 = vpack.c.bf16 0.0, %v493
    %497 = vst [vmem:[%s494] sm:$0xf] %v495
    %s498 = scalar_lea.vmem %s2, 120
    %v499 = vld [vmem:[%s498] sm:$0xf]
    %v500 = vunpack.c.l.bf16 %v499
    %v501 = vunpack.c.h.bf16 %v499
    %v502 = vlaneseq
    %v503 = vand.u32 %v502, 127
    %vm505 = vcmp.lt.s32.totalorder %v503, 288
    %v506 = vsel %vm505, %v500, %v10
    %s507 = scalar_lea.vmem [#allocation7], 120
    %v508 = vpack.c.bf16 0.0, %v506
    %510 = vst [vmem:[%s507] sm:$0xf] %v508
    %s511 = scalar_lea.vmem %s2, 124
    %v512 = vld [vmem:[%s511] sm:$0xf]
    %v513 = vunpack.c.l.bf16 %v512
    %v514 = vunpack.c.h.bf16 %v512
    %v515 = vlaneseq
    %v516 = vand.u32 %v515, 127
    %v517 = vadd.s32 %v516, 128
    %vm518 = vcmp.lt.s32.totalorder %v517, 288
    %v519 = vsel %vm518, %v513, %v10
    %s520 = scalar_lea.vmem [#allocation7], 124
    %v521 = vpack.c.bf16 0.0, %v519
    %523 = vst [vmem:[%s520] sm:$0xf] %v521
    %s524 = scalar_lea.vmem %s2, 128
    %s526 = sor.u32 255, 127
    %s527 = sand.u32 %s526, 85
    %s528 = sshrl.u32 %s527, 1
    %s529 = sor.u32 %s527, %s528
    %s530 = sand.u32 51, %s529
    %s531 = sshrl.u32 %s530, 2
    %s532 = sor.u32 %s530, %s531
    %s533 = sand.u32 15, %s532
    %v534 = vld [vmem:[%s524] sm:%s533]
    %v535 = vunpack.c.l.bf16 %v534
    %v536 = vunpack.c.h.bf16 %v534
    %v537 = vlaneseq
    %v538 = vand.u32 %v537, 127
    %v539 = vadd.s32 %v538, 256
    %vm540 = vcmp.lt.s32.totalorder %v539, 288
    %v541 = vsel %vm540, %v535, %v10
    %s542 = scalar_lea.vmem [#allocation7], 128
    %v543 = vpack.c.bf16 0.0, %v541
    %545 = vst [vmem:[%s542] sm:$0xf] %v543
    %s546 = scalar_lea.vmem %s2, 132
    %v547 = vld [vmem:[%s546] sm:$0xf]
    %v548 = vunpack.c.l.bf16 %v547
    %v549 = vunpack.c.h.bf16 %v547
    %v550 = vlaneseq
    %v551 = vand.u32 %v550, 127
    %vm553 = vcmp.lt.s32.totalorder %v551, 288
    %v554 = vsel %vm553, %v548, %v10
    %s555 = scalar_lea.vmem [#allocation7], 132
    %v556 = vpack.c.bf16 0.0, %v554
    %558 = vst [vmem:[%s555] sm:$0xf] %v556
    %s559 = scalar_lea.vmem %s2, 136
    %v560 = vld [vmem:[%s559] sm:$0xf]
    %v561 = vunpack.c.l.bf16 %v560
    %v562 = vunpack.c.h.bf16 %v560
    %v563 = vlaneseq
    %v564 = vand.u32 %v563, 127
    %v565 = vadd.s32 %v564, 128
    %vm566 = vcmp.lt.s32.totalorder %v565, 288
    %v567 = vsel %vm566, %v561, %v10
    %s568 = scalar_lea.vmem [#allocation7], 136
    %v569 = vpack.c.bf16 0.0, %v567
    %571 = vst [vmem:[%s568] sm:$0xf] %v569
    %s572 = scalar_lea.vmem %s2, 140
    %s574 = sor.u32 255, 127
    %s575 = sand.u32 %s574, 85
    %s576 = sshrl.u32 %s575, 1
    %s577 = sor.u32 %s575, %s576
    %s578 = sand.u32 51, %s577
    %s579 = sshrl.u32 %s578, 2
    %s580 = sor.u32 %s578, %s579
    %s581 = sand.u32 15, %s580
    %v582 = vld [vmem:[%s572] sm:%s581]
    %v583 = vunpack.c.l.bf16 %v582
    %v584 = vunpack.c.h.bf16 %v582
    %v585 = vlaneseq
    %v586 = vand.u32 %v585, 127
    %v587 = vadd.s32 %v586, 256
    %vm588 = vcmp.lt.s32.totalorder %v587, 288
    %v589 = vsel %vm588, %v583, %v10
    %s590 = scalar_lea.vmem [#allocation7], 140
    %v591 = vpack.c.bf16 0.0, %v589
    %593 = vst [vmem:[%s590] sm:$0xf] %v591
    %s594 = scalar_lea.vmem %s2, 144
    %v595 = vld [vmem:[%s594] sm:$0xf]
    %v596 = vunpack.c.l.bf16 %v595
    %v597 = vunpack.c.h.bf16 %v595
    %v598 = vlaneseq
    %v599 = vand.u32 %v598, 127
    %vm601 = vcmp.lt.s32.totalorder %v599, 288
    %v602 = vsel %vm601, %v596, %v10
    %s603 = scalar_lea.vmem [#allocation7], 144
    %v604 = vpack.c.bf16 0.0, %v602
    %606 = vst [vmem:[%s603] sm:$0xf] %v604
    %s607 = scalar_lea.vmem %s2, 148
    %v608 = vld [vmem:[%s607] sm:$0xf]
    %v609 = vunpack.c.l.bf16 %v608
    %v610 = vunpack.c.h.bf16 %v608
    %v611 = vlaneseq
    %v612 = vand.u32 %v611, 127
    %v613 = vadd.s32 %v612, 128
    %vm614 = vcmp.lt.s32.totalorder %v613, 288
    %v615 = vsel %vm614, %v609, %v10
    %s616 = scalar_lea.vmem [#allocation7], 148
    %v617 = vpack.c.bf16 0.0, %v615
    %619 = vst [vmem:[%s616] sm:$0xf] %v617
    %s620 = scalar_lea.vmem %s2, 152
    %s622 = sor.u32 255, 127
    %s623 = sand.u32 %s622, 85
    %s624 = sshrl.u32 %s623, 1
    %s625 = sor.u32 %s623, %s624
    %s626 = sand.u32 51, %s625
    %s627 = sshrl.u32 %s626, 2
    %s628 = sor.u32 %s626, %s627
    %s629 = sand.u32 15, %s628
    %v630 = vld [vmem:[%s620] sm:%s629]
    %v631 = vunpack.c.l.bf16 %v630
    %v632 = vunpack.c.h.bf16 %v630
    %v633 = vlaneseq
    %v634 = vand.u32 %v633, 127
    %v635 = vadd.s32 %v634, 256
    %vm636 = vcmp.lt.s32.totalorder %v635, 288
    %v637 = vsel %vm636, %v631, %v10
    %s638 = scalar_lea.vmem [#allocation7], 152
    %v639 = vpack.c.bf16 0.0, %v637
    %641 = vst [vmem:[%s638] sm:$0xf] %v639
    %s642 = scalar_lea.vmem %s2, 156
    %v643 = vld [vmem:[%s642] sm:$0xf]
    %v644 = vunpack.c.l.bf16 %v643
    %v645 = vunpack.c.h.bf16 %v643
    %v646 = vlaneseq
    %v647 = vand.u32 %v646, 127
    %vm649 = vcmp.lt.s32.totalorder %v647, 288
    %v650 = vsel %vm649, %v644, %v10
    %s651 = scalar_lea.vmem [#allocation7], 156
    %v652 = vpack.c.bf16 0.0, %v650
    %654 = vst [vmem:[%s651] sm:$0xf] %v652
    %s655 = scalar_lea.vmem %s2, 160
    %v656 = vld [vmem:[%s655] sm:$0xf]
    %v657 = vunpack.c.l.bf16 %v656
    %v658 = vunpack.c.h.bf16 %v656
    %v659 = vlaneseq
    %v660 = vand.u32 %v659, 127
    %v661 = vadd.s32 %v660, 128
    %vm662 = vcmp.lt.s32.totalorder %v661, 288
    %v663 = vsel %vm662, %v657, %v10
    %s664 = scalar_lea.vmem [#allocation7], 160
    %v665 = vpack.c.bf16 0.0, %v663
    %667 = vst [vmem:[%s664] sm:$0xf] %v665
    %s668 = scalar_lea.vmem %s2, 164
    %s670 = sor.u32 255, 127
    %s671 = sand.u32 %s670, 85
    %s672 = sshrl.u32 %s671, 1
    %s673 = sor.u32 %s671, %s672
    %s674 = sand.u32 51, %s673
    %s675 = sshrl.u32 %s674, 2
    %s676 = sor.u32 %s674, %s675
    %s677 = sand.u32 15, %s676
    %v678 = vld [vmem:[%s668] sm:%s677]
    %v679 = vunpack.c.l.bf16 %v678
    %v680 = vunpack.c.h.bf16 %v678
    %v681 = vlaneseq
    %v682 = vand.u32 %v681, 127
    %v683 = vadd.s32 %v682, 256
    %vm684 = vcmp.lt.s32.totalorder %v683, 288
    %v685 = vsel %vm684, %v679, %v10
    %s686 = scalar_lea.vmem [#allocation7], 164
    %v687 = vpack.c.bf16 0.0, %v685
    %689 = vst [vmem:[%s686] sm:$0xf] %v687
    %s690 = scalar_lea.vmem %s2, 168
    %v691 = vld [vmem:[%s690] sm:$0xf]
    %v692 = vunpack.c.l.bf16 %v691
    %v693 = vunpack.c.h.bf16 %v691
    %v694 = vlaneseq
    %v695 = vand.u32 %v694, 127
    %vm697 = vcmp.lt.s32.totalorder %v695, 288
    %v698 = vsel %vm697, %v692, %v10
    %s699 = scalar_lea.vmem [#allocation7], 168
    %v700 = vpack.c.bf16 0.0, %v698
    %702 = vst [vmem:[%s699] sm:$0xf] %v700
    %s703 = scalar_lea.vmem %s2, 172
    %v704 = vld [vmem:[%s703] sm:$0xf]
    %v705 = vunpack.c.l.bf16 %v704
    %v706 = vunpack.c.h.bf16 %v704
    %v707 = vlaneseq
    %v708 = vand.u32 %v707, 127
    %v709 = vadd.s32 %v708, 128
    %vm710 = vcmp.lt.s32.totalorder %v709, 288
    %v711 = vsel %vm710, %v705, %v10
    %s712 = scalar_lea.vmem [#allocation7], 172
    %v713 = vpack.c.bf16 0.0, %v711
    %715 = vst [vmem:[%s712] sm:$0xf] %v713
    %s716 = scalar_lea.vmem %s2, 176
    %s718 = sor.u32 255, 127
    %s719 = sand.u32 %s718, 85
    %s720 = sshrl.u32 %s719, 1
    %s721 = sor.u32 %s719, %s720
    %s722 = sand.u32 51, %s721
    %s723 = sshrl.u32 %s722, 2
    %s724 = sor.u32 %s722, %s723
    %s725 = sand.u32 15, %s724
    %v726 = vld [vmem:[%s716] sm:%s725]
    %v727 = vunpack.c.l.bf16 %v726
    %v728 = vunpack.c.h.bf16 %v726
    %v729 = vlaneseq
    %v730 = vand.u32 %v729, 127
    %v731 = vadd.s32 %v730, 256
    %vm732 = vcmp.lt.s32.totalorder %v731, 288
    %v733 = vsel %vm732, %v727, %v10
    %s734 = scalar_lea.vmem [#allocation7], 176
    %v735 = vpack.c.bf16 0.0, %v733
    %737 = vst [vmem:[%s734] sm:$0xf] %v735
    %s738 = scalar_lea.vmem %s2, 180
    %v739 = vld [vmem:[%s738] sm:$0xf]
    %v740 = vunpack.c.l.bf16 %v739
    %v741 = vunpack.c.h.bf16 %v739
    %v742 = vlaneseq
    %v743 = vand.u32 %v742, 127
    %vm745 = vcmp.lt.s32.totalorder %v743, 288
    %v746 = vsel %vm745, %v740, %v10
    %s747 = scalar_lea.vmem [#allocation7], 180
    %v748 = vpack.c.bf16 0.0, %v746
    %750 = vst [vmem:[%s747] sm:$0xf] %v748
    %s751 = scalar_lea.vmem %s2, 184
    %v752 = vld [vmem:[%s751] sm:$0xf]
    %v753 = vunpack.c.l.bf16 %v752
    %v754 = vunpack.c.h.bf16 %v752
    %v755 = vlaneseq
    %v756 = vand.u32 %v755, 127
    %v757 = vadd.s32 %v756, 128
    %vm758 = vcmp.lt.s32.totalorder %v757, 288
    %v759 = vsel %vm758, %v753, %v10
    %s760 = scalar_lea.vmem [#allocation7], 184
    %v761 = vpack.c.bf16 0.0, %v759
    %763 = vst [vmem:[%s760] sm:$0xf] %v761
    %s764 = scalar_lea.vmem %s2, 188
    %s766 = sor.u32 255, 127
    %s767 = sand.u32 %s766, 85
    %s768 = sshrl.u32 %s767, 1
    %s769 = sor.u32 %s767, %s768
    %s770 = sand.u32 51, %s769
    %s771 = sshrl.u32 %s770, 2
    %s772 = sor.u32 %s770, %s771
    %s773 = sand.u32 15, %s772
    %v774 = vld [vmem:[%s764] sm:%s773]
    %v775 = vunpack.c.l.bf16 %v774
    %v776 = vunpack.c.h.bf16 %v774
    %v777 = vlaneseq
    %v778 = vand.u32 %v777, 127
    %v779 = vadd.s32 %v778, 256
    %vm780 = vcmp.lt.s32.totalorder %v779, 288
    %v781 = vsel %vm780, %v775, %v10
    %s782 = scalar_lea.vmem [#allocation7], 188
    %v783 = vpack.c.bf16 0.0, %v781
    %785 = vst [vmem:[%s782] sm:$0xf] %v783
    %s786 = scalar_lea.vmem %s2, 192
    %v787 = vld [vmem:[%s786] sm:$0xf]
    %v788 = vunpack.c.l.bf16 %v787
    %v789 = vunpack.c.h.bf16 %v787
    %v790 = vlaneseq
    %v791 = vand.u32 %v790, 127
    %vm793 = vcmp.lt.s32.totalorder %v791, 288
    %v794 = vsel %vm793, %v788, %v10
    %s795 = scalar_lea.vmem [#allocation7], 192
    %v796 = vpack.c.bf16 0.0, %v794
    %798 = vst [vmem:[%s795] sm:$0xf] %v796
    %s799 = scalar_lea.vmem %s2, 196
    %v800 = vld [vmem:[%s799] sm:$0xf]
    %v801 = vunpack.c.l.bf16 %v800
    %v802 = vunpack.c.h.bf16 %v800
    %v803 = vlaneseq
    %v804 = vand.u32 %v803, 127
    %v805 = vadd.s32 %v804, 128
    %vm806 = vcmp.lt.s32.totalorder %v805, 288
    %v807 = vsel %vm806, %v801, %v10
    %s808 = scalar_lea.vmem [#allocation7], 196
    %v809 = vpack.c.bf16 0.0, %v807
    %811 = vst [vmem:[%s808] sm:$0xf] %v809
    %s812 = scalar_lea.vmem %s2, 200
    %s814 = sor.u32 255, 127
    %s815 = sand.u32 %s814, 85
    %s816 = sshrl.u32 %s815, 1
    %s817 = sor.u32 %s815, %s816
    %s818 = sand.u32 51, %s817
    %s819 = sshrl.u32 %s818, 2
    %s820 = sor.u32 %s818, %s819
    %s821 = sand.u32 15, %s820
    %v822 = vld [vmem:[%s812] sm:%s821]
    %v823 = vunpack.c.l.bf16 %v822
    %v824 = vunpack.c.h.bf16 %v822
    %v825 = vlaneseq
    %v826 = vand.u32 %v825, 127
    %v827 = vadd.s32 %v826, 256
    %vm828 = vcmp.lt.s32.totalorder %v827, 288
    %v829 = vsel %vm828, %v823, %v10
    %s830 = scalar_lea.vmem [#allocation7], 200
    %v831 = vpack.c.bf16 0.0, %v829
    %833 = vst [vmem:[%s830] sm:$0xf] %v831
    %s834 = scalar_lea.vmem %s2, 204
    %v835 = vld [vmem:[%s834] sm:$0xf]
    %v836 = vunpack.c.l.bf16 %v835
    %v837 = vunpack.c.h.bf16 %v835
    %v838 = vlaneseq
    %v839 = vand.u32 %v838, 127
    %vm841 = vcmp.lt.s32.totalorder %v839, 288
    %v842 = vsel %vm841, %v836, %v10
    %s843 = scalar_lea.vmem [#allocation7], 204
    %v844 = vpack.c.bf16 0.0, %v842
    %846 = vst [vmem:[%s843] sm:$0xf] %v844
    %s847 = scalar_lea.vmem %s2, 208
    %v848 = vld [vmem:[%s847] sm:$0xf]
    %v849 = vunpack.c.l.bf16 %v848
    %v850 = vunpack.c.h.bf16 %v848
    %v851 = vlaneseq
    %v852 = vand.u32 %v851, 127
    %v853 = vadd.s32 %v852, 128
    %vm854 = vcmp.lt.s32.totalorder %v853, 288
    %v855 = vsel %vm854, %v849, %v10
    %s856 = scalar_lea.vmem [#allocation7], 208
    %v857 = vpack.c.bf16 0.0, %v855
    %859 = vst [vmem:[%s856] sm:$0xf] %v857
    %s860 = scalar_lea.vmem %s2, 212
    %s862 = sor.u32 255, 127
    %s863 = sand.u32 %s862, 85
    %s864 = sshrl.u32 %s863, 1
    %s865 = sor.u32 %s863, %s864
    %s866 = sand.u32 51, %s865
    %s867 = sshrl.u32 %s866, 2
    %s868 = sor.u32 %s866, %s867
    %s869 = sand.u32 15, %s868
    %v870 = vld [vmem:[%s860] sm:%s869]
    %v871 = vunpack.c.l.bf16 %v870
    %v872 = vunpack.c.h.bf16 %v870
    %v873 = vlaneseq
    %v874 = vand.u32 %v873, 127
    %v875 = vadd.s32 %v874, 256
    %vm876 = vcmp.lt.s32.totalorder %v875, 288
    %v877 = vsel %vm876, %v871, %v10
    %s878 = scalar_lea.vmem [#allocation7], 212
    %v879 = vpack.c.bf16 0.0, %v877
    %881 = vst [vmem:[%s878] sm:$0xf] %v879
    %s882 = scalar_lea.vmem %s2, 216
    %v883 = vld [vmem:[%s882] sm:$0xf]
    %v884 = vunpack.c.l.bf16 %v883
    %v885 = vunpack.c.h.bf16 %v883
    %v886 = vlaneseq
    %v887 = vand.u32 %v886, 127
    %vm889 = vcmp.lt.s32.totalorder %v887, 288
    %v890 = vsel %vm889, %v884, %v10
    %s891 = scalar_lea.vmem [#allocation7], 216
    %v892 = vpack.c.bf16 0.0, %v890
    %894 = vst [vmem:[%s891] sm:$0xf] %v892
    %s895 = scalar_lea.vmem %s2, 220
    %v896 = vld [vmem:[%s895] sm:$0xf]
    %v897 = vunpack.c.l.bf16 %v896
    %v898 = vunpack.c.h.bf16 %v896
    %v899 = vlaneseq
    %v900 = vand.u32 %v899, 127
    %v901 = vadd.s32 %v900, 128
    %vm902 = vcmp.lt.s32.totalorder %v901, 288
    %v903 = vsel %vm902, %v897, %v10
    %s904 = scalar_lea.vmem [#allocation7], 220
    %v905 = vpack.c.bf16 0.0, %v903
    %907 = vst [vmem:[%s904] sm:$0xf] %v905
    %s908 = scalar_lea.vmem %s2, 224
    %s910 = sor.u32 255, 127
    %s911 = sand.u32 %s910, 85
    %s912 = sshrl.u32 %s911, 1
    %s913 = sor.u32 %s911, %s912
    %s914 = sand.u32 51, %s913
    %s915 = sshrl.u32 %s914, 2
    %s916 = sor.u32 %s914, %s915
    %s917 = sand.u32 15, %s916
    %v918 = vld [vmem:[%s908] sm:%s917]
    %v919 = vunpack.c.l.bf16 %v918
    %v920 = vunpack.c.h.bf16 %v918
    %v921 = vlaneseq
    %v922 = vand.u32 %v921, 127
    %v923 = vadd.s32 %v922, 256
    %vm924 = vcmp.lt.s32.totalorder %v923, 288
    %v925 = vsel %vm924, %v919, %v10
    %s926 = scalar_lea.vmem [#allocation7], 224
    %v927 = vpack.c.bf16 0.0, %v925
    %929 = vst [vmem:[%s926] sm:$0xf] %v927
    %s930 = scalar_lea.vmem %s2, 228
    %v931 = vld [vmem:[%s930] sm:$0xf]
    %v932 = vunpack.c.l.bf16 %v931
    %v933 = vunpack.c.h.bf16 %v931
    %v934 = vlaneseq
    %v935 = vand.u32 %v934, 127
    %vm937 = vcmp.lt.s32.totalorder %v935, 288
    %v938 = vsel %vm937, %v932, %v10
    %s939 = scalar_lea.vmem [#allocation7], 228
    %v940 = vpack.c.bf16 0.0, %v938
    %942 = vst [vmem:[%s939] sm:$0xf] %v940
    %s943 = scalar_lea.vmem %s2, 232
    %v944 = vld [vmem:[%s943] sm:$0xf]
    %v945 = vunpack.c.l.bf16 %v944
    %v946 = vunpack.c.h.bf16 %v944
    %v947 = vlaneseq
    %v948 = vand.u32 %v947, 127
    %v949 = vadd.s32 %v948, 128
    %vm950 = vcmp.lt.s32.totalorder %v949, 288
    %v951 = vsel %vm950, %v945, %v10
    %s952 = scalar_lea.vmem [#allocation7], 232
    %v953 = vpack.c.bf16 0.0, %v951
    %955 = vst [vmem:[%s952] sm:$0xf] %v953
    %s956 = scalar_lea.vmem %s2, 236
    %s958 = sor.u32 255, 127
    %s959 = sand.u32 %s958, 85
    %s960 = sshrl.u32 %s959, 1
    %s961 = sor.u32 %s959, %s960
    %s962 = sand.u32 51, %s961
    %s963 = sshrl.u32 %s962, 2
    %s964 = sor.u32 %s962, %s963
    %s965 = sand.u32 15, %s964
    %v966 = vld [vmem:[%s956] sm:%s965]
    %v967 = vunpack.c.l.bf16 %v966
    %v968 = vunpack.c.h.bf16 %v966
    %v969 = vlaneseq
    %v970 = vand.u32 %v969, 127
    %v971 = vadd.s32 %v970, 256
    %vm972 = vcmp.lt.s32.totalorder %v971, 288
    %v973 = vsel %vm972, %v967, %v10
    %s974 = scalar_lea.vmem [#allocation7], 236
    %v975 = vpack.c.bf16 0.0, %v973
    %977 = vst [vmem:[%s974] sm:$0xf] %v975
    %s978 = scalar_lea.vmem %s2, 240
    %v979 = vld [vmem:[%s978] sm:$0xf]
    %v980 = vunpack.c.l.bf16 %v979
    %v981 = vunpack.c.h.bf16 %v979
    %v982 = vlaneseq
    %v983 = vand.u32 %v982, 127
    %vm985 = vcmp.lt.s32.totalorder %v983, 288
    %v986 = vsel %vm985, %v980, %v10
    %s987 = scalar_lea.vmem [#allocation7], 240
    %v988 = vpack.c.bf16 0.0, %v986
    %990 = vst [vmem:[%s987] sm:$0xf] %v988
    %s991 = scalar_lea.vmem %s2, 244
    %v992 = vld [vmem:[%s991] sm:$0xf]
    %v993 = vunpack.c.l.bf16 %v992
    %v994 = vunpack.c.h.bf16 %v992
    %v995 = vlaneseq
    %v996 = vand.u32 %v995, 127
    %v997 = vadd.s32 %v996, 128
    %vm998 = vcmp.lt.s32.totalorder %v997, 288
    %v999 = vsel %vm998, %v993, %v10
    %s1000 = scalar_lea.vmem [#allocation7], 244
    %v1001 = vpack.c.bf16 0.0, %v999
    %1003 = vst [vmem:[%s1000] sm:$0xf] %v1001
    %s1004 = scalar_lea.vmem %s2, 248
    %s1006 = sor.u32 255, 127
    %s1007 = sand.u32 %s1006, 85
    %s1008 = sshrl.u32 %s1007, 1
    %s1009 = sor.u32 %s1007, %s1008
    %s1010 = sand.u32 51, %s1009
    %s1011 = sshrl.u32 %s1010, 2
    %s1012 = sor.u32 %s1010, %s1011
    %s1013 = sand.u32 15, %s1012
    %v1014 = vld [vmem:[%s1004] sm:%s1013]
    %v1015 = vunpack.c.l.bf16 %v1014
    %v1016 = vunpack.c.h.bf16 %v1014
    %v1017 = vlaneseq
    %v1018 = vand.u32 %v1017, 127
    %v1019 = vadd.s32 %v1018, 256
    %vm1020 = vcmp.lt.s32.totalorder %v1019, 288
    %v1021 = vsel %vm1020, %v1015, %v10
    %s1022 = scalar_lea.vmem [#allocation7], 248
    %v1023 = vpack.c.bf16 0.0, %v1021
    %1025 = vst [vmem:[%s1022] sm:$0xf] %v1023
    %s1026 = scalar_lea.vmem %s2, 252
    %v1027 = vld [vmem:[%s1026] sm:$0xf]
    %v1028 = vunpack.c.l.bf16 %v1027
    %v1029 = vunpack.c.h.bf16 %v1027
    %v1030 = vlaneseq
    %v1031 = vand.u32 %v1030, 127
    %vm1033 = vcmp.lt.s32.totalorder %v1031, 288
    %v1034 = vsel %vm1033, %v1028, %v10
    %s1035 = scalar_lea.vmem [#allocation7], 252
    %v1036 = vpack.c.bf16 0.0, %v1034
    %1038 = vst [vmem:[%s1035] sm:$0xf] %v1036
    %s1039 = scalar_lea.vmem %s2, 256
    %v1040 = vld [vmem:[%s1039] sm:$0xf]
    %v1041 = vunpack.c.l.bf16 %v1040
    %v1042 = vunpack.c.h.bf16 %v1040
    %v1043 = vlaneseq
    %v1044 = vand.u32 %v1043, 127
    %v1045 = vadd.s32 %v1044, 128
    %vm1046 = vcmp.lt.s32.totalorder %v1045, 288
    %v1047 = vsel %vm1046, %v1041, %v10
    %s1048 = scalar_lea.vmem [#allocation7], 256
    %v1049 = vpack.c.bf16 0.0, %v1047
    %1051 = vst [vmem:[%s1048] sm:$0xf] %v1049
    %s1052 = scalar_lea.vmem %s2, 260
    %s1054 = sor.u32 255, 127
    %s1055 = sand.u32 %s1054, 85
    %s1056 = sshrl.u32 %s1055, 1
    %s1057 = sor.u32 %s1055, %s1056
    %s1058 = sand.u32 51, %s1057
    %s1059 = sshrl.u32 %s1058, 2
    %s1060 = sor.u32 %s1058, %s1059
    %s1061 = sand.u32 15, %s1060
    %v1062 = vld [vmem:[%s1052] sm:%s1061]
    %v1063 = vunpack.c.l.bf16 %v1062
    %v1064 = vunpack.c.h.bf16 %v1062
    %v1065 = vlaneseq
    %v1066 = vand.u32 %v1065, 127
    %v1067 = vadd.s32 %v1066, 256
    %vm1068 = vcmp.lt.s32.totalorder %v1067, 288
    %v1069 = vsel %vm1068, %v1063, %v10
    %s1070 = scalar_lea.vmem [#allocation7], 260
    %v1071 = vpack.c.bf16 0.0, %v1069
    %1073 = vst [vmem:[%s1070] sm:$0xf] %v1071
    %s1074 = scalar_lea.vmem %s2, 264
    %v1075 = vld [vmem:[%s1074] sm:$0xf]
    %v1076 = vunpack.c.l.bf16 %v1075
    %v1077 = vunpack.c.h.bf16 %v1075
    %v1078 = vlaneseq
    %v1079 = vand.u32 %v1078, 127
    %vm1081 = vcmp.lt.s32.totalorder %v1079, 288
    %v1082 = vsel %vm1081, %v1076, %v10
    %s1083 = scalar_lea.vmem [#allocation7], 264
    %v1084 = vpack.c.bf16 0.0, %v1082
    %1086 = vst [vmem:[%s1083] sm:$0xf] %v1084
    %s1087 = scalar_lea.vmem %s2, 268
    %v1088 = vld [vmem:[%s1087] sm:$0xf]
    %v1089 = vunpack.c.l.bf16 %v1088
    %v1090 = vunpack.c.h.bf16 %v1088
    %v1091 = vlaneseq
    %v1092 = vand.u32 %v1091, 127
    %v1093 = vadd.s32 %v1092, 128
    %vm1094 = vcmp.lt.s32.totalorder %v1093, 288
    %v1095 = vsel %vm1094, %v1089, %v10
    %s1096 = scalar_lea.vmem [#allocation7], 268
    %v1097 = vpack.c.bf16 0.0, %v1095
    %1099 = vst [vmem:[%s1096] sm:$0xf] %v1097
    %s1100 = scalar_lea.vmem %s2, 272
    %s1102 = sor.u32 255, 127
    %s1103 = sand.u32 %s1102, 85
    %s1104 = sshrl.u32 %s1103, 1
    %s1105 = sor.u32 %s1103, %s1104
    %s1106 = sand.u32 51, %s1105
    %s1107 = sshrl.u32 %s1106, 2
    %s1108 = sor.u32 %s1106, %s1107
    %s1109 = sand.u32 15, %s1108
    %v1110 = vld [vmem:[%s1100] sm:%s1109]
    %v1111 = vunpack.c.l.bf16 %v1110
    %v1112 = vunpack.c.h.bf16 %v1110
    %v1113 = vlaneseq
    %v1114 = vand.u32 %v1113, 127
    %v1115 = vadd.s32 %v1114, 256
    %vm1116 = vcmp.lt.s32.totalorder %v1115, 288
    %v1117 = vsel %vm1116, %v1111, %v10
    %s1118 = scalar_lea.vmem [#allocation7], 272
    %v1119 = vpack.c.bf16 0.0, %v1117
    %1121 = vst [vmem:[%s1118] sm:$0xf] %v1119
    %s1122 = scalar_lea.vmem %s2, 276
    %v1123 = vld [vmem:[%s1122] sm:$0xf]
    %v1124 = vunpack.c.l.bf16 %v1123
    %v1125 = vunpack.c.h.bf16 %v1123
    %v1126 = vlaneseq
    %v1127 = vand.u32 %v1126, 127
    %vm1129 = vcmp.lt.s32.totalorder %v1127, 288
    %v1130 = vsel %vm1129, %v1124, %v10
    %s1131 = scalar_lea.vmem [#allocation7], 276
    %v1132 = vpack.c.bf16 0.0, %v1130
    %1134 = vst [vmem:[%s1131] sm:$0xf] %v1132
    %s1135 = scalar_lea.vmem %s2, 280
    %v1136 = vld [vmem:[%s1135] sm:$0xf]
    %v1137 = vunpack.c.l.bf16 %v1136
    %v1138 = vunpack.c.h.bf16 %v1136
    %v1139 = vlaneseq
    %v1140 = vand.u32 %v1139, 127
    %v1141 = vadd.s32 %v1140, 128
    %vm1142 = vcmp.lt.s32.totalorder %v1141, 288
    %v1143 = vsel %vm1142, %v1137, %v10
    %s1144 = scalar_lea.vmem [#allocation7], 280
    %v1145 = vpack.c.bf16 0.0, %v1143
    %1147 = vst [vmem:[%s1144] sm:$0xf] %v1145
    %s1148 = scalar_lea.vmem %s2, 284
    %s1150 = sor.u32 255, 127
    %s1151 = sand.u32 %s1150, 85
    %s1152 = sshrl.u32 %s1151, 1
    %s1153 = sor.u32 %s1151, %s1152
    %s1154 = sand.u32 51, %s1153
    %s1155 = sshrl.u32 %s1154, 2
    %s1156 = sor.u32 %s1154, %s1155
    %s1157 = sand.u32 15, %s1156
    %v1158 = vld [vmem:[%s1148] sm:%s1157]
    %v1159 = vunpack.c.l.bf16 %v1158
    %v1160 = vunpack.c.h.bf16 %v1158
    %v1161 = vlaneseq
    %v1162 = vand.u32 %v1161, 127
    %v1163 = vadd.s32 %v1162, 256
    %vm1164 = vcmp.lt.s32.totalorder %v1163, 288
    %v1165 = vsel %vm1164, %v1159, %v10
    %s1166 = scalar_lea.vmem [#allocation7], 284
    %v1167 = vpack.c.bf16 0.0, %v1165
    %1169 = vst [vmem:[%s1166] sm:$0xf] %v1167
    %s1170 = scalar_lea.vmem %s2, 288
    %v1171 = vld [vmem:[%s1170] sm:$0xf]
    %v1172 = vunpack.c.l.bf16 %v1171
    %v1173 = vunpack.c.h.bf16 %v1171
    %v1174 = vlaneseq
    %v1175 = vand.u32 %v1174, 127
    %vm1177 = vcmp.lt.s32.totalorder %v1175, 288
    %v1178 = vsel %vm1177, %v1172, %v10
    %s1179 = scalar_lea.vmem [#allocation7], 288
    %v1180 = vpack.c.bf16 0.0, %v1178
    %1182 = vst [vmem:[%s1179] sm:$0xf] %v1180
    %s1183 = scalar_lea.vmem %s2, 292
    %v1184 = vld [vmem:[%s1183] sm:$0xf]
    %v1185 = vunpack.c.l.bf16 %v1184
    %v1186 = vunpack.c.h.bf16 %v1184
    %v1187 = vlaneseq
    %v1188 = vand.u32 %v1187, 127
    %v1189 = vadd.s32 %v1188, 128
    %vm1190 = vcmp.lt.s32.totalorder %v1189, 288
    %v1191 = vsel %vm1190, %v1185, %v10
    %s1192 = scalar_lea.vmem [#allocation7], 292
    %v1193 = vpack.c.bf16 0.0, %v1191
    %1195 = vst [vmem:[%s1192] sm:$0xf] %v1193
    %s1196 = scalar_lea.vmem %s2, 296
    %s1198 = sor.u32 255, 127
    %s1199 = sand.u32 %s1198, 85
    %s1200 = sshrl.u32 %s1199, 1
    %s1201 = sor.u32 %s1199, %s1200
    %s1202 = sand.u32 51, %s1201
    %s1203 = sshrl.u32 %s1202, 2
    %s1204 = sor.u32 %s1202, %s1203
    %s1205 = sand.u32 15, %s1204
    %v1206 = vld [vmem:[%s1196] sm:%s1205]
    %v1207 = vunpack.c.l.bf16 %v1206
    %v1208 = vunpack.c.h.bf16 %v1206
    %v1209 = vlaneseq
    %v1210 = vand.u32 %v1209, 127
    %v1211 = vadd.s32 %v1210, 256
    %vm1212 = vcmp.lt.s32.totalorder %v1211, 288
    %v1213 = vsel %vm1212, %v1207, %v10
    %s1214 = scalar_lea.vmem [#allocation7], 296
    %v1215 = vpack.c.bf16 0.0, %v1213
    %1217 = vst [vmem:[%s1214] sm:$0xf] %v1215
    %s1218 = scalar_lea.vmem %s2, 300
    %v1219 = vld [vmem:[%s1218] sm:$0xf]
    %v1220 = vunpack.c.l.bf16 %v1219
    %v1221 = vunpack.c.h.bf16 %v1219
    %v1222 = vlaneseq
    %v1223 = vand.u32 %v1222, 127
    %vm1225 = vcmp.lt.s32.totalorder %v1223, 288
    %v1226 = vsel %vm1225, %v1220, %v10
    %s1227 = scalar_lea.vmem [#allocation7], 300
    %v1228 = vpack.c.bf16 0.0, %v1226
    %1230 = vst [vmem:[%s1227] sm:$0xf] %v1228
    %s1231 = scalar_lea.vmem %s2, 304
    %v1232 = vld [vmem:[%s1231] sm:$0xf]
    %v1233 = vunpack.c.l.bf16 %v1232
    %v1234 = vunpack.c.h.bf16 %v1232
    %v1235 = vlaneseq
    %v1236 = vand.u32 %v1235, 127
    %v1237 = vadd.s32 %v1236, 128
    %vm1238 = vcmp.lt.s32.totalorder %v1237, 288
    %v1239 = vsel %vm1238, %v1233, %v10
    %s1240 = scalar_lea.vmem [#allocation7], 304
    %v1241 = vpack.c.bf16 0.0, %v1239
    %1243 = vst [vmem:[%s1240] sm:$0xf] %v1241
    %s1244 = scalar_lea.vmem %s2, 308
    %s1246 = sor.u32 255, 127
    %s1247 = sand.u32 %s1246, 85
    %s1248 = sshrl.u32 %s1247, 1
    %s1249 = sor.u32 %s1247, %s1248
    %s1250 = sand.u32 51, %s1249
    %s1251 = sshrl.u32 %s1250, 2
    %s1252 = sor.u32 %s1250, %s1251
    %s1253 = sand.u32 15, %s1252
    %v1254 = vld [vmem:[%s1244] sm:%s1253]
    %v1255 = vunpack.c.l.bf16 %v1254
    %v1256 = vunpack.c.h.bf16 %v1254
    %v1257 = vlaneseq
    %v1258 = vand.u32 %v1257, 127
    %v1259 = vadd.s32 %v1258, 256
    %vm1260 = vcmp.lt.s32.totalorder %v1259, 288
    %v1261 = vsel %vm1260, %v1255, %v10
    %s1262 = scalar_lea.vmem [#allocation7], 308
    %v1263 = vpack.c.bf16 0.0, %v1261
    %1265 = vst [vmem:[%s1262] sm:$0xf] %v1263
    %s1266 = scalar_lea.vmem %s2, 312
    %v1267 = vld [vmem:[%s1266] sm:$0xf]
    %v1268 = vunpack.c.l.bf16 %v1267
    %v1269 = vunpack.c.h.bf16 %v1267
    %v1270 = vlaneseq
    %v1271 = vand.u32 %v1270, 127
    %vm1273 = vcmp.lt.s32.totalorder %v1271, 288
    %v1274 = vsel %vm1273, %v1268, %v10
    %s1275 = scalar_lea.vmem [#allocation7], 312
    %v1276 = vpack.c.bf16 0.0, %v1274
    %1278 = vst [vmem:[%s1275] sm:$0xf] %v1276
    %s1279 = scalar_lea.vmem %s2, 316
    %v1280 = vld [vmem:[%s1279] sm:$0xf]
    %v1281 = vunpack.c.l.bf16 %v1280
    %v1282 = vunpack.c.h.bf16 %v1280
    %v1283 = vlaneseq
    %v1284 = vand.u32 %v1283, 127
    %v1285 = vadd.s32 %v1284, 128
    %vm1286 = vcmp.lt.s32.totalorder %v1285, 288
    %v1287 = vsel %vm1286, %v1281, %v10
    %s1288 = scalar_lea.vmem [#allocation7], 316
    %v1289 = vpack.c.bf16 0.0, %v1287
    %1291 = vst [vmem:[%s1288] sm:$0xf] %v1289
    %s1292 = scalar_lea.vmem %s2, 320
    %s1294 = sor.u32 255, 127
    %s1295 = sand.u32 %s1294, 85
    %s1296 = sshrl.u32 %s1295, 1
    %s1297 = sor.u32 %s1295, %s1296
    %s1298 = sand.u32 51, %s1297
    %s1299 = sshrl.u32 %s1298, 2
    %s1300 = sor.u32 %s1298, %s1299
    %s1301 = sand.u32 15, %s1300
    %v1302 = vld [vmem:[%s1292] sm:%s1301]
    %v1303 = vunpack.c.l.bf16 %v1302
    %v1304 = vunpack.c.h.bf16 %v1302
    %v1305 = vlaneseq
    %v1306 = vand.u32 %v1305, 127
    %v1307 = vadd.s32 %v1306, 256
    %vm1308 = vcmp.lt.s32.totalorder %v1307, 288
    %v1309 = vsel %vm1308, %v1303, %v10
    %s1310 = scalar_lea.vmem [#allocation7], 320
    %v1311 = vpack.c.bf16 0.0, %v1309
    %1313 = vst [vmem:[%s1310] sm:$0xf] %v1311
    %s1314 = scalar_lea.vmem %s2, 324
    %v1315 = vld [vmem:[%s1314] sm:$0xf]
    %v1316 = vunpack.c.l.bf16 %v1315
    %v1317 = vunpack.c.h.bf16 %v1315
    %v1318 = vlaneseq
    %v1319 = vand.u32 %v1318, 127
    %vm1321 = vcmp.lt.s32.totalorder %v1319, 288
    %v1322 = vsel %vm1321, %v1316, %v10
    %s1323 = scalar_lea.vmem [#allocation7], 324
    %v1324 = vpack.c.bf16 0.0, %v1322
    %1326 = vst [vmem:[%s1323] sm:$0xf] %v1324
    %s1327 = scalar_lea.vmem %s2, 328
    %v1328 = vld [vmem:[%s1327] sm:$0xf]
    %v1329 = vunpack.c.l.bf16 %v1328
    %v1330 = vunpack.c.h.bf16 %v1328
    %v1331 = vlaneseq
    %v1332 = vand.u32 %v1331, 127
    %v1333 = vadd.s32 %v1332, 128
    %vm1334 = vcmp.lt.s32.totalorder %v1333, 288
    %v1335 = vsel %vm1334, %v1329, %v10
    %s1336 = scalar_lea.vmem [#allocation7], 328
    %v1337 = vpack.c.bf16 0.0, %v1335
    %1339 = vst [vmem:[%s1336] sm:$0xf] %v1337
    %s1340 = scalar_lea.vmem %s2, 332
    %s1342 = sor.u32 255, 127
    %s1343 = sand.u32 %s1342, 85
    %s1344 = sshrl.u32 %s1343, 1
    %s1345 = sor.u32 %s1343, %s1344
    %s1346 = sand.u32 51, %s1345
    %s1347 = sshrl.u32 %s1346, 2
    %s1348 = sor.u32 %s1346, %s1347
    %s1349 = sand.u32 15, %s1348
    %v1350 = vld [vmem:[%s1340] sm:%s1349]
    %v1351 = vunpack.c.l.bf16 %v1350
    %v1352 = vunpack.c.h.bf16 %v1350
    %v1353 = vlaneseq
    %v1354 = vand.u32 %v1353, 127
    %v1355 = vadd.s32 %v1354, 256
    %vm1356 = vcmp.lt.s32.totalorder %v1355, 288
    %v1357 = vsel %vm1356, %v1351, %v10
    %s1358 = scalar_lea.vmem [#allocation7], 332
    %v1359 = vpack.c.bf16 0.0, %v1357
    %1361 = vst [vmem:[%s1358] sm:$0xf] %v1359
    %s1362 = scalar_lea.vmem %s2, 336
    %v1363 = vld [vmem:[%s1362] sm:$0xf]
    %v1364 = vunpack.c.l.bf16 %v1363
    %v1365 = vunpack.c.h.bf16 %v1363
    %v1366 = vlaneseq
    %v1367 = vand.u32 %v1366, 127
    %vm1369 = vcmp.lt.s32.totalorder %v1367, 288
    %v1370 = vsel %vm1369, %v1364, %v10
    %s1371 = scalar_lea.vmem [#allocation7], 336
    %v1372 = vpack.c.bf16 0.0, %v1370
    %1374 = vst [vmem:[%s1371] sm:$0xf] %v1372
    %s1375 = scalar_lea.vmem %s2, 340
    %v1376 = vld [vmem:[%s1375] sm:$0xf]
    %v1377 = vunpack.c.l.bf16 %v1376
    %v1378 = vunpack.c.h.bf16 %v1376
    %v1379 = vlaneseq
    %v1380 = vand.u32 %v1379, 127
    %v1381 = vadd.s32 %v1380, 128
    %vm1382 = vcmp.lt.s32.totalorder %v1381, 288
    %v1383 = vsel %vm1382, %v1377, %v10
    %s1384 = scalar_lea.vmem [#allocation7], 340
    %v1385 = vpack.c.bf16 0.0, %v1383
    %1387 = vst [vmem:[%s1384] sm:$0xf] %v1385
    %s1388 = scalar_lea.vmem %s2, 344
    %s1390 = sor.u32 255, 127
    %s1391 = sand.u32 %s1390, 85
    %s1392 = sshrl.u32 %s1391, 1
    %s1393 = sor.u32 %s1391, %s1392
    %s1394 = sand.u32 51, %s1393
    %s1395 = sshrl.u32 %s1394, 2
    %s1396 = sor.u32 %s1394, %s1395
    %s1397 = sand.u32 15, %s1396
    %v1398 = vld [vmem:[%s1388] sm:%s1397]
    %v1399 = vunpack.c.l.bf16 %v1398
    %v1400 = vunpack.c.h.bf16 %v1398
    %v1401 = vlaneseq
    %v1402 = vand.u32 %v1401, 127
    %v1403 = vadd.s32 %v1402, 256
    %vm1404 = vcmp.lt.s32.totalorder %v1403, 288
    %v1405 = vsel %vm1404, %v1399, %v10
    %s1406 = scalar_lea.vmem [#allocation7], 344
    %v1407 = vpack.c.bf16 0.0, %v1405
    %1409 = vst [vmem:[%s1406] sm:$0xf] %v1407
    %s1410 = scalar_lea.vmem %s2, 348
    %v1411 = vld [vmem:[%s1410] sm:$0xf]
    %v1412 = vunpack.c.l.bf16 %v1411
    %v1413 = vunpack.c.h.bf16 %v1411
    %v1414 = vlaneseq
    %v1415 = vand.u32 %v1414, 127
    %vm1417 = vcmp.lt.s32.totalorder %v1415, 288
    %v1418 = vsel %vm1417, %v1412, %v10
    %s1419 = scalar_lea.vmem [#allocation7], 348
    %v1420 = vpack.c.bf16 0.0, %v1418
    %1422 = vst [vmem:[%s1419] sm:$0xf] %v1420
    %s1423 = scalar_lea.vmem %s2, 352
    %v1424 = vld [vmem:[%s1423] sm:$0xf]
    %v1425 = vunpack.c.l.bf16 %v1424
    %v1426 = vunpack.c.h.bf16 %v1424
    %v1427 = vlaneseq
    %v1428 = vand.u32 %v1427, 127
    %v1429 = vadd.s32 %v1428, 128
    %vm1430 = vcmp.lt.s32.totalorder %v1429, 288
    %v1431 = vsel %vm1430, %v1425, %v10
    %s1432 = scalar_lea.vmem [#allocation7], 352
    %v1433 = vpack.c.bf16 0.0, %v1431
    %1435 = vst [vmem:[%s1432] sm:$0xf] %v1433
    %s1436 = scalar_lea.vmem %s2, 356
    %s1438 = sor.u32 255, 127
    %s1439 = sand.u32 %s1438, 85
    %s1440 = sshrl.u32 %s1439, 1
    %s1441 = sor.u32 %s1439, %s1440
    %s1442 = sand.u32 51, %s1441
    %s1443 = sshrl.u32 %s1442, 2
    %s1444 = sor.u32 %s1442, %s1443
    %s1445 = sand.u32 15, %s1444
    %v1446 = vld [vmem:[%s1436] sm:%s1445]
    %v1447 = vunpack.c.l.bf16 %v1446
    %v1448 = vunpack.c.h.bf16 %v1446
    %v1449 = vlaneseq
    %v1450 = vand.u32 %v1449, 127
    %v1451 = vadd.s32 %v1450, 256
    %vm1452 = vcmp.lt.s32.totalorder %v1451, 288
    %v1453 = vsel %vm1452, %v1447, %v10
    %s1454 = scalar_lea.vmem [#allocation7], 356
    %v1455 = vpack.c.bf16 0.0, %v1453
    %1457 = vst [vmem:[%s1454] sm:$0xf] %v1455
    %s1458 = scalar_lea.vmem %s2, 360
    %v1459 = vld [vmem:[%s1458] sm:$0xf]
    %v1460 = vunpack.c.l.bf16 %v1459
    %v1461 = vunpack.c.h.bf16 %v1459
    %v1462 = vlaneseq
    %v1463 = vand.u32 %v1462, 127
    %vm1465 = vcmp.lt.s32.totalorder %v1463, 288
    %v1466 = vsel %vm1465, %v1460, %v10
    %s1467 = scalar_lea.vmem [#allocation7], 360
    %v1468 = vpack.c.bf16 0.0, %v1466
    %1470 = vst [vmem:[%s1467] sm:$0xf] %v1468
    %s1471 = scalar_lea.vmem %s2, 364
    %v1472 = vld [vmem:[%s1471] sm:$0xf]
    %v1473 = vunpack.c.l.bf16 %v1472
    %v1474 = vunpack.c.h.bf16 %v1472
    %v1475 = vlaneseq
    %v1476 = vand.u32 %v1475, 127
    %v1477 = vadd.s32 %v1476, 128
    %vm1478 = vcmp.lt.s32.totalorder %v1477, 288
    %v1479 = vsel %vm1478, %v1473, %v10
    %s1480 = scalar_lea.vmem [#allocation7], 364
    %v1481 = vpack.c.bf16 0.0, %v1479
    %1483 = vst [vmem:[%s1480] sm:$0xf] %v1481
    %s1484 = scalar_lea.vmem %s2, 368
    %s1486 = sor.u32 255, 127
    %s1487 = sand.u32 %s1486, 85
    %s1488 = sshrl.u32 %s1487, 1
    %s1489 = sor.u32 %s1487, %s1488
    %s1490 = sand.u32 51, %s1489
    %s1491 = sshrl.u32 %s1490, 2
    %s1492 = sor.u32 %s1490, %s1491
    %s1493 = sand.u32 15, %s1492
    %v1494 = vld [vmem:[%s1484] sm:%s1493]
    %v1495 = vunpack.c.l.bf16 %v1494
    %v1496 = vunpack.c.h.bf16 %v1494
    %v1497 = vlaneseq
    %v1498 = vand.u32 %v1497, 127
    %v1499 = vadd.s32 %v1498, 256
    %vm1500 = vcmp.lt.s32.totalorder %v1499, 288
    %v1501 = vsel %vm1500, %v1495, %v10
    %s1502 = scalar_lea.vmem [#allocation7], 368
    %v1503 = vpack.c.bf16 0.0, %v1501
    %1505 = vst [vmem:[%s1502] sm:$0xf] %v1503
    %s1506 = scalar_lea.vmem %s2, 372
    %v1507 = vld [vmem:[%s1506] sm:$0xf]
    %v1508 = vunpack.c.l.bf16 %v1507
    %v1509 = vunpack.c.h.bf16 %v1507
    %v1510 = vlaneseq
    %v1511 = vand.u32 %v1510, 127
    %vm1513 = vcmp.lt.s32.totalorder %v1511, 288
    %v1514 = vsel %vm1513, %v1508, %v10
    %s1515 = scalar_lea.vmem [#allocation7], 372
    %v1516 = vpack.c.bf16 0.0, %v1514
    %1518 = vst [vmem:[%s1515] sm:$0xf] %v1516
    %s1519 = scalar_lea.vmem %s2, 376
    %v1520 = vld [vmem:[%s1519] sm:$0xf]
    %v1521 = vunpack.c.l.bf16 %v1520
    %v1522 = vunpack.c.h.bf16 %v1520
    %v1523 = vlaneseq
    %v1524 = vand.u32 %v1523, 127
    %v1525 = vadd.s32 %v1524, 128
    %vm1526 = vcmp.lt.s32.totalorder %v1525, 288
    %v1527 = vsel %vm1526, %v1521, %v10
    %s1528 = scalar_lea.vmem [#allocation7], 376
    %v1529 = vpack.c.bf16 0.0, %v1527
    %1531 = vst [vmem:[%s1528] sm:$0xf] %v1529
    %s1532 = scalar_lea.vmem %s2, 380
    %s1534 = sor.u32 255, 127
    %s1535 = sand.u32 %s1534, 85
    %s1536 = sshrl.u32 %s1535, 1
    %s1537 = sor.u32 %s1535, %s1536
    %s1538 = sand.u32 51, %s1537
    %s1539 = sshrl.u32 %s1538, 2
    %s1540 = sor.u32 %s1538, %s1539
    %s1541 = sand.u32 15, %s1540
    %v1542 = vld [vmem:[%s1532] sm:%s1541]
    %v1543 = vunpack.c.l.bf16 %v1542
    %v1544 = vunpack.c.h.bf16 %v1542
    %v1545 = vlaneseq
    %v1546 = vand.u32 %v1545, 127
    %v1547 = vadd.s32 %v1546, 256
    %vm1548 = vcmp.lt.s32.totalorder %v1547, 288
    %v1549 = vsel %vm1548, %v1543, %v10
    %s1550 = scalar_lea.vmem [#allocation7], 380
    %v1551 = vpack.c.bf16 0.0, %v1549
    %1553 = vst [vmem:[%s1550] sm:$0xf] %v1551
    %s1554 = scalar_lea.vmem %s2, 384
    %v1555 = vld [vmem:[%s1554] sm:$0xf]
    %v1556 = vunpack.c.l.bf16 %v1555
    %v1557 = vunpack.c.h.bf16 %v1555
    %v1558 = vlaneseq
    %v1559 = vand.u32 %v1558, 127
    %vm1561 = vcmp.lt.s32.totalorder %v1559, 288
    %v1562 = vsel %vm1561, %v1556, %v10
    %s1563 = scalar_lea.vmem [#allocation7], 384
    %v1564 = vpack.c.bf16 0.0, %v1562
    %1566 = vst [vmem:[%s1563] sm:$0xf] %v1564
    %s1567 = scalar_lea.vmem %s2, 388
    %v1568 = vld [vmem:[%s1567] sm:$0xf]
    %v1569 = vunpack.c.l.bf16 %v1568
    %v1570 = vunpack.c.h.bf16 %v1568
    %v1571 = vlaneseq
    %v1572 = vand.u32 %v1571, 127
    %v1573 = vadd.s32 %v1572, 128
    %vm1574 = vcmp.lt.s32.totalorder %v1573, 288
    %v1575 = vsel %vm1574, %v1569, %v10
    %s1576 = scalar_lea.vmem [#allocation7], 388
    %v1577 = vpack.c.bf16 0.0, %v1575
    %1579 = vst [vmem:[%s1576] sm:$0xf] %v1577
    %s1580 = scalar_lea.vmem %s2, 392
    %s1582 = sor.u32 255, 127
    %s1583 = sand.u32 %s1582, 85
    %s1584 = sshrl.u32 %s1583, 1
    %s1585 = sor.u32 %s1583, %s1584
    %s1586 = sand.u32 51, %s1585
    %s1587 = sshrl.u32 %s1586, 2
    %s1588 = sor.u32 %s1586, %s1587
    %s1589 = sand.u32 15, %s1588
    %v1590 = vld [vmem:[%s1580] sm:%s1589]
    %v1591 = vunpack.c.l.bf16 %v1590
    %v1592 = vunpack.c.h.bf16 %v1590
    %v1593 = vlaneseq
    %v1594 = vand.u32 %v1593, 127
    %v1595 = vadd.s32 %v1594, 256
    %vm1596 = vcmp.lt.s32.totalorder %v1595, 288
    %v1597 = vsel %vm1596, %v1591, %v10
    %s1598 = scalar_lea.vmem [#allocation7], 392
    %v1599 = vpack.c.bf16 0.0, %v1597
    %1601 = vst [vmem:[%s1598] sm:$0xf] %v1599
    %s1602 = scalar_lea.vmem %s2, 396
    %v1603 = vld [vmem:[%s1602] sm:$0xf]
    %v1604 = vunpack.c.l.bf16 %v1603
    %v1605 = vunpack.c.h.bf16 %v1603
    %v1606 = vlaneseq
    %v1607 = vand.u32 %v1606, 127
    %vm1609 = vcmp.lt.s32.totalorder %v1607, 288
    %v1610 = vsel %vm1609, %v1604, %v10
    %s1611 = scalar_lea.vmem [#allocation7], 396
    %v1612 = vpack.c.bf16 0.0, %v1610
    %1614 = vst [vmem:[%s1611] sm:$0xf] %v1612
    %s1615 = scalar_lea.vmem %s2, 400
    %v1616 = vld [vmem:[%s1615] sm:$0xf]
    %v1617 = vunpack.c.l.bf16 %v1616
    %v1618 = vunpack.c.h.bf16 %v1616
    %v1619 = vlaneseq
    %v1620 = vand.u32 %v1619, 127
    %v1621 = vadd.s32 %v1620, 128
    %vm1622 = vcmp.lt.s32.totalorder %v1621, 288
    %v1623 = vsel %vm1622, %v1617, %v10
    %s1624 = scalar_lea.vmem [#allocation7], 400
    %v1625 = vpack.c.bf16 0.0, %v1623
    %1627 = vst [vmem:[%s1624] sm:$0xf] %v1625
    %s1628 = scalar_lea.vmem %s2, 404
    %s1630 = sor.u32 255, 127
    %s1631 = sand.u32 %s1630, 85
    %s1632 = sshrl.u32 %s1631, 1
    %s1633 = sor.u32 %s1631, %s1632
    %s1634 = sand.u32 51, %s1633
    %s1635 = sshrl.u32 %s1634, 2
    %s1636 = sor.u32 %s1634, %s1635
    %s1637 = sand.u32 15, %s1636
    %v1638 = vld [vmem:[%s1628] sm:%s1637]
    %v1639 = vunpack.c.l.bf16 %v1638
    %v1640 = vunpack.c.h.bf16 %v1638
    %v1641 = vlaneseq
    %v1642 = vand.u32 %v1641, 127
    %v1643 = vadd.s32 %v1642, 256
    %vm1644 = vcmp.lt.s32.totalorder %v1643, 288
    %v1645 = vsel %vm1644, %v1639, %v10
    %s1646 = scalar_lea.vmem [#allocation7], 404
    %v1647 = vpack.c.bf16 0.0, %v1645
    %1649 = vst [vmem:[%s1646] sm:$0xf] %v1647
    %s1650 = scalar_lea.vmem %s2, 408
    %v1651 = vld [vmem:[%s1650] sm:$0xf]
    %v1652 = vunpack.c.l.bf16 %v1651
    %v1653 = vunpack.c.h.bf16 %v1651
    %v1654 = vlaneseq
    %v1655 = vand.u32 %v1654, 127
    %vm1657 = vcmp.lt.s32.totalorder %v1655, 288
    %v1658 = vsel %vm1657, %v1652, %v10
    %s1659 = scalar_lea.vmem [#allocation7], 408
    %v1660 = vpack.c.bf16 0.0, %v1658
    %1662 = vst [vmem:[%s1659] sm:$0xf] %v1660
    %s1663 = scalar_lea.vmem %s2, 412
    %v1664 = vld [vmem:[%s1663] sm:$0xf]
    %v1665 = vunpack.c.l.bf16 %v1664
    %v1666 = vunpack.c.h.bf16 %v1664
    %v1667 = vlaneseq
    %v1668 = vand.u32 %v1667, 127
    %v1669 = vadd.s32 %v1668, 128
    %vm1670 = vcmp.lt.s32.totalorder %v1669, 288
    %v1671 = vsel %vm1670, %v1665, %v10
    %s1672 = scalar_lea.vmem [#allocation7], 412
    %v1673 = vpack.c.bf16 0.0, %v1671
    %1675 = vst [vmem:[%s1672] sm:$0xf] %v1673
    %s1676 = scalar_lea.vmem %s2, 416
    %s1678 = sor.u32 255, 127
    %s1679 = sand.u32 %s1678, 85
    %s1680 = sshrl.u32 %s1679, 1
    %s1681 = sor.u32 %s1679, %s1680
    %s1682 = sand.u32 51, %s1681
    %s1683 = sshrl.u32 %s1682, 2
    %s1684 = sor.u32 %s1682, %s1683
    %s1685 = sand.u32 15, %s1684
    %v1686 = vld [vmem:[%s1676] sm:%s1685]
    %v1687 = vunpack.c.l.bf16 %v1686
    %v1688 = vunpack.c.h.bf16 %v1686
    %v1689 = vlaneseq
    %v1690 = vand.u32 %v1689, 127
    %v1691 = vadd.s32 %v1690, 256
    %vm1692 = vcmp.lt.s32.totalorder %v1691, 288
    %v1693 = vsel %vm1692, %v1687, %v10
    %s1694 = scalar_lea.vmem [#allocation7], 416
    %v1695 = vpack.c.bf16 0.0, %v1693
    %1697 = vst [vmem:[%s1694] sm:$0xf] %v1695
    %s1698 = scalar_lea.vmem %s2, 420
    %v1699 = vld [vmem:[%s1698] sm:$0xf]
    %v1700 = vunpack.c.l.bf16 %v1699
    %v1701 = vunpack.c.h.bf16 %v1699
    %v1702 = vlaneseq
    %v1703 = vand.u32 %v1702, 127
    %vm1705 = vcmp.lt.s32.totalorder %v1703, 288
    %v1706 = vsel %vm1705, %v1700, %v10
    %s1707 = scalar_lea.vmem [#allocation7], 420
    %v1708 = vpack.c.bf16 0.0, %v1706
    %1710 = vst [vmem:[%s1707] sm:$0xf] %v1708
    %s1711 = scalar_lea.vmem %s2, 424
    %v1712 = vld [vmem:[%s1711] sm:$0xf]
    %v1713 = vunpack.c.l.bf16 %v1712
    %v1714 = vunpack.c.h.bf16 %v1712
    %v1715 = vlaneseq
    %v1716 = vand.u32 %v1715, 127
    %v1717 = vadd.s32 %v1716, 128
    %vm1718 = vcmp.lt.s32.totalorder %v1717, 288
    %v1719 = vsel %vm1718, %v1713, %v10
    %s1720 = scalar_lea.vmem [#allocation7], 424
    %v1721 = vpack.c.bf16 0.0, %v1719
    %1723 = vst [vmem:[%s1720] sm:$0xf] %v1721
    %s1724 = scalar_lea.vmem %s2, 428
    %s1726 = sor.u32 255, 127
    %s1727 = sand.u32 %s1726, 85
    %s1728 = sshrl.u32 %s1727, 1
    %s1729 = sor.u32 %s1727, %s1728
    %s1730 = sand.u32 51, %s1729
    %s1731 = sshrl.u32 %s1730, 2
    %s1732 = sor.u32 %s1730, %s1731
    %s1733 = sand.u32 15, %s1732
    %v1734 = vld [vmem:[%s1724] sm:%s1733]
    %v1735 = vunpack.c.l.bf16 %v1734
    %v1736 = vunpack.c.h.bf16 %v1734
    %v1737 = vlaneseq
    %v1738 = vand.u32 %v1737, 127
    %v1739 = vadd.s32 %v1738, 256
    %vm1740 = vcmp.lt.s32.totalorder %v1739, 288
    %v1741 = vsel %vm1740, %v1735, %v10
    %s1742 = scalar_lea.vmem [#allocation7], 428
    %v1743 = vpack.c.bf16 0.0, %v1741
    %1745 = vst [vmem:[%s1742] sm:$0xf] %v1743
    %s1746 = scalar_lea.vmem %s2, 432
    %v1747 = vld [vmem:[%s1746] sm:$0xf]
    %v1748 = vunpack.c.l.bf16 %v1747
    %v1749 = vunpack.c.h.bf16 %v1747
    %v1750 = vlaneseq
    %v1751 = vand.u32 %v1750, 127
    %vm1753 = vcmp.lt.s32.totalorder %v1751, 288
    %v1754 = vsel %vm1753, %v1748, %v10
    %s1755 = scalar_lea.vmem [#allocation7], 432
    %v1756 = vpack.c.bf16 0.0, %v1754
    %1758 = vst [vmem:[%s1755] sm:$0xf] %v1756
    %s1759 = scalar_lea.vmem %s2, 436
    %v1760 = vld [vmem:[%s1759] sm:$0xf]
    %v1761 = vunpack.c.l.bf16 %v1760
    %v1762 = vunpack.c.h.bf16 %v1760
    %v1763 = vlaneseq
    %v1764 = vand.u32 %v1763, 127
    %v1765 = vadd.s32 %v1764, 128
    %vm1766 = vcmp.lt.s32.totalorder %v1765, 288
    %v1767 = vsel %vm1766, %v1761, %v10
    %s1768 = scalar_lea.vmem [#allocation7], 436
    %v1769 = vpack.c.bf16 0.0, %v1767
    %1771 = vst [vmem:[%s1768] sm:$0xf] %v1769
    %s1772 = scalar_lea.vmem %s2, 440
    %s1774 = sor.u32 255, 127
    %s1775 = sand.u32 %s1774, 85
    %s1776 = sshrl.u32 %s1775, 1
    %s1777 = sor.u32 %s1775, %s1776
    %s1778 = sand.u32 51, %s1777
    %s1779 = sshrl.u32 %s1778, 2
    %s1780 = sor.u32 %s1778, %s1779
    %s1781 = sand.u32 15, %s1780
    %v1782 = vld [vmem:[%s1772] sm:%s1781]
    %v1783 = vunpack.c.l.bf16 %v1782
    %v1784 = vunpack.c.h.bf16 %v1782
    %v1785 = vlaneseq
    %v1786 = vand.u32 %v1785, 127
    %v1787 = vadd.s32 %v1786, 256
    %vm1788 = vcmp.lt.s32.totalorder %v1787, 288
    %v1789 = vsel %vm1788, %v1783, %v10
    %s1790 = scalar_lea.vmem [#allocation7], 440
    %v1791 = vpack.c.bf16 0.0, %v1789
    %1793 = vst [vmem:[%s1790] sm:$0xf] %v1791
    %s1794 = scalar_lea.vmem %s2, 444
    %v1795 = vld [vmem:[%s1794] sm:$0xf]
    %v1796 = vunpack.c.l.bf16 %v1795
    %v1797 = vunpack.c.h.bf16 %v1795
    %v1798 = vlaneseq
    %v1799 = vand.u32 %v1798, 127
    %vm1801 = vcmp.lt.s32.totalorder %v1799, 288
    %v1802 = vsel %vm1801, %v1796, %v10
    %s1803 = scalar_lea.vmem [#allocation7], 444
    %v1804 = vpack.c.bf16 0.0, %v1802
    %1806 = vst [vmem:[%s1803] sm:$0xf] %v1804
    %s1807 = scalar_lea.vmem %s2, 448
    %v1808 = vld [vmem:[%s1807] sm:$0xf]
    %v1809 = vunpack.c.l.bf16 %v1808
    %v1810 = vunpack.c.h.bf16 %v1808
    %v1811 = vlaneseq
    %v1812 = vand.u32 %v1811, 127
    %v1813 = vadd.s32 %v1812, 128
    %vm1814 = vcmp.lt.s32.totalorder %v1813, 288
    %v1815 = vsel %vm1814, %v1809, %v10
    %s1816 = scalar_lea.vmem [#allocation7], 448
    %v1817 = vpack.c.bf16 0.0, %v1815
    %1819 = vst [vmem:[%s1816] sm:$0xf] %v1817
    %s1820 = scalar_lea.vmem %s2, 452
    %s1822 = sor.u32 255, 127
    %s1823 = sand.u32 %s1822, 85
    %s1824 = sshrl.u32 %s1823, 1
    %s1825 = sor.u32 %s1823, %s1824
    %s1826 = sand.u32 51, %s1825
    %s1827 = sshrl.u32 %s1826, 2
    %s1828 = sor.u32 %s1826, %s1827
    %s1829 = sand.u32 15, %s1828
    %v1830 = vld [vmem:[%s1820] sm:%s1829]
    %v1831 = vunpack.c.l.bf16 %v1830
    %v1832 = vunpack.c.h.bf16 %v1830
    %v1833 = vlaneseq
    %v1834 = vand.u32 %v1833, 127
    %v1835 = vadd.s32 %v1834, 256
    %vm1836 = vcmp.lt.s32.totalorder %v1835, 288
    %v1837 = vsel %vm1836, %v1831, %v10
    %s1838 = scalar_lea.vmem [#allocation7], 452
    %v1839 = vpack.c.bf16 0.0, %v1837
    %1841 = vst [vmem:[%s1838] sm:$0xf] %v1839
    %s1842 = scalar_lea.vmem %s2, 456
    %v1843 = vld [vmem:[%s1842] sm:$0xf]
    %v1844 = vunpack.c.l.bf16 %v1843
    %v1845 = vunpack.c.h.bf16 %v1843
    %v1846 = vlaneseq
    %v1847 = vand.u32 %v1846, 127
    %vm1849 = vcmp.lt.s32.totalorder %v1847, 288
    %v1850 = vsel %vm1849, %v1844, %v10
    %s1851 = scalar_lea.vmem [#allocation7], 456
    %v1852 = vpack.c.bf16 0.0, %v1850
    %1854 = vst [vmem:[%s1851] sm:$0xf] %v1852
    %s1855 = scalar_lea.vmem %s2, 460
    %v1856 = vld [vmem:[%s1855] sm:$0xf]
    %v1857 = vunpack.c.l.bf16 %v1856
    %v1858 = vunpack.c.h.bf16 %v1856
    %v1859 = vlaneseq
    %v1860 = vand.u32 %v1859, 127
    %v1861 = vadd.s32 %v1860, 128
    %vm1862 = vcmp.lt.s32.totalorder %v1861, 288
    %v1863 = vsel %vm1862, %v1857, %v10
    %s1864 = scalar_lea.vmem [#allocation7], 460
    %v1865 = vpack.c.bf16 0.0, %v1863
    %1867 = vst [vmem:[%s1864] sm:$0xf] %v1865
    %s1868 = scalar_lea.vmem %s2, 464
    %s1870 = sor.u32 255, 127
    %s1871 = sand.u32 %s1870, 85
    %s1872 = sshrl.u32 %s1871, 1
    %s1873 = sor.u32 %s1871, %s1872
    %s1874 = sand.u32 51, %s1873
    %s1875 = sshrl.u32 %s1874, 2
    %s1876 = sor.u32 %s1874, %s1875
    %s1877 = sand.u32 15, %s1876
    %v1878 = vld [vmem:[%s1868] sm:%s1877]
    %v1879 = vunpack.c.l.bf16 %v1878
    %v1880 = vunpack.c.h.bf16 %v1878
    %v1881 = vlaneseq
    %v1882 = vand.u32 %v1881, 127
    %v1883 = vadd.s32 %v1882, 256
    %vm1884 = vcmp.lt.s32.totalorder %v1883, 288
    %v1885 = vsel %vm1884, %v1879, %v10
    %s1886 = scalar_lea.vmem [#allocation7], 464
    %v1887 = vpack.c.bf16 0.0, %v1885
    %1889 = vst [vmem:[%s1886] sm:$0xf] %v1887
    %s1890 = scalar_lea.vmem %s2, 468
    %v1891 = vld [vmem:[%s1890] sm:$0xf]
    %v1892 = vunpack.c.l.bf16 %v1891
    %v1893 = vunpack.c.h.bf16 %v1891
    %v1894 = vlaneseq
    %v1895 = vand.u32 %v1894, 127
    %vm1897 = vcmp.lt.s32.totalorder %v1895, 288
    %v1898 = vsel %vm1897, %v1892, %v10
    %s1899 = scalar_lea.vmem [#allocation7], 468
    %v1900 = vpack.c.bf16 0.0, %v1898
    %1902 = vst [vmem:[%s1899] sm:$0xf] %v1900
    %s1903 = scalar_lea.vmem %s2, 472
    %v1904 = vld [vmem:[%s1903] sm:$0xf]
    %v1905 = vunpack.c.l.bf16 %v1904
    %v1906 = vunpack.c.h.bf16 %v1904
    %v1907 = vlaneseq
    %v1908 = vand.u32 %v1907, 127
    %v1909 = vadd.s32 %v1908, 128
    %vm1910 = vcmp.lt.s32.totalorder %v1909, 288
    %v1911 = vsel %vm1910, %v1905, %v10
    %s1912 = scalar_lea.vmem [#allocation7], 472
    %v1913 = vpack.c.bf16 0.0, %v1911
    %1915 = vst [vmem:[%s1912] sm:$0xf] %v1913
    %s1916 = scalar_lea.vmem %s2, 476
    %s1918 = sor.u32 255, 127
    %s1919 = sand.u32 %s1918, 85
    %s1920 = sshrl.u32 %s1919, 1
    %s1921 = sor.u32 %s1919, %s1920
    %s1922 = sand.u32 51, %s1921
    %s1923 = sshrl.u32 %s1922, 2
    %s1924 = sor.u32 %s1922, %s1923
    %s1925 = sand.u32 15, %s1924
    %v1926 = vld [vmem:[%s1916] sm:%s1925]
    %v1927 = vunpack.c.l.bf16 %v1926
    %v1928 = vunpack.c.h.bf16 %v1926
    %v1929 = vlaneseq
    %v1930 = vand.u32 %v1929, 127
    %v1931 = vadd.s32 %v1930, 256
    %vm1932 = vcmp.lt.s32.totalorder %v1931, 288
    %v1933 = vsel %vm1932, %v1927, %v10
    %s1934 = scalar_lea.vmem [#allocation7], 476
    %v1935 = vpack.c.bf16 0.0, %v1933
    %1937 = vst [vmem:[%s1934] sm:$0xf] %v1935
    %s1938 = scalar_lea.vmem %s2, 480
    %v1939 = vld [vmem:[%s1938] sm:$0xf]
    %v1940 = vunpack.c.l.bf16 %v1939
    %v1941 = vunpack.c.h.bf16 %v1939
    %v1942 = vlaneseq
    %v1943 = vand.u32 %v1942, 127
    %vm1945 = vcmp.lt.s32.totalorder %v1943, 288
    %v1946 = vsel %vm1945, %v1940, %v10
    %s1947 = scalar_lea.vmem [#allocation7], 480
    %v1948 = vpack.c.bf16 0.0, %v1946
    %1950 = vst [vmem:[%s1947] sm:$0xf] %v1948
    %s1951 = scalar_lea.vmem %s2, 484
    %v1952 = vld [vmem:[%s1951] sm:$0xf]
    %v1953 = vunpack.c.l.bf16 %v1952
    %v1954 = vunpack.c.h.bf16 %v1952
    %v1955 = vlaneseq
    %v1956 = vand.u32 %v1955, 127
    %v1957 = vadd.s32 %v1956, 128
    %vm1958 = vcmp.lt.s32.totalorder %v1957, 288
    %v1959 = vsel %vm1958, %v1953, %v10
    %s1960 = scalar_lea.vmem [#allocation7], 484
    %v1961 = vpack.c.bf16 0.0, %v1959
    %1963 = vst [vmem:[%s1960] sm:$0xf] %v1961
    %s1964 = scalar_lea.vmem %s2, 488
    %s1966 = sor.u32 255, 127
    %s1967 = sand.u32 %s1966, 85
    %s1968 = sshrl.u32 %s1967, 1
    %s1969 = sor.u32 %s1967, %s1968
    %s1970 = sand.u32 51, %s1969
    %s1971 = sshrl.u32 %s1970, 2
    %s1972 = sor.u32 %s1970, %s1971
    %s1973 = sand.u32 15, %s1972
    %v1974 = vld [vmem:[%s1964] sm:%s1973]
    %v1975 = vunpack.c.l.bf16 %v1974
    %v1976 = vunpack.c.h.bf16 %v1974
    %v1977 = vlaneseq
    %v1978 = vand.u32 %v1977, 127
    %v1979 = vadd.s32 %v1978, 256
    %vm1980 = vcmp.lt.s32.totalorder %v1979, 288
    %v1981 = vsel %vm1980, %v1975, %v10
    %s1982 = scalar_lea.vmem [#allocation7], 488
    %v1983 = vpack.c.bf16 0.0, %v1981
    %1985 = vst [vmem:[%s1982] sm:$0xf] %v1983
    %s1986 = scalar_lea.vmem %s2, 492
    %v1987 = vld [vmem:[%s1986] sm:$0xf]
    %v1988 = vunpack.c.l.bf16 %v1987
    %v1989 = vunpack.c.h.bf16 %v1987
    %v1990 = vlaneseq
    %v1991 = vand.u32 %v1990, 127
    %vm1993 = vcmp.lt.s32.totalorder %v1991, 288
    %v1994 = vsel %vm1993, %v1988, %v10
    %s1995 = scalar_lea.vmem [#allocation7], 492
    %v1996 = vpack.c.bf16 0.0, %v1994
    %1998 = vst [vmem:[%s1995] sm:$0xf] %v1996
    %s1999 = scalar_lea.vmem %s2, 496
    %v2000 = vld [vmem:[%s1999] sm:$0xf]
    %v2001 = vunpack.c.l.bf16 %v2000
    %v2002 = vunpack.c.h.bf16 %v2000
    %v2003 = vlaneseq
    %v2004 = vand.u32 %v2003, 127
    %v2005 = vadd.s32 %v2004, 128
    %vm2006 = vcmp.lt.s32.totalorder %v2005, 288
    %v2007 = vsel %vm2006, %v2001, %v10
    %s2008 = scalar_lea.vmem [#allocation7], 496
    %v2009 = vpack.c.bf16 0.0, %v2007
    %2011 = vst [vmem:[%s2008] sm:$0xf] %v2009
    %s2012 = scalar_lea.vmem %s2, 500
    %s2014 = sor.u32 255, 127
    %s2015 = sand.u32 %s2014, 85
    %s2016 = sshrl.u32 %s2015, 1
    %s2017 = sor.u32 %s2015, %s2016
    %s2018 = sand.u32 51, %s2017
    %s2019 = sshrl.u32 %s2018, 2
    %s2020 = sor.u32 %s2018, %s2019
    %s2021 = sand.u32 15, %s2020
    %v2022 = vld [vmem:[%s2012] sm:%s2021]
    %v2023 = vunpack.c.l.bf16 %v2022
    %v2024 = vunpack.c.h.bf16 %v2022
    %v2025 = vlaneseq
    %v2026 = vand.u32 %v2025, 127
    %v2027 = vadd.s32 %v2026, 256
    %vm2028 = vcmp.lt.s32.totalorder %v2027, 288
    %v2029 = vsel %vm2028, %v2023, %v10
    %s2030 = scalar_lea.vmem [#allocation7], 500
    %v2031 = vpack.c.bf16 0.0, %v2029
    %2033 = vst [vmem:[%s2030] sm:$0xf] %v2031
    %s2034 = scalar_lea.vmem %s2, 504
    %v2035 = vld [vmem:[%s2034] sm:$0xf]
    %v2036 = vunpack.c.l.bf16 %v2035
    %v2037 = vunpack.c.h.bf16 %v2035
    %v2038 = vlaneseq
    %v2039 = vand.u32 %v2038, 127
    %vm2041 = vcmp.lt.s32.totalorder %v2039, 288
    %v2042 = vsel %vm2041, %v2036, %v10
    %s2043 = scalar_lea.vmem [#allocation7], 504
    %v2044 = vpack.c.bf16 0.0, %v2042
    %2046 = vst [vmem:[%s2043] sm:$0xf] %v2044
    %s2047 = scalar_lea.vmem %s2, 508
    %v2048 = vld [vmem:[%s2047] sm:$0xf]
    %v2049 = vunpack.c.l.bf16 %v2048
    %v2050 = vunpack.c.h.bf16 %v2048
    %v2051 = vlaneseq
    %v2052 = vand.u32 %v2051, 127
    %v2053 = vadd.s32 %v2052, 128
    %vm2054 = vcmp.lt.s32.totalorder %v2053, 288
    %v2055 = vsel %vm2054, %v2049, %v10
    %s2056 = scalar_lea.vmem [#allocation7], 508
    %v2057 = vpack.c.bf16 0.0, %v2055
    %2059 = vst [vmem:[%s2056] sm:$0xf] %v2057
    %s2060 = scalar_lea.vmem %s2, 512
    %s2062 = sor.u32 255, 127
    %s2063 = sand.u32 %s2062, 85
    %s2064 = sshrl.u32 %s2063, 1
    %s2065 = sor.u32 %s2063, %s2064
    %s2066 = sand.u32 51, %s2065
    %s2067 = sshrl.u32 %s2066, 2
    %s2068 = sor.u32 %s2066, %s2067
    %s2069 = sand.u32 15, %s2068
    %v2070 = vld [vmem:[%s2060] sm:%s2069]
    %v2071 = vunpack.c.l.bf16 %v2070
    %v2072 = vunpack.c.h.bf16 %v2070
    %v2073 = vlaneseq
    %v2074 = vand.u32 %v2073, 127
    %v2075 = vadd.s32 %v2074, 256
    %vm2076 = vcmp.lt.s32.totalorder %v2075, 288
    %v2077 = vsel %vm2076, %v2071, %v10
    %s2078 = scalar_lea.vmem [#allocation7], 512
    %v2079 = vpack.c.bf16 0.0, %v2077
    %2081 = vst [vmem:[%s2078] sm:$0xf] %v2079
    %s2082 = scalar_lea.vmem %s2, 516
    %v2083 = vld [vmem:[%s2082] sm:$0xf]
    %v2084 = vunpack.c.l.bf16 %v2083
    %v2085 = vunpack.c.h.bf16 %v2083
    %v2086 = vlaneseq
    %v2087 = vand.u32 %v2086, 127
    %vm2089 = vcmp.lt.s32.totalorder %v2087, 288
    %v2090 = vsel %vm2089, %v2084, %v10
    %s2091 = scalar_lea.vmem [#allocation7], 516
    %v2092 = vpack.c.bf16 0.0, %v2090
    %2094 = vst [vmem:[%s2091] sm:$0xf] %v2092
    %s2095 = scalar_lea.vmem %s2, 520
    %v2096 = vld [vmem:[%s2095] sm:$0xf]
    %v2097 = vunpack.c.l.bf16 %v2096
    %v2098 = vunpack.c.h.bf16 %v2096
    %v2099 = vlaneseq
    %v2100 = vand.u32 %v2099, 127
    %v2101 = vadd.s32 %v2100, 128
    %vm2102 = vcmp.lt.s32.totalorder %v2101, 288
    %v2103 = vsel %vm2102, %v2097, %v10
    %s2104 = scalar_lea.vmem [#allocation7], 520
    %v2105 = vpack.c.bf16 0.0, %v2103
    %2107 = vst [vmem:[%s2104] sm:$0xf] %v2105
    %s2108 = scalar_lea.vmem %s2, 524
    %s2110 = sor.u32 255, 127
    %s2111 = sand.u32 %s2110, 85
    %s2112 = sshrl.u32 %s2111, 1
    %s2113 = sor.u32 %s2111, %s2112
    %s2114 = sand.u32 51, %s2113
    %s2115 = sshrl.u32 %s2114, 2
    %s2116 = sor.u32 %s2114, %s2115
    %s2117 = sand.u32 15, %s2116
    %v2118 = vld [vmem:[%s2108] sm:%s2117]
    %v2119 = vunpack.c.l.bf16 %v2118
    %v2120 = vunpack.c.h.bf16 %v2118
    %v2121 = vlaneseq
    %v2122 = vand.u32 %v2121, 127
    %v2123 = vadd.s32 %v2122, 256
    %vm2124 = vcmp.lt.s32.totalorder %v2123, 288
    %v2125 = vsel %vm2124, %v2119, %v10
    %s2126 = scalar_lea.vmem [#allocation7], 524
    %v2127 = vpack.c.bf16 0.0, %v2125
    %2129 = vst [vmem:[%s2126] sm:$0xf] %v2127
    %s2130 = scalar_lea.vmem %s2, 528
    %v2131 = vld [vmem:[%s2130] sm:$0xf]
    %v2132 = vunpack.c.l.bf16 %v2131
    %v2133 = vunpack.c.h.bf16 %v2131
    %v2134 = vlaneseq
    %v2135 = vand.u32 %v2134, 127
    %vm2137 = vcmp.lt.s32.totalorder %v2135, 288
    %v2138 = vsel %vm2137, %v2132, %v10
    %s2139 = scalar_lea.vmem [#allocation7], 528
    %v2140 = vpack.c.bf16 0.0, %v2138
    %2142 = vst [vmem:[%s2139] sm:$0xf] %v2140
    %s2143 = scalar_lea.vmem %s2, 532
    %v2144 = vld [vmem:[%s2143] sm:$0xf]
    %v2145 = vunpack.c.l.bf16 %v2144
    %v2146 = vunpack.c.h.bf16 %v2144
    %v2147 = vlaneseq
    %v2148 = vand.u32 %v2147, 127
    %v2149 = vadd.s32 %v2148, 128
    %vm2150 = vcmp.lt.s32.totalorder %v2149, 288
    %v2151 = vsel %vm2150, %v2145, %v10
    %s2152 = scalar_lea.vmem [#allocation7], 532
    %v2153 = vpack.c.bf16 0.0, %v2151
    %2155 = vst [vmem:[%s2152] sm:$0xf] %v2153
    %s2156 = scalar_lea.vmem %s2, 536
    %s2158 = sor.u32 255, 127
    %s2159 = sand.u32 %s2158, 85
    %s2160 = sshrl.u32 %s2159, 1
    %s2161 = sor.u32 %s2159, %s2160
    %s2162 = sand.u32 51, %s2161
    %s2163 = sshrl.u32 %s2162, 2
    %s2164 = sor.u32 %s2162, %s2163
    %s2165 = sand.u32 15, %s2164
    %v2166 = vld [vmem:[%s2156] sm:%s2165]
    %v2167 = vunpack.c.l.bf16 %v2166
    %v2168 = vunpack.c.h.bf16 %v2166
    %v2169 = vlaneseq
    %v2170 = vand.u32 %v2169, 127
    %v2171 = vadd.s32 %v2170, 256
    %vm2172 = vcmp.lt.s32.totalorder %v2171, 288
    %v2173 = vsel %vm2172, %v2167, %v10
    %s2174 = scalar_lea.vmem [#allocation7], 536
    %v2175 = vpack.c.bf16 0.0, %v2173
    %2177 = vst [vmem:[%s2174] sm:$0xf] %v2175
    %s2178 = scalar_lea.vmem %s2, 540
    %v2179 = vld [vmem:[%s2178] sm:$0xf]
    %v2180 = vunpack.c.l.bf16 %v2179
    %v2181 = vunpack.c.h.bf16 %v2179
    %v2182 = vlaneseq
    %v2183 = vand.u32 %v2182, 127
    %vm2185 = vcmp.lt.s32.totalorder %v2183, 288
    %v2186 = vsel %vm2185, %v2180, %v10
    %s2187 = scalar_lea.vmem [#allocation7], 540
    %v2188 = vpack.c.bf16 0.0, %v2186
    %2190 = vst [vmem:[%s2187] sm:$0xf] %v2188
    %s2191 = scalar_lea.vmem %s2, 544
    %v2192 = vld [vmem:[%s2191] sm:$0xf]
    %v2193 = vunpack.c.l.bf16 %v2192
    %v2194 = vunpack.c.h.bf16 %v2192
    %v2195 = vlaneseq
    %v2196 = vand.u32 %v2195, 127
    %v2197 = vadd.s32 %v2196, 128
    %vm2198 = vcmp.lt.s32.totalorder %v2197, 288
    %v2199 = vsel %vm2198, %v2193, %v10
    %s2200 = scalar_lea.vmem [#allocation7], 544
    %v2201 = vpack.c.bf16 0.0, %v2199
    %2203 = vst [vmem:[%s2200] sm:$0xf] %v2201
    %s2204 = scalar_lea.vmem %s2, 548
    %s2206 = sor.u32 255, 127
    %s2207 = sand.u32 %s2206, 85
    %s2208 = sshrl.u32 %s2207, 1
    %s2209 = sor.u32 %s2207, %s2208
    %s2210 = sand.u32 51, %s2209
    %s2211 = sshrl.u32 %s2210, 2
    %s2212 = sor.u32 %s2210, %s2211
    %s2213 = sand.u32 15, %s2212
    %v2214 = vld [vmem:[%s2204] sm:%s2213]
    %v2215 = vunpack.c.l.bf16 %v2214
    %v2216 = vunpack.c.h.bf16 %v2214
    %v2217 = vlaneseq
    %v2218 = vand.u32 %v2217, 127
    %v2219 = vadd.s32 %v2218, 256
    %vm2220 = vcmp.lt.s32.totalorder %v2219, 288
    %v2221 = vsel %vm2220, %v2215, %v10
    %s2222 = scalar_lea.vmem [#allocation7], 548
    %v2223 = vpack.c.bf16 0.0, %v2221
    %2225 = vst [vmem:[%s2222] sm:$0xf] %v2223
    %s2226 = scalar_lea.vmem %s2, 552
    %v2227 = vld [vmem:[%s2226] sm:$0xf]
    %v2228 = vunpack.c.l.bf16 %v2227
    %v2229 = vunpack.c.h.bf16 %v2227
    %v2230 = vlaneseq
    %v2231 = vand.u32 %v2230, 127
    %vm2233 = vcmp.lt.s32.totalorder %v2231, 288
    %v2234 = vsel %vm2233, %v2228, %v10
    %s2235 = scalar_lea.vmem [#allocation7], 552
    %v2236 = vpack.c.bf16 0.0, %v2234
    %2238 = vst [vmem:[%s2235] sm:$0xf] %v2236
    %s2239 = scalar_lea.vmem %s2, 556
    %v2240 = vld [vmem:[%s2239] sm:$0xf]
    %v2241 = vunpack.c.l.bf16 %v2240
    %v2242 = vunpack.c.h.bf16 %v2240
    %v2243 = vlaneseq
    %v2244 = vand.u32 %v2243, 127
    %v2245 = vadd.s32 %v2244, 128
    %vm2246 = vcmp.lt.s32.totalorder %v2245, 288
    %v2247 = vsel %vm2246, %v2241, %v10
    %s2248 = scalar_lea.vmem [#allocation7], 556
    %v2249 = vpack.c.bf16 0.0, %v2247
    %2251 = vst [vmem:[%s2248] sm:$0xf] %v2249
    %s2252 = scalar_lea.vmem %s2, 560
    %s2254 = sor.u32 255, 127
    %s2255 = sand.u32 %s2254, 85
    %s2256 = sshrl.u32 %s2255, 1
    %s2257 = sor.u32 %s2255, %s2256
    %s2258 = sand.u32 51, %s2257
    %s2259 = sshrl.u32 %s2258, 2
    %s2260 = sor.u32 %s2258, %s2259
    %s2261 = sand.u32 15, %s2260
    %v2262 = vld [vmem:[%s2252] sm:%s2261]
    %v2263 = vunpack.c.l.bf16 %v2262
    %v2264 = vunpack.c.h.bf16 %v2262
    %v2265 = vlaneseq
    %v2266 = vand.u32 %v2265, 127
    %v2267 = vadd.s32 %v2266, 256
    %vm2268 = vcmp.lt.s32.totalorder %v2267, 288
    %v2269 = vsel %vm2268, %v2263, %v10
    %s2270 = scalar_lea.vmem [#allocation7], 560
    %v2271 = vpack.c.bf16 0.0, %v2269
    %2273 = vst [vmem:[%s2270] sm:$0xf] %v2271
    %s2274 = scalar_lea.vmem %s2, 564
    %v2275 = vld [vmem:[%s2274] sm:$0xf]
    %v2276 = vunpack.c.l.bf16 %v2275
    %v2277 = vunpack.c.h.bf16 %v2275
    %v2278 = vlaneseq
    %v2279 = vand.u32 %v2278, 127
    %vm2281 = vcmp.lt.s32.totalorder %v2279, 288
    %v2282 = vsel %vm2281, %v2276, %v10
    %s2283 = scalar_lea.vmem [#allocation7], 564
    %v2284 = vpack.c.bf16 0.0, %v2282
    %2286 = vst [vmem:[%s2283] sm:$0xf] %v2284
    %s2287 = scalar_lea.vmem %s2, 568
    %v2288 = vld [vmem:[%s2287] sm:$0xf]
    %v2289 = vunpack.c.l.bf16 %v2288
    %v2290 = vunpack.c.h.bf16 %v2288
    %v2291 = vlaneseq
    %v2292 = vand.u32 %v2291, 127
    %v2293 = vadd.s32 %v2292, 128
    %vm2294 = vcmp.lt.s32.totalorder %v2293, 288
    %v2295 = vsel %vm2294, %v2289, %v10
    %s2296 = scalar_lea.vmem [#allocation7], 568
    %v2297 = vpack.c.bf16 0.0, %v2295
    %2299 = vst [vmem:[%s2296] sm:$0xf] %v2297
    %s2300 = scalar_lea.vmem %s2, 572
    %s2302 = sor.u32 255, 127
    %s2303 = sand.u32 %s2302, 85
    %s2304 = sshrl.u32 %s2303, 1
    %s2305 = sor.u32 %s2303, %s2304
    %s2306 = sand.u32 51, %s2305
    %s2307 = sshrl.u32 %s2306, 2
    %s2308 = sor.u32 %s2306, %s2307
    %s2309 = sand.u32 15, %s2308
    %v2310 = vld [vmem:[%s2300] sm:%s2309]
    %v2311 = vunpack.c.l.bf16 %v2310
    %v2312 = vunpack.c.h.bf16 %v2310
    %v2313 = vlaneseq
    %v2314 = vand.u32 %v2313, 127
    %v2315 = vadd.s32 %v2314, 256
    %vm2316 = vcmp.lt.s32.totalorder %v2315, 288
    %v2317 = vsel %vm2316, %v2311, %v10
    %s2318 = scalar_lea.vmem [#allocation7], 572
    %v2319 = vpack.c.bf16 0.0, %v2317
    %2321 = vst [vmem:[%s2318] sm:$0xf] %v2319
    %s2322 = scalar_lea.vmem %s2, 576
    %v2323 = vld [vmem:[%s2322] sm:$0xf]
    %v2324 = vunpack.c.l.bf16 %v2323
    %v2325 = vunpack.c.h.bf16 %v2323
    %v2326 = vlaneseq
    %v2327 = vand.u32 %v2326, 127
    %vm2329 = vcmp.lt.s32.totalorder %v2327, 288
    %v2330 = vsel %vm2329, %v2324, %v10
    %s2331 = scalar_lea.vmem [#allocation7], 576
    %v2332 = vpack.c.bf16 0.0, %v2330
    %2334 = vst [vmem:[%s2331] sm:$0xf] %v2332
    %s2335 = scalar_lea.vmem %s2, 580
    %v2336 = vld [vmem:[%s2335] sm:$0xf]
    %v2337 = vunpack.c.l.bf16 %v2336
    %v2338 = vunpack.c.h.bf16 %v2336
    %v2339 = vlaneseq
    %v2340 = vand.u32 %v2339, 127
    %v2341 = vadd.s32 %v2340, 128
    %vm2342 = vcmp.lt.s32.totalorder %v2341, 288
    %v2343 = vsel %vm2342, %v2337, %v10
    %s2344 = scalar_lea.vmem [#allocation7], 580
    %v2345 = vpack.c.bf16 0.0, %v2343
    %2347 = vst [vmem:[%s2344] sm:$0xf] %v2345
    %s2348 = scalar_lea.vmem %s2, 584
    %s2350 = sor.u32 255, 127
    %s2351 = sand.u32 %s2350, 85
    %s2352 = sshrl.u32 %s2351, 1
    %s2353 = sor.u32 %s2351, %s2352
    %s2354 = sand.u32 51, %s2353
    %s2355 = sshrl.u32 %s2354, 2
    %s2356 = sor.u32 %s2354, %s2355
    %s2357 = sand.u32 15, %s2356
    %v2358 = vld [vmem:[%s2348] sm:%s2357]
    %v2359 = vunpack.c.l.bf16 %v2358
    %v2360 = vunpack.c.h.bf16 %v2358
    %v2361 = vlaneseq
    %v2362 = vand.u32 %v2361, 127
    %v2363 = vadd.s32 %v2362, 256
    %vm2364 = vcmp.lt.s32.totalorder %v2363, 288
    %v2365 = vsel %vm2364, %v2359, %v10
    %s2366 = scalar_lea.vmem [#allocation7], 584
    %v2367 = vpack.c.bf16 0.0, %v2365
    %2369 = vst [vmem:[%s2366] sm:$0xf] %v2367
    %s2370 = scalar_lea.vmem %s2, 588
    %v2371 = vld [vmem:[%s2370] sm:$0xf]
    %v2372 = vunpack.c.l.bf16 %v2371
    %v2373 = vunpack.c.h.bf16 %v2371
    %v2374 = vlaneseq
    %v2375 = vand.u32 %v2374, 127
    %vm2377 = vcmp.lt.s32.totalorder %v2375, 288
    %v2378 = vsel %vm2377, %v2372, %v10
    %s2379 = scalar_lea.vmem [#allocation7], 588
    %v2380 = vpack.c.bf16 0.0, %v2378
    %2382 = vst [vmem:[%s2379] sm:$0xf] %v2380
    %s2383 = scalar_lea.vmem %s2, 592
    %v2384 = vld [vmem:[%s2383] sm:$0xf]
    %v2385 = vunpack.c.l.bf16 %v2384
    %v2386 = vunpack.c.h.bf16 %v2384
    %v2387 = vlaneseq
    %v2388 = vand.u32 %v2387, 127
    %v2389 = vadd.s32 %v2388, 128
    %vm2390 = vcmp.lt.s32.totalorder %v2389, 288
    %v2391 = vsel %vm2390, %v2385, %v10
    %s2392 = scalar_lea.vmem [#allocation7], 592
    %v2393 = vpack.c.bf16 0.0, %v2391
    %2395 = vst [vmem:[%s2392] sm:$0xf] %v2393
    %s2396 = scalar_lea.vmem %s2, 596
    %s2398 = sor.u32 255, 127
    %s2399 = sand.u32 %s2398, 85
    %s2400 = sshrl.u32 %s2399, 1
    %s2401 = sor.u32 %s2399, %s2400
    %s2402 = sand.u32 51, %s2401
    %s2403 = sshrl.u32 %s2402, 2
    %s2404 = sor.u32 %s2402, %s2403
    %s2405 = sand.u32 15, %s2404
    %v2406 = vld [vmem:[%s2396] sm:%s2405]
    %v2407 = vunpack.c.l.bf16 %v2406
    %v2408 = vunpack.c.h.bf16 %v2406
    %v2409 = vlaneseq
    %v2410 = vand.u32 %v2409, 127
    %v2411 = vadd.s32 %v2410, 256
    %vm2412 = vcmp.lt.s32.totalorder %v2411, 288
    %v2413 = vsel %vm2412, %v2407, %v10
    %s2414 = scalar_lea.vmem [#allocation7], 596
    %v2415 = vpack.c.bf16 0.0, %v2413
    %2417 = vst [vmem:[%s2414] sm:$0xf] %v2415
    %s2418 = scalar_lea.vmem %s2, 600
    %v2419 = vld [vmem:[%s2418] sm:$0xf]
    %v2420 = vunpack.c.l.bf16 %v2419
    %v2421 = vunpack.c.h.bf16 %v2419
    %v2422 = vlaneseq
    %v2423 = vand.u32 %v2422, 127
    %vm2425 = vcmp.lt.s32.totalorder %v2423, 288
    %v2426 = vsel %vm2425, %v2420, %v10
    %s2427 = scalar_lea.vmem [#allocation7], 600
    %v2428 = vpack.c.bf16 0.0, %v2426
    %2430 = vst [vmem:[%s2427] sm:$0xf] %v2428
    %s2431 = scalar_lea.vmem %s2, 604
    %v2432 = vld [vmem:[%s2431] sm:$0xf]
    %v2433 = vunpack.c.l.bf16 %v2432
    %v2434 = vunpack.c.h.bf16 %v2432
    %v2435 = vlaneseq
    %v2436 = vand.u32 %v2435, 127
    %v2437 = vadd.s32 %v2436, 128
    %vm2438 = vcmp.lt.s32.totalorder %v2437, 288
    %v2439 = vsel %vm2438, %v2433, %v10
    %s2440 = scalar_lea.vmem [#allocation7], 604
    %v2441 = vpack.c.bf16 0.0, %v2439
    %2443 = vst [vmem:[%s2440] sm:$0xf] %v2441
    %s2444 = scalar_lea.vmem %s2, 608
    %s2446 = sor.u32 255, 127
    %s2447 = sand.u32 %s2446, 85
    %s2448 = sshrl.u32 %s2447, 1
    %s2449 = sor.u32 %s2447, %s2448
    %s2450 = sand.u32 51, %s2449
    %s2451 = sshrl.u32 %s2450, 2
    %s2452 = sor.u32 %s2450, %s2451
    %s2453 = sand.u32 15, %s2452
    %v2454 = vld [vmem:[%s2444] sm:%s2453]
    %v2455 = vunpack.c.l.bf16 %v2454
    %v2456 = vunpack.c.h.bf16 %v2454
    %v2457 = vlaneseq
    %v2458 = vand.u32 %v2457, 127
    %v2459 = vadd.s32 %v2458, 256
    %vm2460 = vcmp.lt.s32.totalorder %v2459, 288
    %v2461 = vsel %vm2460, %v2455, %v10
    %s2462 = scalar_lea.vmem [#allocation7], 608
    %v2463 = vpack.c.bf16 0.0, %v2461
    %2465 = vst [vmem:[%s2462] sm:$0xf] %v2463
    %s2466 = scalar_lea.vmem %s2, 612
    %v2467 = vld [vmem:[%s2466] sm:$0xf]
    %v2468 = vunpack.c.l.bf16 %v2467
    %v2469 = vunpack.c.h.bf16 %v2467
    %v2470 = vlaneseq
    %v2471 = vand.u32 %v2470, 127
    %vm2473 = vcmp.lt.s32.totalorder %v2471, 288
    %v2474 = vsel %vm2473, %v2468, %v10
    %s2475 = scalar_lea.vmem [#allocation7], 612
    %v2476 = vpack.c.bf16 0.0, %v2474
    %2478 = vst [vmem:[%s2475] sm:$0xf] %v2476
    %s2479 = scalar_lea.vmem %s2, 616
    %v2480 = vld [vmem:[%s2479] sm:$0xf]
    %v2481 = vunpack.c.l.bf16 %v2480
    %v2482 = vunpack.c.h.bf16 %v2480
    %v2483 = vlaneseq
    %v2484 = vand.u32 %v2483, 127
    %v2485 = vadd.s32 %v2484, 128
    %vm2486 = vcmp.lt.s32.totalorder %v2485, 288
    %v2487 = vsel %vm2486, %v2481, %v10
    %s2488 = scalar_lea.vmem [#allocation7], 616
    %v2489 = vpack.c.bf16 0.0, %v2487
    %2491 = vst [vmem:[%s2488] sm:$0xf] %v2489
    %s2492 = scalar_lea.vmem %s2, 620
    %s2494 = sor.u32 255, 127
    %s2495 = sand.u32 %s2494, 85
    %s2496 = sshrl.u32 %s2495, 1
    %s2497 = sor.u32 %s2495, %s2496
    %s2498 = sand.u32 51, %s2497
    %s2499 = sshrl.u32 %s2498, 2
    %s2500 = sor.u32 %s2498, %s2499
    %s2501 = sand.u32 15, %s2500
    %v2502 = vld [vmem:[%s2492] sm:%s2501]
    %v2503 = vunpack.c.l.bf16 %v2502
    %v2504 = vunpack.c.h.bf16 %v2502
    %v2505 = vlaneseq
    %v2506 = vand.u32 %v2505, 127
    %v2507 = vadd.s32 %v2506, 256
    %vm2508 = vcmp.lt.s32.totalorder %v2507, 288
    %v2509 = vsel %vm2508, %v2503, %v10
    %s2510 = scalar_lea.vmem [#allocation7], 620
    %v2511 = vpack.c.bf16 0.0, %v2509
    %2513 = vst [vmem:[%s2510] sm:$0xf] %v2511
    %s2514 = scalar_lea.vmem %s2, 624
    %v2515 = vld [vmem:[%s2514] sm:$0xf]
    %v2516 = vunpack.c.l.bf16 %v2515
    %v2517 = vunpack.c.h.bf16 %v2515
    %v2518 = vlaneseq
    %v2519 = vand.u32 %v2518, 127
    %vm2521 = vcmp.lt.s32.totalorder %v2519, 288
    %v2522 = vsel %vm2521, %v2516, %v10
    %s2523 = scalar_lea.vmem [#allocation7], 624
    %v2524 = vpack.c.bf16 0.0, %v2522
    %2526 = vst [vmem:[%s2523] sm:$0xf] %v2524
    %s2527 = scalar_lea.vmem %s2, 628
    %v2528 = vld [vmem:[%s2527] sm:$0xf]
    %v2529 = vunpack.c.l.bf16 %v2528
    %v2530 = vunpack.c.h.bf16 %v2528
    %v2531 = vlaneseq
    %v2532 = vand.u32 %v2531, 127
    %v2533 = vadd.s32 %v2532, 128
    %vm2534 = vcmp.lt.s32.totalorder %v2533, 288
    %v2535 = vsel %vm2534, %v2529, %v10
    %s2536 = scalar_lea.vmem [#allocation7], 628
    %v2537 = vpack.c.bf16 0.0, %v2535
    %2539 = vst [vmem:[%s2536] sm:$0xf] %v2537
    %s2540 = scalar_lea.vmem %s2, 632
    %s2542 = sor.u32 255, 127
    %s2543 = sand.u32 %s2542, 85
    %s2544 = sshrl.u32 %s2543, 1
    %s2545 = sor.u32 %s2543, %s2544
    %s2546 = sand.u32 51, %s2545
    %s2547 = sshrl.u32 %s2546, 2
    %s2548 = sor.u32 %s2546, %s2547
    %s2549 = sand.u32 15, %s2548
    %v2550 = vld [vmem:[%s2540] sm:%s2549]
    %v2551 = vunpack.c.l.bf16 %v2550
    %v2552 = vunpack.c.h.bf16 %v2550
    %v2553 = vlaneseq
    %v2554 = vand.u32 %v2553, 127
    %v2555 = vadd.s32 %v2554, 256
    %vm2556 = vcmp.lt.s32.totalorder %v2555, 288
    %v2557 = vsel %vm2556, %v2551, %v10
    %s2558 = scalar_lea.vmem [#allocation7], 632
    %v2559 = vpack.c.bf16 0.0, %v2557
    %2561 = vst [vmem:[%s2558] sm:$0xf] %v2559
    %s2562 = scalar_lea.vmem %s2, 636
    %v2563 = vld [vmem:[%s2562] sm:$0xf]
    %v2564 = vunpack.c.l.bf16 %v2563
    %v2565 = vunpack.c.h.bf16 %v2563
    %v2566 = vlaneseq
    %v2567 = vand.u32 %v2566, 127
    %vm2569 = vcmp.lt.s32.totalorder %v2567, 288
    %v2570 = vsel %vm2569, %v2564, %v10
    %s2571 = scalar_lea.vmem [#allocation7], 636
    %v2572 = vpack.c.bf16 0.0, %v2570
    %2574 = vst [vmem:[%s2571] sm:$0xf] %v2572
    %s2575 = scalar_lea.vmem %s2, 640
    %v2576 = vld [vmem:[%s2575] sm:$0xf]
    %v2577 = vunpack.c.l.bf16 %v2576
    %v2578 = vunpack.c.h.bf16 %v2576
    %v2579 = vlaneseq
    %v2580 = vand.u32 %v2579, 127
    %v2581 = vadd.s32 %v2580, 128
    %vm2582 = vcmp.lt.s32.totalorder %v2581, 288
    %v2583 = vsel %vm2582, %v2577, %v10
    %s2584 = scalar_lea.vmem [#allocation7], 640
    %v2585 = vpack.c.bf16 0.0, %v2583
    %2587 = vst [vmem:[%s2584] sm:$0xf] %v2585
    %s2588 = scalar_lea.vmem %s2, 644
    %s2590 = sor.u32 255, 127
    %s2591 = sand.u32 %s2590, 85
    %s2592 = sshrl.u32 %s2591, 1
    %s2593 = sor.u32 %s2591, %s2592
    %s2594 = sand.u32 51, %s2593
    %s2595 = sshrl.u32 %s2594, 2
    %s2596 = sor.u32 %s2594, %s2595
    %s2597 = sand.u32 15, %s2596
    %v2598 = vld [vmem:[%s2588] sm:%s2597]
    %v2599 = vunpack.c.l.bf16 %v2598
    %v2600 = vunpack.c.h.bf16 %v2598
    %v2601 = vlaneseq
    %v2602 = vand.u32 %v2601, 127
    %v2603 = vadd.s32 %v2602, 256
    %vm2604 = vcmp.lt.s32.totalorder %v2603, 288
    %v2605 = vsel %vm2604, %v2599, %v10
    %s2606 = scalar_lea.vmem [#allocation7], 644
    %v2607 = vpack.c.bf16 0.0, %v2605
    %2609 = vst [vmem:[%s2606] sm:$0xf] %v2607
    %s2610 = scalar_lea.vmem %s2, 648
    %v2611 = vld [vmem:[%s2610] sm:$0xf]
    %v2612 = vunpack.c.l.bf16 %v2611
    %v2613 = vunpack.c.h.bf16 %v2611
    %v2614 = vlaneseq
    %v2615 = vand.u32 %v2614, 127
    %vm2617 = vcmp.lt.s32.totalorder %v2615, 288
    %v2618 = vsel %vm2617, %v2612, %v10
    %s2619 = scalar_lea.vmem [#allocation7], 648
    %v2620 = vpack.c.bf16 0.0, %v2618
    %2622 = vst [vmem:[%s2619] sm:$0xf] %v2620
    %s2623 = scalar_lea.vmem %s2, 652
    %v2624 = vld [vmem:[%s2623] sm:$0xf]
    %v2625 = vunpack.c.l.bf16 %v2624
    %v2626 = vunpack.c.h.bf16 %v2624
    %v2627 = vlaneseq
    %v2628 = vand.u32 %v2627, 127
    %v2629 = vadd.s32 %v2628, 128
    %vm2630 = vcmp.lt.s32.totalorder %v2629, 288
    %v2631 = vsel %vm2630, %v2625, %v10
    %s2632 = scalar_lea.vmem [#allocation7], 652
    %v2633 = vpack.c.bf16 0.0, %v2631
    %2635 = vst [vmem:[%s2632] sm:$0xf] %v2633
    %s2636 = scalar_lea.vmem %s2, 656
    %s2638 = sor.u32 255, 127
    %s2639 = sand.u32 %s2638, 85
    %s2640 = sshrl.u32 %s2639, 1
    %s2641 = sor.u32 %s2639, %s2640
    %s2642 = sand.u32 51, %s2641
    %s2643 = sshrl.u32 %s2642, 2
    %s2644 = sor.u32 %s2642, %s2643
    %s2645 = sand.u32 15, %s2644
    %v2646 = vld [vmem:[%s2636] sm:%s2645]
    %v2647 = vunpack.c.l.bf16 %v2646
    %v2648 = vunpack.c.h.bf16 %v2646
    %v2649 = vlaneseq
    %v2650 = vand.u32 %v2649, 127
    %v2651 = vadd.s32 %v2650, 256
    %vm2652 = vcmp.lt.s32.totalorder %v2651, 288
    %v2653 = vsel %vm2652, %v2647, %v10
    %s2654 = scalar_lea.vmem [#allocation7], 656
    %v2655 = vpack.c.bf16 0.0, %v2653
    %2657 = vst [vmem:[%s2654] sm:$0xf] %v2655
    %s2658 = scalar_lea.vmem %s2, 660
    %v2659 = vld [vmem:[%s2658] sm:$0xf]
    %v2660 = vunpack.c.l.bf16 %v2659
    %v2661 = vunpack.c.h.bf16 %v2659
    %v2662 = vlaneseq
    %v2663 = vand.u32 %v2662, 127
    %vm2665 = vcmp.lt.s32.totalorder %v2663, 288
    %v2666 = vsel %vm2665, %v2660, %v10
    %s2667 = scalar_lea.vmem [#allocation7], 660
    %v2668 = vpack.c.bf16 0.0, %v2666
    %2670 = vst [vmem:[%s2667] sm:$0xf] %v2668
    %s2671 = scalar_lea.vmem %s2, 664
    %v2672 = vld [vmem:[%s2671] sm:$0xf]
    %v2673 = vunpack.c.l.bf16 %v2672
    %v2674 = vunpack.c.h.bf16 %v2672
    %v2675 = vlaneseq
    %v2676 = vand.u32 %v2675, 127
    %v2677 = vadd.s32 %v2676, 128
    %vm2678 = vcmp.lt.s32.totalorder %v2677, 288
    %v2679 = vsel %vm2678, %v2673, %v10
    %s2680 = scalar_lea.vmem [#allocation7], 664
    %v2681 = vpack.c.bf16 0.0, %v2679
    %2683 = vst [vmem:[%s2680] sm:$0xf] %v2681
    %s2684 = scalar_lea.vmem %s2, 668
    %s2686 = sor.u32 255, 127
    %s2687 = sand.u32 %s2686, 85
    %s2688 = sshrl.u32 %s2687, 1
    %s2689 = sor.u32 %s2687, %s2688
    %s2690 = sand.u32 51, %s2689
    %s2691 = sshrl.u32 %s2690, 2
    %s2692 = sor.u32 %s2690, %s2691
    %s2693 = sand.u32 15, %s2692
    %v2694 = vld [vmem:[%s2684] sm:%s2693]
    %v2695 = vunpack.c.l.bf16 %v2694
    %v2696 = vunpack.c.h.bf16 %v2694
    %v2697 = vlaneseq
    %v2698 = vand.u32 %v2697, 127
    %v2699 = vadd.s32 %v2698, 256
    %vm2700 = vcmp.lt.s32.totalorder %v2699, 288
    %v2701 = vsel %vm2700, %v2695, %v10
    %s2702 = scalar_lea.vmem [#allocation7], 668
    %v2703 = vpack.c.bf16 0.0, %v2701
    %2705 = vst [vmem:[%s2702] sm:$0xf] %v2703
    %s2706 = scalar_lea.vmem %s2, 672
    %v2707 = vld [vmem:[%s2706] sm:$0xf]
    %v2708 = vunpack.c.l.bf16 %v2707
    %v2709 = vunpack.c.h.bf16 %v2707
    %v2710 = vlaneseq
    %v2711 = vand.u32 %v2710, 127
    %vm2713 = vcmp.lt.s32.totalorder %v2711, 288
    %v2714 = vsel %vm2713, %v2708, %v10
    %s2715 = scalar_lea.vmem [#allocation7], 672
    %v2716 = vpack.c.bf16 0.0, %v2714
    %2718 = vst [vmem:[%s2715] sm:$0xf] %v2716
    %s2719 = scalar_lea.vmem %s2, 676
    %v2720 = vld [vmem:[%s2719] sm:$0xf]
    %v2721 = vunpack.c.l.bf16 %v2720
    %v2722 = vunpack.c.h.bf16 %v2720
    %v2723 = vlaneseq
    %v2724 = vand.u32 %v2723, 127
    %v2725 = vadd.s32 %v2724, 128
    %vm2726 = vcmp.lt.s32.totalorder %v2725, 288
    %v2727 = vsel %vm2726, %v2721, %v10
    %s2728 = scalar_lea.vmem [#allocation7], 676
    %v2729 = vpack.c.bf16 0.0, %v2727
    %2731 = vst [vmem:[%s2728] sm:$0xf] %v2729
    %s2732 = scalar_lea.vmem %s2, 680
    %s2734 = sor.u32 255, 127
    %s2735 = sand.u32 %s2734, 85
    %s2736 = sshrl.u32 %s2735, 1
    %s2737 = sor.u32 %s2735, %s2736
    %s2738 = sand.u32 51, %s2737
    %s2739 = sshrl.u32 %s2738, 2
    %s2740 = sor.u32 %s2738, %s2739
    %s2741 = sand.u32 15, %s2740
    %v2742 = vld [vmem:[%s2732] sm:%s2741]
    %v2743 = vunpack.c.l.bf16 %v2742
    %v2744 = vunpack.c.h.bf16 %v2742
    %v2745 = vlaneseq
    %v2746 = vand.u32 %v2745, 127
    %v2747 = vadd.s32 %v2746, 256
    %vm2748 = vcmp.lt.s32.totalorder %v2747, 288
    %v2749 = vsel %vm2748, %v2743, %v10
    %s2750 = scalar_lea.vmem [#allocation7], 680
    %v2751 = vpack.c.bf16 0.0, %v2749
    %2753 = vst [vmem:[%s2750] sm:$0xf] %v2751
    %s2754 = scalar_lea.vmem %s2, 684
    %v2755 = vld [vmem:[%s2754] sm:$0xf]
    %v2756 = vunpack.c.l.bf16 %v2755
    %v2757 = vunpack.c.h.bf16 %v2755
    %v2758 = vlaneseq
    %v2759 = vand.u32 %v2758, 127
    %vm2761 = vcmp.lt.s32.totalorder %v2759, 288
    %v2762 = vsel %vm2761, %v2756, %v10
    %s2763 = scalar_lea.vmem [#allocation7], 684
    %v2764 = vpack.c.bf16 0.0, %v2762
    %2766 = vst [vmem:[%s2763] sm:$0xf] %v2764
    %s2767 = scalar_lea.vmem %s2, 688
    %v2768 = vld [vmem:[%s2767] sm:$0xf]
    %v2769 = vunpack.c.l.bf16 %v2768
    %v2770 = vunpack.c.h.bf16 %v2768
    %v2771 = vlaneseq
    %v2772 = vand.u32 %v2771, 127
    %v2773 = vadd.s32 %v2772, 128
    %vm2774 = vcmp.lt.s32.totalorder %v2773, 288
    %v2775 = vsel %vm2774, %v2769, %v10
    %s2776 = scalar_lea.vmem [#allocation7], 688
    %v2777 = vpack.c.bf16 0.0, %v2775
    %2779 = vst [vmem:[%s2776] sm:$0xf] %v2777
    %s2780 = scalar_lea.vmem %s2, 692
    %s2782 = sor.u32 255, 127
    %s2783 = sand.u32 %s2782, 85
    %s2784 = sshrl.u32 %s2783, 1
    %s2785 = sor.u32 %s2783, %s2784
    %s2786 = sand.u32 51, %s2785
    %s2787 = sshrl.u32 %s2786, 2
    %s2788 = sor.u32 %s2786, %s2787
    %s2789 = sand.u32 15, %s2788
    %v2790 = vld [vmem:[%s2780] sm:%s2789]
    %v2791 = vunpack.c.l.bf16 %v2790
    %v2792 = vunpack.c.h.bf16 %v2790
    %v2793 = vlaneseq
    %v2794 = vand.u32 %v2793, 127
    %v2795 = vadd.s32 %v2794, 256
    %vm2796 = vcmp.lt.s32.totalorder %v2795, 288
    %v2797 = vsel %vm2796, %v2791, %v10
    %s2798 = scalar_lea.vmem [#allocation7], 692
    %v2799 = vpack.c.bf16 0.0, %v2797
    %2801 = vst [vmem:[%s2798] sm:$0xf] %v2799
    %s2802 = scalar_lea.vmem %s2, 696
    %v2803 = vld [vmem:[%s2802] sm:$0xf]
    %v2804 = vunpack.c.l.bf16 %v2803
    %v2805 = vunpack.c.h.bf16 %v2803
    %v2806 = vlaneseq
    %v2807 = vand.u32 %v2806, 127
    %vm2809 = vcmp.lt.s32.totalorder %v2807, 288
    %v2810 = vsel %vm2809, %v2804, %v10
    %s2811 = scalar_lea.vmem [#allocation7], 696
    %v2812 = vpack.c.bf16 0.0, %v2810
    %2814 = vst [vmem:[%s2811] sm:$0xf] %v2812
    %s2815 = scalar_lea.vmem %s2, 700
    %v2816 = vld [vmem:[%s2815] sm:$0xf]
    %v2817 = vunpack.c.l.bf16 %v2816
    %v2818 = vunpack.c.h.bf16 %v2816
    %v2819 = vlaneseq
    %v2820 = vand.u32 %v2819, 127
    %v2821 = vadd.s32 %v2820, 128
    %vm2822 = vcmp.lt.s32.totalorder %v2821, 288
    %v2823 = vsel %vm2822, %v2817, %v10
    %s2824 = scalar_lea.vmem [#allocation7], 700
    %v2825 = vpack.c.bf16 0.0, %v2823
    %2827 = vst [vmem:[%s2824] sm:$0xf] %v2825
    %s2828 = scalar_lea.vmem %s2, 704
    %s2830 = sor.u32 255, 127
    %s2831 = sand.u32 %s2830, 85
    %s2832 = sshrl.u32 %s2831, 1
    %s2833 = sor.u32 %s2831, %s2832
    %s2834 = sand.u32 51, %s2833
    %s2835 = sshrl.u32 %s2834, 2
    %s2836 = sor.u32 %s2834, %s2835
    %s2837 = sand.u32 15, %s2836
    %v2838 = vld [vmem:[%s2828] sm:%s2837]
    %v2839 = vunpack.c.l.bf16 %v2838
    %v2840 = vunpack.c.h.bf16 %v2838
    %v2841 = vlaneseq
    %v2842 = vand.u32 %v2841, 127
    %v2843 = vadd.s32 %v2842, 256
    %vm2844 = vcmp.lt.s32.totalorder %v2843, 288
    %v2845 = vsel %vm2844, %v2839, %v10
    %s2846 = scalar_lea.vmem [#allocation7], 704
    %v2847 = vpack.c.bf16 0.0, %v2845
    %2849 = vst [vmem:[%s2846] sm:$0xf] %v2847
    %s2850 = scalar_lea.vmem %s2, 708
    %v2851 = vld [vmem:[%s2850] sm:$0xf]
    %v2852 = vunpack.c.l.bf16 %v2851
    %v2853 = vunpack.c.h.bf16 %v2851
    %v2854 = vlaneseq
    %v2855 = vand.u32 %v2854, 127
    %vm2857 = vcmp.lt.s32.totalorder %v2855, 288
    %v2858 = vsel %vm2857, %v2852, %v10
    %s2859 = scalar_lea.vmem [#allocation7], 708
    %v2860 = vpack.c.bf16 0.0, %v2858
    %2862 = vst [vmem:[%s2859] sm:$0xf] %v2860
    %s2863 = scalar_lea.vmem %s2, 712
    %v2864 = vld [vmem:[%s2863] sm:$0xf]
    %v2865 = vunpack.c.l.bf16 %v2864
    %v2866 = vunpack.c.h.bf16 %v2864
    %v2867 = vlaneseq
    %v2868 = vand.u32 %v2867, 127
    %v2869 = vadd.s32 %v2868, 128
    %vm2870 = vcmp.lt.s32.totalorder %v2869, 288
    %v2871 = vsel %vm2870, %v2865, %v10
    %s2872 = scalar_lea.vmem [#allocation7], 712
    %v2873 = vpack.c.bf16 0.0, %v2871
    %2875 = vst [vmem:[%s2872] sm:$0xf] %v2873
    %s2876 = scalar_lea.vmem %s2, 716
    %s2878 = sor.u32 255, 127
    %s2879 = sand.u32 %s2878, 85
    %s2880 = sshrl.u32 %s2879, 1
    %s2881 = sor.u32 %s2879, %s2880
    %s2882 = sand.u32 51, %s2881
    %s2883 = sshrl.u32 %s2882, 2
    %s2884 = sor.u32 %s2882, %s2883
    %s2885 = sand.u32 15, %s2884
    %v2886 = vld [vmem:[%s2876] sm:%s2885]
    %v2887 = vunpack.c.l.bf16 %v2886
    %v2888 = vunpack.c.h.bf16 %v2886
    %v2889 = vlaneseq
    %v2890 = vand.u32 %v2889, 127
    %v2891 = vadd.s32 %v2890, 256
    %vm2892 = vcmp.lt.s32.totalorder %v2891, 288
    %v2893 = vsel %vm2892, %v2887, %v10
    %s2894 = scalar_lea.vmem [#allocation7], 716
    %v2895 = vpack.c.bf16 0.0, %v2893
    %2897 = vst [vmem:[%s2894] sm:$0xf] %v2895
    %s2898 = scalar_lea.vmem %s2, 720
    %v2899 = vld [vmem:[%s2898] sm:$0xf]
    %v2900 = vunpack.c.l.bf16 %v2899
    %v2901 = vunpack.c.h.bf16 %v2899
    %v2902 = vlaneseq
    %v2903 = vand.u32 %v2902, 127
    %vm2905 = vcmp.lt.s32.totalorder %v2903, 288
    %v2906 = vsel %vm2905, %v2900, %v10
    %s2907 = scalar_lea.vmem [#allocation7], 720
    %v2908 = vpack.c.bf16 0.0, %v2906
    %2910 = vst [vmem:[%s2907] sm:$0xf] %v2908
    %s2911 = scalar_lea.vmem %s2, 724
    %v2912 = vld [vmem:[%s2911] sm:$0xf]
    %v2913 = vunpack.c.l.bf16 %v2912
    %v2914 = vunpack.c.h.bf16 %v2912
    %v2915 = vlaneseq
    %v2916 = vand.u32 %v2915, 127
    %v2917 = vadd.s32 %v2916, 128
    %vm2918 = vcmp.lt.s32.totalorder %v2917, 288
    %v2919 = vsel %vm2918, %v2913, %v10
    %s2920 = scalar_lea.vmem [#allocation7], 724
    %v2921 = vpack.c.bf16 0.0, %v2919
    %2923 = vst [vmem:[%s2920] sm:$0xf] %v2921
    %s2924 = scalar_lea.vmem %s2, 728
    %s2926 = sor.u32 255, 127
    %s2927 = sand.u32 %s2926, 85
    %s2928 = sshrl.u32 %s2927, 1
    %s2929 = sor.u32 %s2927, %s2928
    %s2930 = sand.u32 51, %s2929
    %s2931 = sshrl.u32 %s2930, 2
    %s2932 = sor.u32 %s2930, %s2931
    %s2933 = sand.u32 15, %s2932
    %v2934 = vld [vmem:[%s2924] sm:%s2933]
    %v2935 = vunpack.c.l.bf16 %v2934
    %v2936 = vunpack.c.h.bf16 %v2934
    %v2937 = vlaneseq
    %v2938 = vand.u32 %v2937, 127
    %v2939 = vadd.s32 %v2938, 256
    %vm2940 = vcmp.lt.s32.totalorder %v2939, 288
    %v2941 = vsel %vm2940, %v2935, %v10
    %s2942 = scalar_lea.vmem [#allocation7], 728
    %v2943 = vpack.c.bf16 0.0, %v2941
    %2945 = vst [vmem:[%s2942] sm:$0xf] %v2943
    %s2946 = scalar_lea.vmem %s2, 732
    %v2947 = vld [vmem:[%s2946] sm:$0xf]
    %v2948 = vunpack.c.l.bf16 %v2947
    %v2949 = vunpack.c.h.bf16 %v2947
    %v2950 = vlaneseq
    %v2951 = vand.u32 %v2950, 127
    %vm2953 = vcmp.lt.s32.totalorder %v2951, 288
    %v2954 = vsel %vm2953, %v2948, %v10
    %s2955 = scalar_lea.vmem [#allocation7], 732
    %v2956 = vpack.c.bf16 0.0, %v2954
    %2958 = vst [vmem:[%s2955] sm:$0xf] %v2956
    %s2959 = scalar_lea.vmem %s2, 736
    %v2960 = vld [vmem:[%s2959] sm:$0xf]
    %v2961 = vunpack.c.l.bf16 %v2960
    %v2962 = vunpack.c.h.bf16 %v2960
    %v2963 = vlaneseq
    %v2964 = vand.u32 %v2963, 127
    %v2965 = vadd.s32 %v2964, 128
    %vm2966 = vcmp.lt.s32.totalorder %v2965, 288
    %v2967 = vsel %vm2966, %v2961, %v10
    %s2968 = scalar_lea.vmem [#allocation7], 736
    %v2969 = vpack.c.bf16 0.0, %v2967
    %2971 = vst [vmem:[%s2968] sm:$0xf] %v2969
    %s2972 = scalar_lea.vmem %s2, 740
    %s2974 = sor.u32 255, 127
    %s2975 = sand.u32 %s2974, 85
    %s2976 = sshrl.u32 %s2975, 1
    %s2977 = sor.u32 %s2975, %s2976
    %s2978 = sand.u32 51, %s2977
    %s2979 = sshrl.u32 %s2978, 2
    %s2980 = sor.u32 %s2978, %s2979
    %s2981 = sand.u32 15, %s2980
    %v2982 = vld [vmem:[%s2972] sm:%s2981]
    %v2983 = vunpack.c.l.bf16 %v2982
    %v2984 = vunpack.c.h.bf16 %v2982
    %v2985 = vlaneseq
    %v2986 = vand.u32 %v2985, 127
    %v2987 = vadd.s32 %v2986, 256
    %vm2988 = vcmp.lt.s32.totalorder %v2987, 288
    %v2989 = vsel %vm2988, %v2983, %v10
    %s2990 = scalar_lea.vmem [#allocation7], 740
    %v2991 = vpack.c.bf16 0.0, %v2989
    %2993 = vst [vmem:[%s2990] sm:$0xf] %v2991
    %s2994 = scalar_lea.vmem %s2, 744
    %v2995 = vld [vmem:[%s2994] sm:$0xf]
    %v2996 = vunpack.c.l.bf16 %v2995
    %v2997 = vunpack.c.h.bf16 %v2995
    %v2998 = vlaneseq
    %v2999 = vand.u32 %v2998, 127
    %vm3001 = vcmp.lt.s32.totalorder %v2999, 288
    %v3002 = vsel %vm3001, %v2996, %v10
    %s3003 = scalar_lea.vmem [#allocation7], 744
    %v3004 = vpack.c.bf16 0.0, %v3002
    %3006 = vst [vmem:[%s3003] sm:$0xf] %v3004
    %s3007 = scalar_lea.vmem %s2, 748
    %v3008 = vld [vmem:[%s3007] sm:$0xf]
    %v3009 = vunpack.c.l.bf16 %v3008
    %v3010 = vunpack.c.h.bf16 %v3008
    %v3011 = vlaneseq
    %v3012 = vand.u32 %v3011, 127
    %v3013 = vadd.s32 %v3012, 128
    %vm3014 = vcmp.lt.s32.totalorder %v3013, 288
    %v3015 = vsel %vm3014, %v3009, %v10
    %s3016 = scalar_lea.vmem [#allocation7], 748
    %v3017 = vpack.c.bf16 0.0, %v3015
    %3019 = vst [vmem:[%s3016] sm:$0xf] %v3017
    %s3020 = scalar_lea.vmem %s2, 752
    %s3022 = sor.u32 255, 127
    %s3023 = sand.u32 %s3022, 85
    %s3024 = sshrl.u32 %s3023, 1
    %s3025 = sor.u32 %s3023, %s3024
    %s3026 = sand.u32 51, %s3025
    %s3027 = sshrl.u32 %s3026, 2
    %s3028 = sor.u32 %s3026, %s3027
    %s3029 = sand.u32 15, %s3028
    %v3030 = vld [vmem:[%s3020] sm:%s3029]
    %v3031 = vunpack.c.l.bf16 %v3030
    %v3032 = vunpack.c.h.bf16 %v3030
    %v3033 = vlaneseq
    %v3034 = vand.u32 %v3033, 127
    %v3035 = vadd.s32 %v3034, 256
    %vm3036 = vcmp.lt.s32.totalorder %v3035, 288
    %v3037 = vsel %vm3036, %v3031, %v10
    %s3038 = scalar_lea.vmem [#allocation7], 752
    %v3039 = vpack.c.bf16 0.0, %v3037
    %3041 = vst [vmem:[%s3038] sm:$0xf] %v3039
    %s3042 = scalar_lea.vmem %s2, 756
    %v3043 = vld [vmem:[%s3042] sm:$0xf]
    %v3044 = vunpack.c.l.bf16 %v3043
    %v3045 = vunpack.c.h.bf16 %v3043
    %v3046 = vlaneseq
    %v3047 = vand.u32 %v3046, 127
    %vm3049 = vcmp.lt.s32.totalorder %v3047, 288
    %v3050 = vsel %vm3049, %v3044, %v10
    %s3051 = scalar_lea.vmem [#allocation7], 756
    %v3052 = vpack.c.bf16 0.0, %v3050
    %3054 = vst [vmem:[%s3051] sm:$0xf] %v3052
    %s3055 = scalar_lea.vmem %s2, 760
    %v3056 = vld [vmem:[%s3055] sm:$0xf]
    %v3057 = vunpack.c.l.bf16 %v3056
    %v3058 = vunpack.c.h.bf16 %v3056
    %v3059 = vlaneseq
    %v3060 = vand.u32 %v3059, 127
    %v3061 = vadd.s32 %v3060, 128
    %vm3062 = vcmp.lt.s32.totalorder %v3061, 288
    %v3063 = vsel %vm3062, %v3057, %v10
    %s3064 = scalar_lea.vmem [#allocation7], 760
    %v3065 = vpack.c.bf16 0.0, %v3063
    %3067 = vst [vmem:[%s3064] sm:$0xf] %v3065
    %s3068 = scalar_lea.vmem %s2, 764
    %s3070 = sor.u32 255, 127
    %s3071 = sand.u32 %s3070, 85
    %s3072 = sshrl.u32 %s3071, 1
    %s3073 = sor.u32 %s3071, %s3072
    %s3074 = sand.u32 51, %s3073
    %s3075 = sshrl.u32 %s3074, 2
    %s3076 = sor.u32 %s3074, %s3075
    %s3077 = sand.u32 15, %s3076
    %v3078 = vld [vmem:[%s3068] sm:%s3077]
    %v3079 = vunpack.c.l.bf16 %v3078
    %v3080 = vunpack.c.h.bf16 %v3078
    %v3081 = vlaneseq
    %v3082 = vand.u32 %v3081, 127
    %v3083 = vadd.s32 %v3082, 256
    %vm3084 = vcmp.lt.s32.totalorder %v3083, 288
    %v3085 = vsel %vm3084, %v3079, %v10
    %s3086 = scalar_lea.vmem [#allocation7], 764
    %v3087 = vpack.c.bf16 0.0, %v3085
    %3089 = vst [vmem:[%s3086] sm:$0xf] %v3087
    %v3091 = vld [vmem:[#allocation7] sm:$0xff]
    %v3092 = vld [vmem:[#allocation7 + $0x8] sm:$0xf]
    %v3093 = vld [vmem:[#allocation7 + $0xc] sm:$0xff]
    %v3094 = vld [vmem:[#allocation7 + $0x14] sm:$0xf]
    %v3095 = vld [vmem:[#allocation7 + $0x18] sm:$0xff]
    %v3096 = vld [vmem:[#allocation7 + $0x20] sm:$0xf]
    %v3097 = vld [vmem:[#allocation7 + $0x24] sm:$0xff]
    %v3098 = vld [vmem:[#allocation7 + $0x2c] sm:$0xf]
    %v3099 = vld [vmem:[#allocation7 + $0x30] sm:$0xff]
    %v3100 = vld [vmem:[#allocation7 + $0x38] sm:$0xf]
    %v3101 = vld [vmem:[#allocation7 + $0x3c] sm:$0xff]
    %v3102 = vld [vmem:[#allocation7 + $0x44] sm:$0xf]
    %v3103 = vld [vmem:[#allocation7 + $0x48] sm:$0xff]
    %v3104 = vld [vmem:[#allocation7 + $0x50] sm:$0xf]
    %v3105 = vld [vmem:[#allocation7 + $0x54] sm:$0xff]
    %v3106 = vld [vmem:[#allocation7 + $0x5c] sm:$0xf]
    %v3107 = vld [vmem:[#allocation7 + $0x60] sm:$0xff]
    %v3108 = vld [vmem:[#allocation7 + $0x68] sm:$0xf]
    %v3109 = vld [vmem:[#allocation7 + $0x6c] sm:$0xff]
    %v3110 = vld [vmem:[#allocation7 + $0x74] sm:$0xf]
    %v3111 = vld [vmem:[#allocation7 + $0x78] sm:$0xff]
    %v3112 = vld [vmem:[#allocation7 + $0x80] sm:$0xf]
    %v3113 = vld [vmem:[#allocation7 + $0x84] sm:$0xff]
    %v3114 = vld [vmem:[#allocation7 + $0x8c] sm:$0xf]
    %v3115 = vld [vmem:[#allocation7 + $0x90] sm:$0xff]
    %v3116 = vld [vmem:[#allocation7 + $0x98] sm:$0xf]
    %v3117 = vld [vmem:[#allocation7 + $0x9c] sm:$0xff]
    %v3118 = vld [vmem:[#allocation7 + $0xa4] sm:$0xf]
    %v3119 = vld [vmem:[#allocation7 + $0xa8] sm:$0xff]
    %v3120 = vld [vmem:[#allocation7 + $0xb0] sm:$0xf]
    %v3121 = vld [vmem:[#allocation7 + $0xb4] sm:$0xff]
    %v3122 = vld [vmem:[#allocation7 + $0xbc] sm:$0xf]
    %v3123 = vld [vmem:[#allocation7 + $0xc0] sm:$0xff]
    %v3124 = vld [vmem:[#allocation7 + $0xc8] sm:$0xf]
    %v3125 = vld [vmem:[#allocation7 + $0xcc] sm:$0xff]
    %v3126 = vld [vmem:[#allocation7 + $0xd4] sm:$0xf]
    %v3127 = vld [vmem:[#allocation7 + $0xd8] sm:$0xff]
    %v3128 = vld [vmem:[#allocation7 + $0xe0] sm:$0xf]
    %v3129 = vld [vmem:[#allocation7 + $0xe4] sm:$0xff]
    %v3130 = vld [vmem:[#allocation7 + $0xec] sm:$0xf]
    %v3131 = vld [vmem:[#allocation7 + $0xf0] sm:$0xff]
    %v3132 = vld [vmem:[#allocation7 + $0xf8] sm:$0xf]
    %v3133 = vld [vmem:[#allocation7 + $0xfc] sm:$0xff]
    %v3134 = vld [vmem:[#allocation7 + $0x104] sm:$0xf]
    %v3135 = vld [vmem:[#allocation7 + $0x108] sm:$0xff]
    %v3136 = vld [vmem:[#allocation7 + $0x110] sm:$0xf]
    %v3137 = vld [vmem:[#allocation7 + $0x114] sm:$0xff]
    %v3138 = vld [vmem:[#allocation7 + $0x11c] sm:$0xf]
    %v3139 = vld [vmem:[#allocation7 + $0x120] sm:$0xff]
    %v3140 = vld [vmem:[#allocation7 + $0x128] sm:$0xf]
    %v3141 = vld [vmem:[#allocation7 + $0x12c] sm:$0xff]
    %v3142 = vld [vmem:[#allocation7 + $0x134] sm:$0xf]
    %v3143 = vld [vmem:[#allocation7 + $0x138] sm:$0xff]
    %v3144 = vld [vmem:[#allocation7 + $0x140] sm:$0xf]
    %v3145 = vld [vmem:[#allocation7 + $0x144] sm:$0xff]
    %v3146 = vld [vmem:[#allocation7 + $0x14c] sm:$0xf]
    %v3147 = vld [vmem:[#allocation7 + $0x150] sm:$0xff]
    %v3148 = vld [vmem:[#allocation7 + $0x158] sm:$0xf]
    %v3149 = vld [vmem:[#allocation7 + $0x15c] sm:$0xff]
    %v3150 = vld [vmem:[#allocation7 + $0x164] sm:$0xf]
    %v3151 = vld [vmem:[#allocation7 + $0x168] sm:$0xff]
    %v3152 = vld [vmem:[#allocation7 + $0x170] sm:$0xf]
    %v3153 = vld [vmem:[#allocation7 + $0x174] sm:$0xff]
    %v3154 = vld [vmem:[#allocation7 + $0x17c] sm:$0xf]
    %v3155 = vld [vmem:[#allocation7 + $0x180] sm:$0xff]
    %v3156 = vld [vmem:[#allocation7 + $0x188] sm:$0xf]
    %v3157 = vld [vmem:[#allocation7 + $0x18c] sm:$0xff]
    %v3158 = vld [vmem:[#allocation7 + $0x194] sm:$0xf]
    %v3159 = vld [vmem:[#allocation7 + $0x198] sm:$0xff]
    %v3160 = vld [vmem:[#allocation7 + $0x1a0] sm:$0xf]
    %v3161 = vld [vmem:[#allocation7 + $0x1a4] sm:$0xff]
    %v3162 = vld [vmem:[#allocation7 + $0x1ac] sm:$0xf]
    %v3163 = vld [vmem:[#allocation7 + $0x1b0] sm:$0xff]
    %v3164 = vld [vmem:[#allocation7 + $0x1b8] sm:$0xf]
    %v3165 = vld [vmem:[#allocation7 + $0x1bc] sm:$0xff]
    %v3166 = vld [vmem:[#allocation7 + $0x1c4] sm:$0xf]
    %v3167 = vld [vmem:[#allocation7 + $0x1c8] sm:$0xff]
    %v3168 = vld [vmem:[#allocation7 + $0x1d0] sm:$0xf]
    %v3169 = vld [vmem:[#allocation7 + $0x1d4] sm:$0xff]
    %v3170 = vld [vmem:[#allocation7 + $0x1dc] sm:$0xf]
    %v3171 = vld [vmem:[#allocation7 + $0x1e0] sm:$0xff]
    %v3172 = vld [vmem:[#allocation7 + $0x1e8] sm:$0xf]
    %v3173 = vld [vmem:[#allocation7 + $0x1ec] sm:$0xff]
    %v3174 = vld [vmem:[#allocation7 + $0x1f4] sm:$0xf]
    %v3175 = vld [vmem:[#allocation7 + $0x1f8] sm:$0xff]
    %v3176 = vld [vmem:[#allocation7 + $0x200] sm:$0xf]
    %v3177 = vld [vmem:[#allocation7 + $0x204] sm:$0xff]
    %v3178 = vld [vmem:[#allocation7 + $0x20c] sm:$0xf]
    %v3179 = vld [vmem:[#allocation7 + $0x210] sm:$0xff]
    %v3180 = vld [vmem:[#allocation7 + $0x218] sm:$0xf]
    %v3181 = vld [vmem:[#allocation7 + $0x21c] sm:$0xff]
    %v3182 = vld [vmem:[#allocation7 + $0x224] sm:$0xf]
    %v3183 = vld [vmem:[#allocation7 + $0x228] sm:$0xff]
    %v3184 = vld [vmem:[#allocation7 + $0x230] sm:$0xf]
    %v3185 = vld [vmem:[#allocation7 + $0x234] sm:$0xff]
    %v3186 = vld [vmem:[#allocation7 + $0x23c] sm:$0xf]
    %v3187 = vld [vmem:[#allocation7 + $0x240] sm:$0xff]
    %v3188 = vld [vmem:[#allocation7 + $0x248] sm:$0xf]
    %v3189 = vld [vmem:[#allocation7 + $0x24c] sm:$0xff]
    %v3190 = vld [vmem:[#allocation7 + $0x254] sm:$0xf]
    %v3191 = vld [vmem:[#allocation7 + $0x258] sm:$0xff]
    %v3192 = vld [vmem:[#allocation7 + $0x260] sm:$0xf]
    %v3193 = vld [vmem:[#allocation7 + $0x264] sm:$0xff]
    %v3194 = vld [vmem:[#allocation7 + $0x26c] sm:$0xf]
    %v3195 = vld [vmem:[#allocation7 + $0x270] sm:$0xff]
    %v3196 = vld [vmem:[#allocation7 + $0x278] sm:$0xf]
    %v3197 = vld [vmem:[#allocation7 + $0x27c] sm:$0xff]
    %v3198 = vld [vmem:[#allocation7 + $0x284] sm:$0xf]
    %v3199 = vld [vmem:[#allocation7 + $0x288] sm:$0xff]
    %v3200 = vld [vmem:[#allocation7 + $0x290] sm:$0xf]
    %v3201 = vld [vmem:[#allocation7 + $0x294] sm:$0xff]
    %v3202 = vld [vmem:[#allocation7 + $0x29c] sm:$0xf]
    %v3203 = vld [vmem:[#allocation7 + $0x2a0] sm:$0xff]
    %v3204 = vld [vmem:[#allocation7 + $0x2a8] sm:$0xf]
    %v3205 = vld [vmem:[#allocation7 + $0x2ac] sm:$0xff]
    %v3206 = vld [vmem:[#allocation7 + $0x2b4] sm:$0xf]
    %v3207 = vld [vmem:[#allocation7 + $0x2b8] sm:$0xff]
    %v3208 = vld [vmem:[#allocation7 + $0x2c0] sm:$0xf]
    %v3209 = vld [vmem:[#allocation7 + $0x2c4] sm:$0xff]
    %v3210 = vld [vmem:[#allocation7 + $0x2cc] sm:$0xf]
    %v3211 = vld [vmem:[#allocation7 + $0x2d0] sm:$0xff]
    %v3212 = vld [vmem:[#allocation7 + $0x2d8] sm:$0xf]
    %v3213 = vld [vmem:[#allocation7 + $0x2dc] sm:$0xff]
    %v3214 = vld [vmem:[#allocation7 + $0x2e4] sm:$0xf]
    %v3215 = vld [vmem:[#allocation7 + $0x2e8] sm:$0xff]
    %v3216 = vld [vmem:[#allocation7 + $0x2f0] sm:$0xf]
    %v3217 = vld [vmem:[#allocation7 + $0x2f4] sm:$0xff]
    %v3218 = vld [vmem:[#allocation7 + $0x2fc] sm:$0xf]
    %v3219 = vld [vmem:[%s0] sm:$0xf]
    %v3220 = vld [vmem:[%s0 + $0x4] sm:$0xf]
    %v3221 = vld [vmem:[%s0 + $0x8] sm:$0xf]
    %v3222 = vld [vmem:[%s0 + $0xc] sm:$0xf]
    %v3223 = vld [vmem:[%s0 + $0x10] sm:$0xf]
    %v3224 = vld [vmem:[%s0 + $0x14] sm:$0xf]
    %v3225 = vld [vmem:[%s0 + $0x18] sm:$0xf]
    %v3226 = vld [vmem:[%s0 + $0x1c] sm:$0xf]
    %v3227 = vld [vmem:[%s0 + $0x20] sm:$0xf]
    %v3228 = vld [vmem:[%s0 + $0x24] sm:$0xf]
    %v3229 = vld [vmem:[%s0 + $0x28] sm:$0xf]
    %v3230 = vld [vmem:[%s0 + $0x2c] sm:$0xf]
    %v3231 = vld [vmem:[%s0 + $0x30] sm:$0xf]
    %v3232 = vld [vmem:[%s0 + $0x34] sm:$0xf]
    %v3233 = vld [vmem:[%s0 + $0x38] sm:$0xf]
    %v3234 = vld [vmem:[%s0 + $0x3c] sm:$0xf]
    %v3235 = vld [vmem:[%s0 + $0x40] sm:$0xf]
    %v3236 = vld [vmem:[%s0 + $0x44] sm:$0xf]
    %v3237 = vld [vmem:[%s0 + $0x48] sm:$0xf]
    %v3238 = vld [vmem:[%s0 + $0x4c] sm:$0xf]
    %v3239 = vld [vmem:[%s0 + $0x50] sm:$0xf]
    %v3240 = vld [vmem:[%s0 + $0x54] sm:$0xf]
    %v3241 = vld [vmem:[%s0 + $0x58] sm:$0xf]
    %v3242 = vld [vmem:[%s0 + $0x5c] sm:$0xf]
    %v3243 = vld [vmem:[%s0 + $0x60] sm:$0xf]
    %v3244 = vld [vmem:[%s0 + $0x64] sm:$0xf]
    %v3245 = vld [vmem:[%s0 + $0x68] sm:$0xf]
    %v3246 = vld [vmem:[%s0 + $0x6c] sm:$0xf]
    %v3247 = vld [vmem:[%s0 + $0x70] sm:$0xf]
    %v3248 = vld [vmem:[%s0 + $0x74] sm:$0xf]
    %v3249 = vld [vmem:[%s0 + $0x78] sm:$0xf]
    %v3250 = vld [vmem:[%s0 + $0x7c] sm:$0xf]
    %v3251 = vld [vmem:[%s0 + $0x80] sm:$0xf]
    %v3252 = vld [vmem:[%s0 + $0x84] sm:$0xf]
    %v3253 = vld [vmem:[%s0 + $0x88] sm:$0xf]
    %v3254 = vld [vmem:[%s0 + $0x8c] sm:$0xf]
    %v3255 = vld [vmem:[%s0 + $0x90] sm:$0xf]
    %v3256 = vld [vmem:[%s0 + $0x94] sm:$0xf]
    %v3257 = vld [vmem:[%s0 + $0x98] sm:$0xf]
    %v3258 = vld [vmem:[%s0 + $0x9c] sm:$0xf]
    %v3259 = vld [vmem:[%s0 + $0xa0] sm:$0xf]
    %v3260 = vld [vmem:[%s0 + $0xa4] sm:$0xf]
    %v3261 = vld [vmem:[%s0 + $0xa8] sm:$0xf]
    %v3262 = vld [vmem:[%s0 + $0xac] sm:$0xf]
    %v3263 = vld [vmem:[%s0 + $0xb0] sm:$0xf]
    %v3264 = vld [vmem:[%s0 + $0xb4] sm:$0xf]
    %v3265 = vld [vmem:[%s0 + $0xb8] sm:$0xf]
    %v3266 = vld [vmem:[%s0 + $0xbc] sm:$0xf]
    %v3267 = vld [vmem:[%s1] sm:$0x1]
    %v3269 = vlaneseq
    %v3270 = vshrl.u32 %v3269, 7
    %v3271 = vsub.s32 0, %v3270
    %v3272 = vrot.slane %v3267, %v3271
    %v3402 = vunpack.c.l.b16 %v3091
    %v3403 = vunpack.c.h.b16 %v3091
    %v3404 = vunpack.c.l.b16 %v3092
    %v3405 = vunpack.c.l.b16 %v3093
    %v3406 = vunpack.c.h.b16 %v3093
    %v3407 = vunpack.c.l.b16 %v3094
    %v3408 = vunpack.c.l.b16 %v3095
    %v3409 = vunpack.c.h.b16 %v3095
    %v3410 = vunpack.c.l.b16 %v3096
    %v3411 = vunpack.c.l.b16 %v3097
    %v3412 = vunpack.c.h.b16 %v3097
    %v3413 = vunpack.c.l.b16 %v3098
    %v3414 = vunpack.c.l.b16 %v3099
    %v3415 = vunpack.c.h.b16 %v3099
    %v3416 = vunpack.c.l.b16 %v3100
    %v3417 = vunpack.c.l.b16 %v3101
    %v3418 = vunpack.c.h.b16 %v3101
    %v3419 = vunpack.c.l.b16 %v3102
    %v3420 = vunpack.c.l.b16 %v3103
    %v3421 = vunpack.c.h.b16 %v3103
    %v3422 = vunpack.c.l.b16 %v3104
    %v3423 = vunpack.c.l.b16 %v3105
    %v3424 = vunpack.c.h.b16 %v3105
    %v3425 = vunpack.c.l.b16 %v3106
    %v3426 = vunpack.c.l.b16 %v3107
    %v3427 = vunpack.c.h.b16 %v3107
    %v3428 = vunpack.c.l.b16 %v3108
    %v3429 = vunpack.c.l.b16 %v3109
    %v3430 = vunpack.c.h.b16 %v3109
    %v3431 = vunpack.c.l.b16 %v3110
    %v3432 = vunpack.c.l.b16 %v3111
    %v3433 = vunpack.c.h.b16 %v3111
    %v3434 = vunpack.c.l.b16 %v3112
    %v3435 = vunpack.c.l.b16 %v3113
    %v3436 = vunpack.c.h.b16 %v3113
    %v3437 = vunpack.c.l.b16 %v3114
    %v3438 = vunpack.c.l.b16 %v3115
    %v3439 = vunpack.c.h.b16 %v3115
    %v3440 = vunpack.c.l.b16 %v3116
    %v3441 = vunpack.c.l.b16 %v3117
    %v3442 = vunpack.c.h.b16 %v3117
    %v3443 = vunpack.c.l.b16 %v3118
    %v3444 = vunpack.c.l.b16 %v3119
    %v3445 = vunpack.c.h.b16 %v3119
    %v3446 = vunpack.c.l.b16 %v3120
    %v3447 = vunpack.c.l.b16 %v3121
    %v3448 = vunpack.c.h.b16 %v3121
    %v3449 = vunpack.c.l.b16 %v3122
    %v3450 = vunpack.c.l.b16 %v3123
    %v3451 = vunpack.c.h.b16 %v3123
    %v3452 = vunpack.c.l.b16 %v3124
    %v3453 = vunpack.c.l.b16 %v3125
    %v3454 = vunpack.c.h.b16 %v3125
    %v3455 = vunpack.c.l.b16 %v3126
    %v3456 = vunpack.c.l.b16 %v3127
    %v3457 = vunpack.c.h.b16 %v3127
    %v3458 = vunpack.c.l.b16 %v3128
    %v3459 = vunpack.c.l.b16 %v3129
    %v3460 = vunpack.c.h.b16 %v3129
    %v3461 = vunpack.c.l.b16 %v3130
    %v3462 = vunpack.c.l.b16 %v3131
    %v3463 = vunpack.c.h.b16 %v3131
    %v3464 = vunpack.c.l.b16 %v3132
    %v3465 = vunpack.c.l.b16 %v3133
    %v3466 = vunpack.c.h.b16 %v3133
    %v3467 = vunpack.c.l.b16 %v3134
    %v3468 = vunpack.c.l.b16 %v3135
    %v3469 = vunpack.c.h.b16 %v3135
    %v3470 = vunpack.c.l.b16 %v3136
    %v3471 = vunpack.c.l.b16 %v3137
    %v3472 = vunpack.c.h.b16 %v3137
    %v3473 = vunpack.c.l.b16 %v3138
    %v3474 = vunpack.c.l.b16 %v3139
    %v3475 = vunpack.c.h.b16 %v3139
    %v3476 = vunpack.c.l.b16 %v3140
    %v3477 = vunpack.c.l.b16 %v3141
    %v3478 = vunpack.c.h.b16 %v3141
    %v3479 = vunpack.c.l.b16 %v3142
    %v3480 = vunpack.c.l.b16 %v3143
    %v3481 = vunpack.c.h.b16 %v3143
    %v3482 = vunpack.c.l.b16 %v3144
    %v3483 = vunpack.c.l.b16 %v3145
    %v3484 = vunpack.c.h.b16 %v3145
    %v3485 = vunpack.c.l.b16 %v3146
    %v3486 = vunpack.c.l.b16 %v3147
    %v3487 = vunpack.c.h.b16 %v3147
    %v3488 = vunpack.c.l.b16 %v3148
    %v3489 = vunpack.c.l.b16 %v3149
    %v3490 = vunpack.c.h.b16 %v3149
    %v3491 = vunpack.c.l.b16 %v3150
    %v3492 = vunpack.c.l.b16 %v3151
    %v3493 = vunpack.c.h.b16 %v3151
    %v3494 = vunpack.c.l.b16 %v3152
    %v3495 = vunpack.c.l.b16 %v3153
    %v3496 = vunpack.c.h.b16 %v3153
    %v3497 = vunpack.c.l.b16 %v3154
    %v3498 = vunpack.c.l.b16 %v3155
    %v3499 = vunpack.c.h.b16 %v3155
    %v3500 = vunpack.c.l.b16 %v3156
    %v3501 = vunpack.c.l.b16 %v3157
    %v3502 = vunpack.c.h.b16 %v3157
    %v3503 = vunpack.c.l.b16 %v3158
    %v3504 = vunpack.c.l.b16 %v3159
    %v3505 = vunpack.c.h.b16 %v3159
    %v3506 = vunpack.c.l.b16 %v3160
    %v3507 = vunpack.c.l.b16 %v3161
    %v3508 = vunpack.c.h.b16 %v3161
    %v3509 = vunpack.c.l.b16 %v3162
    %v3510 = vunpack.c.l.b16 %v3163
    %v3511 = vunpack.c.h.b16 %v3163
    %v3512 = vunpack.c.l.b16 %v3164
    %v3513 = vunpack.c.l.b16 %v3165
    %v3514 = vunpack.c.h.b16 %v3165
    %v3515 = vunpack.c.l.b16 %v3166
    %v3516 = vunpack.c.l.b16 %v3167
    %v3517 = vunpack.c.h.b16 %v3167
    %v3518 = vunpack.c.l.b16 %v3168
    %v3519 = vunpack.c.l.b16 %v3169
    %v3520 = vunpack.c.h.b16 %v3169
    %v3521 = vunpack.c.l.b16 %v3170
    %v3522 = vunpack.c.l.b16 %v3171
    %v3523 = vunpack.c.h.b16 %v3171
    %v3524 = vunpack.c.l.b16 %v3172
    %v3525 = vunpack.c.l.b16 %v3173
    %v3526 = vunpack.c.h.b16 %v3173
    %v3527 = vunpack.c.l.b16 %v3174
    %v3528 = vunpack.c.l.b16 %v3175
    %v3529 = vunpack.c.h.b16 %v3175
    %v3530 = vunpack.c.l.b16 %v3176
    %v3531 = vunpack.c.l.b16 %v3177
    %v3532 = vunpack.c.h.b16 %v3177
    %v3533 = vunpack.c.l.b16 %v3178
    %v3534 = vunpack.c.l.b16 %v3179
    %v3535 = vunpack.c.h.b16 %v3179
    %v3536 = vunpack.c.l.b16 %v3180
    %v3537 = vunpack.c.l.b16 %v3181
    %v3538 = vunpack.c.h.b16 %v3181
    %v3539 = vunpack.c.l.b16 %v3182
    %v3540 = vunpack.c.l.b16 %v3183
    %v3541 = vunpack.c.h.b16 %v3183
    %v3542 = vunpack.c.l.b16 %v3184
    %v3543 = vunpack.c.l.b16 %v3185
    %v3544 = vunpack.c.h.b16 %v3185
    %v3545 = vunpack.c.l.b16 %v3186
    %v3546 = vunpack.c.l.b16 %v3187
    %v3547 = vunpack.c.h.b16 %v3187
    %v3548 = vunpack.c.l.b16 %v3188
    %v3549 = vunpack.c.l.b16 %v3189
    %v3550 = vunpack.c.h.b16 %v3189
    %v3551 = vunpack.c.l.b16 %v3190
    %v3552 = vunpack.c.l.b16 %v3191
    %v3553 = vunpack.c.h.b16 %v3191
    %v3554 = vunpack.c.l.b16 %v3192
    %v3555 = vunpack.c.l.b16 %v3193
    %v3556 = vunpack.c.h.b16 %v3193
    %v3557 = vunpack.c.l.b16 %v3194
    %v3558 = vunpack.c.l.b16 %v3195
    %v3559 = vunpack.c.h.b16 %v3195
    %v3560 = vunpack.c.l.b16 %v3196
    %v3561 = vunpack.c.l.b16 %v3197
    %v3562 = vunpack.c.h.b16 %v3197
    %v3563 = vunpack.c.l.b16 %v3198
    %v3564 = vunpack.c.l.b16 %v3199
    %v3565 = vunpack.c.h.b16 %v3199
    %v3566 = vunpack.c.l.b16 %v3200
    %v3567 = vunpack.c.l.b16 %v3201
    %v3568 = vunpack.c.h.b16 %v3201
    %v3569 = vunpack.c.l.b16 %v3202
    %v3570 = vunpack.c.l.b16 %v3203
    %v3571 = vunpack.c.h.b16 %v3203
    %v3572 = vunpack.c.l.b16 %v3204
    %v3573 = vunpack.c.l.b16 %v3205
    %v3574 = vunpack.c.h.b16 %v3205
    %v3575 = vunpack.c.l.b16 %v3206
    %v3576 = vunpack.c.l.b16 %v3207
    %v3577 = vunpack.c.h.b16 %v3207
    %v3578 = vunpack.c.l.b16 %v3208
    %v3579 = vunpack.c.l.b16 %v3209
    %v3580 = vunpack.c.h.b16 %v3209
    %v3581 = vunpack.c.l.b16 %v3210
    %v3582 = vunpack.c.l.b16 %v3211
    %v3583 = vunpack.c.h.b16 %v3211
    %v3584 = vunpack.c.l.b16 %v3212
    %v3585 = vunpack.c.l.b16 %v3213
    %v3586 = vunpack.c.h.b16 %v3213
    %v3587 = vunpack.c.l.b16 %v3214
    %v3588 = vunpack.c.l.b16 %v3215
    %v3589 = vunpack.c.h.b16 %v3215
    %v3590 = vunpack.c.l.b16 %v3216
    %v3591 = vunpack.c.l.b16 %v3217
    %v3592 = vunpack.c.h.b16 %v3217
    %v3593 = vunpack.c.l.b16 %v3218
    %v3594 = vpack.c.b16 %v3405, %v3402
    %v3595 = vpack.c.b16 %v3406, %v3403
    %v3596 = vpack.c.b16 %v3407, %v3404
    %v3597 = vpack.c.b16 %v3411, %v3408
    %v3598 = vpack.c.b16 %v3412, %v3409
    %v3599 = vpack.c.b16 %v3413, %v3410
    %v3600 = vpack.c.b16 %v3417, %v3414
    %v3601 = vpack.c.b16 %v3418, %v3415
    %v3602 = vpack.c.b16 %v3419, %v3416
    %v3603 = vpack.c.b16 %v3423, %v3420
    %v3604 = vpack.c.b16 %v3424, %v3421
    %v3605 = vpack.c.b16 %v3425, %v3422
    %v3606 = vpack.c.b16 %v3429, %v3426
    %v3607 = vpack.c.b16 %v3430, %v3427
    %v3608 = vpack.c.b16 %v3431, %v3428
    %v3609 = vpack.c.b16 %v3435, %v3432
    %v3610 = vpack.c.b16 %v3436, %v3433
    %v3611 = vpack.c.b16 %v3437, %v3434
    %v3612 = vpack.c.b16 %v3441, %v3438
    %v3613 = vpack.c.b16 %v3442, %v3439
    %v3614 = vpack.c.b16 %v3443, %v3440
    %v3615 = vpack.c.b16 %v3447, %v3444
    %v3616 = vpack.c.b16 %v3448, %v3445
    %v3617 = vpack.c.b16 %v3449, %v3446
    %v3618 = vpack.c.b16 %v3453, %v3450
    %v3619 = vpack.c.b16 %v3454, %v3451
    %v3620 = vpack.c.b16 %v3455, %v3452
    %v3621 = vpack.c.b16 %v3459, %v3456
    %v3622 = vpack.c.b16 %v3460, %v3457
    %v3623 = vpack.c.b16 %v3461, %v3458
    %v3624 = vpack.c.b16 %v3465, %v3462
    %v3625 = vpack.c.b16 %v3466, %v3463
    %v3626 = vpack.c.b16 %v3467, %v3464
    %v3627 = vpack.c.b16 %v3471, %v3468
    %v3628 = vpack.c.b16 %v3472, %v3469
    %v3629 = vpack.c.b16 %v3473, %v3470
    %v3630 = vpack.c.b16 %v3477, %v3474
    %v3631 = vpack.c.b16 %v3478, %v3475
    %v3632 = vpack.c.b16 %v3479, %v3476
    %v3633 = vpack.c.b16 %v3483, %v3480
    %v3634 = vpack.c.b16 %v3484, %v3481
    %v3635 = vpack.c.b16 %v3485, %v3482
    %v3636 = vpack.c.b16 %v3489, %v3486
    %v3637 = vpack.c.b16 %v3490, %v3487
    %v3638 = vpack.c.b16 %v3491, %v3488
    %v3639 = vpack.c.b16 %v3495, %v3492
    %v3640 = vpack.c.b16 %v3496, %v3493
    %v3641 = vpack.c.b16 %v3497, %v3494
    %v3642 = vpack.c.b16 %v3501, %v3498
    %v3643 = vpack.c.b16 %v3502, %v3499
    %v3644 = vpack.c.b16 %v3503, %v3500
    %v3645 = vpack.c.b16 %v3507, %v3504
    %v3646 = vpack.c.b16 %v3508, %v3505
    %v3647 = vpack.c.b16 %v3509, %v3506
    %v3648 = vpack.c.b16 %v3513, %v3510
    %v3649 = vpack.c.b16 %v3514, %v3511
    %v3650 = vpack.c.b16 %v3515, %v3512
    %v3651 = vpack.c.b16 %v3519, %v3516
    %v3652 = vpack.c.b16 %v3520, %v3517
    %v3653 = vpack.c.b16 %v3521, %v3518
    %v3654 = vpack.c.b16 %v3525, %v3522
    %v3655 = vpack.c.b16 %v3526, %v3523
    %v3656 = vpack.c.b16 %v3527, %v3524
    %v3657 = vpack.c.b16 %v3531, %v3528
    %v3658 = vpack.c.b16 %v3532, %v3529
    %v3659 = vpack.c.b16 %v3533, %v3530
    %v3660 = vpack.c.b16 %v3537, %v3534
    %v3661 = vpack.c.b16 %v3538, %v3535
    %v3662 = vpack.c.b16 %v3539, %v3536
    %v3663 = vpack.c.b16 %v3543, %v3540
    %v3664 = vpack.c.b16 %v3544, %v3541
    %v3665 = vpack.c.b16 %v3545, %v3542
    %v3666 = vpack.c.b16 %v3549, %v3546
    %v3667 = vpack.c.b16 %v3550, %v3547
    %v3668 = vpack.c.b16 %v3551, %v3548
    %v3669 = vpack.c.b16 %v3555, %v3552
    %v3670 = vpack.c.b16 %v3556, %v3553
    %v3671 = vpack.c.b16 %v3557, %v3554
    %v3672 = vpack.c.b16 %v3561, %v3558
    %v3673 = vpack.c.b16 %v3562, %v3559
    %v3674 = vpack.c.b16 %v3563, %v3560
    %v3675 = vpack.c.b16 %v3567, %v3564
    %v3676 = vpack.c.b16 %v3568, %v3565
    %v3677 = vpack.c.b16 %v3569, %v3566
    %v3678 = vpack.c.b16 %v3573, %v3570
    %v3679 = vpack.c.b16 %v3574, %v3571
    %v3680 = vpack.c.b16 %v3575, %v3572
    %v3681 = vpack.c.b16 %v3579, %v3576
    %v3682 = vpack.c.b16 %v3580, %v3577
    %v3683 = vpack.c.b16 %v3581, %v3578
    %v3684 = vpack.c.b16 %v3585, %v3582
    %v3685 = vpack.c.b16 %v3586, %v3583
    %v3686 = vpack.c.b16 %v3587, %v3584
    %v3687 = vpack.c.b16 %v3591, %v3588
    %v3688 = vpack.c.b16 %v3592, %v3589
    %v3689 = vpack.c.b16 %v3593, %v3590
    %v3834 = vunpack.c.l.b16 %v3219
    %v3835 = vunpack.c.l.b16 %v3220
    %v3836 = vunpack.c.l.b16 %v3221
    %v3837 = vunpack.c.l.b16 %v3222
    %v3838 = vunpack.c.l.b16 %v3223
    %v3839 = vunpack.c.l.b16 %v3224
    %v3840 = vunpack.c.l.b16 %v3225
    %v3841 = vunpack.c.l.b16 %v3226
    %v3842 = vunpack.c.l.b16 %v3227
    %v3843 = vunpack.c.l.b16 %v3228
    %v3844 = vunpack.c.l.b16 %v3229
    %v3845 = vunpack.c.l.b16 %v3230
    %v3846 = vunpack.c.l.b16 %v3231
    %v3847 = vunpack.c.l.b16 %v3232
    %v3848 = vunpack.c.l.b16 %v3233
    %v3849 = vunpack.c.l.b16 %v3234
    %v3850 = vunpack.c.l.b16 %v3235
    %v3851 = vunpack.c.l.b16 %v3236
    %v3852 = vunpack.c.l.b16 %v3237
    %v3853 = vunpack.c.l.b16 %v3238
    %v3854 = vunpack.c.l.b16 %v3239
    %v3855 = vunpack.c.l.b16 %v3240
    %v3856 = vunpack.c.l.b16 %v3241
    %v3857 = vunpack.c.l.b16 %v3242
    %v3858 = vunpack.c.l.b16 %v3243
    %v3859 = vunpack.c.l.b16 %v3244
    %v3860 = vunpack.c.l.b16 %v3245
    %v3861 = vunpack.c.l.b16 %v3246
    %v3862 = vunpack.c.l.b16 %v3247
    %v3863 = vunpack.c.l.b16 %v3248
    %v3864 = vunpack.c.l.b16 %v3249
    %v3865 = vunpack.c.l.b16 %v3250
    %v3866 = vunpack.c.l.b16 %v3251
    %v3867 = vunpack.c.l.b16 %v3252
    %v3868 = vunpack.c.l.b16 %v3253
    %v3869 = vunpack.c.l.b16 %v3254
    %v3870 = vunpack.c.l.b16 %v3255
    %v3871 = vunpack.c.l.b16 %v3256
    %v3872 = vunpack.c.l.b16 %v3257
    %v3873 = vunpack.c.l.b16 %v3258
    %v3874 = vunpack.c.l.b16 %v3259
    %v3875 = vunpack.c.l.b16 %v3260
    %v3876 = vunpack.c.l.b16 %v3261
    %v3877 = vunpack.c.l.b16 %v3262
    %v3878 = vunpack.c.l.b16 %v3263
    %v3879 = vunpack.c.l.b16 %v3264
    %v3880 = vunpack.c.l.b16 %v3265
    %v3881 = vunpack.c.l.b16 %v3266
    %v3882 = vpack.c.b16 %v3835, %v3834
    %v3883 = vpack.c.b16 %v3837, %v3836
    %v3884 = vpack.c.b16 %v3839, %v3838
    %v3885 = vpack.c.b16 %v3841, %v3840
    %v3886 = vpack.c.b16 %v3843, %v3842
    %v3887 = vpack.c.b16 %v3845, %v3844
    %v3888 = vpack.c.b16 %v3847, %v3846
    %v3889 = vpack.c.b16 %v3849, %v3848
    %v3890 = vpack.c.b16 %v3851, %v3850
    %v3891 = vpack.c.b16 %v3853, %v3852
    %v3892 = vpack.c.b16 %v3855, %v3854
    %v3893 = vpack.c.b16 %v3857, %v3856
    %v3894 = vpack.c.b16 %v3859, %v3858
    %v3895 = vpack.c.b16 %v3861, %v3860
    %v3896 = vpack.c.b16 %v3863, %v3862
    %v3897 = vpack.c.b16 %v3865, %v3864
    %v3898 = vpack.c.b16 %v3867, %v3866
    %v3899 = vpack.c.b16 %v3869, %v3868
    %v3900 = vpack.c.b16 %v3871, %v3870
    %v3901 = vpack.c.b16 %v3873, %v3872
    %v3902 = vpack.c.b16 %v3875, %v3874
    %v3903 = vpack.c.b16 %v3877, %v3876
    %v3904 = vpack.c.b16 %v3879, %v3878
    %v3905 = vpack.c.b16 %v3881, %v3880
    %3930 = vmatprep.subr.bf16.mxu0 0
    %3931 = vmatpush1.bf16.msra.mxu0 %v3882
    %3932 = vmatprep.subr.bf16.mxu0 0
    %3933 = vmatpush1.bf16.msra.mxu0 %v3883
    %3934 = vmatprep.subr.bf16.mxu0 0
    %3935 = vmatpush1.bf16.msra.mxu0 %v3884
    %3936 = vmatprep.subr.bf16.mxu0 0
    %3937 = vmatpush1.bf16.msra.mxu0 %v3885
    %3938 = vmatprep.subr.bf16.mxu0 0
    %3939 = vmatpush1.bf16.msra.mxu0 %v3886
    %3940 = vmatprep.subr.bf16.mxu0 0
    %3941 = vmatpush1.bf16.msra.mxu0 %v3887
    %3942 = vmatprep.subr.bf16.mxu0 0
    %3943 = vmatpush1.bf16.msra.mxu0 %v3888
    %3944 = vmatprep.subr.bf16.mxu0 0
    %3945 = vmatpush1.bf16.msra.mxu0 %v3889
    %3946 = vmatprep.subr.bf16.mxu0 0
    %3947 = vmatpush1.bf16.msra.mxu0 %v3890
    %3948 = vmatprep.subr.bf16.mxu0 0
    %3949 = vmatpush1.bf16.msra.mxu0 %v3891
    %3950 = vmatprep.subr.bf16.mxu0 0
    %3951 = vmatpush1.bf16.msra.mxu0 %v3892
    %3952 = vmatprep.subr.bf16.mxu0 0
    %3953 = vmatpush1.bf16.msra.mxu0 %v3893
    %3954 = vmatprep.subr.bf16.mxu0 0
    %3955 = vmatpush1.bf16.msra.mxu0 %v3894
    %3956 = vmatprep.subr.bf16.mxu0 0
    %3957 = vmatpush1.bf16.msra.mxu0 %v3895
    %3958 = vmatprep.subr.bf16.mxu0 0
    %3959 = vmatpush1.bf16.msra.mxu0 %v3896
    %3960 = vmatprep.subr.bf16.mxu0 0
    %3961 = vmatpush1.bf16.msra.mxu0 %v3897
    %3962 = vmatprep.mubr.bf16.mxu0 %v3595
    %3963 = vmatmul.mubr.bf16.gmra.mrb[0].mxu0 %v3594
    %v3964 = vpop.f32.mrb[0].mxu0
    %v3965 = vadd.f32 %v3272, %v3964
    %v3966 = vpop.f32.mrb[0].mxu0
    %v3967 = vpop.f32.mrb[0].mxu0
    %v3968 = vadd.f32 %v3272, %v3967
    %v3969 = vpop.f32.mrb[0].mxu0
    %3970 = vmatprep.mubr.bf16.mxu0 %v3598
    %3971 = vmatmul.mubr.bf16.gmra.mrb[0].mxu0 %v3597
    %v3972 = vpop.f32.mrb[0].mxu0
    %v3973 = vadd.f32 %v3272, %v3972
    %v3974 = vpop.f32.mrb[0].mxu0
    %v3975 = vpop.f32.mrb[0].mxu0
    %v3976 = vadd.f32 %v3272, %v3975
    %v3977 = vpop.f32.mrb[0].mxu0
    %3978 = vmatprep.mubr.bf16.mxu0 %v3601
    %3979 = vmatmul.mubr.bf16.gmra.mrb[0].mxu0 %v3600
    %v3980 = vpop.f32.mrb[0].mxu0
    %v3981 = vadd.f32 %v3272, %v3980
    %v3982 = vpop.f32.mrb[0].mxu0
    %v3983 = vpop.f32.mrb[0].mxu0
    %v3984 = vadd.f32 %v3272, %v3983
    %v3985 = vpop.f32.mrb[0].mxu0
    %3986 = vmatprep.mubr.bf16.mxu0 %v3604
    %3987 = vmatmul.mubr.bf16.gmra.mrb[0].mxu0 %v3603
    %v3988 = vpop.f32.mrb[0].mxu0
    %v3989 = vadd.f32 %v3272, %v3988
    %v3990 = vpop.f32.mrb[0].mxu0
    %v3991 = vpop.f32.mrb[0].mxu0
    %v3992 = vadd.f32 %v3272, %v3991
    %v3993 = vpop.f32.mrb[0].mxu0
    %3994 = vmatprep.mubr.bf16.mxu0 %v3607
    %3995 = vmatmul.mubr.bf16.gmra.mrb[0].mxu0 %v3606
    %v3996 = vpop.f32.mrb[0].mxu0
    %v3997 = vadd.f32 %v3272, %v3996
    %v3998 = vpop.f32.mrb[0].mxu0
    %v3999 = vpop.f32.mrb[0].mxu0
    %v4000 = vadd.f32 %v3272, %v3999
    %v4001 = vpop.f32.mrb[0].mxu0
    %4002 = vmatprep.mubr.bf16.mxu0 %v3610
    %4003 = vmatmul.mubr.bf16.gmra.mrb[0].mxu0 %v3609
    %v4004 = vpop.f32.mrb[0].mxu0
    %v4005 = vadd.f32 %v3272, %v4004
    %v4006 = vpop.f32.mrb[0].mxu0
    %v4007 = vpop.f32.mrb[0].mxu0
    %v4008 = vadd.f32 %v3272, %v4007
    %v4009 = vpop.f32.mrb[0].mxu0
    %4010 = vmatprep.mubr.bf16.mxu0 %v3613
    %4011 = vmatmul.mubr.bf16.gmra.mrb[0].mxu0 %v3612
    %v4012 = vpop.f32.mrb[0].mxu0
    %v4013 = vadd.f32 %v3272, %v4012
    %v4014 = vpop.f32.mrb[0].mxu0
    %v4015 = vpop.f32.mrb[0].mxu0
    %v4016 = vadd.f32 %v3272, %v4015
    %v4017 = vpop.f32.mrb[0].mxu0
    %4018 = vmatprep.mubr.bf16.mxu0 %v3616
    %4019 = vmatmul.mubr.bf16.gmra.mrb[0].mxu0 %v3615
    %v4020 = vpop.f32.mrb[0].mxu0
    %v4021 = vadd.f32 %v3272, %v4020
    %v4022 = vpop.f32.mrb[0].mxu0
    %v4023 = vpop.f32.mrb[0].mxu0
    %v4024 = vadd.f32 %v3272, %v4023
    %v4025 = vpop.f32.mrb[0].mxu0
    %4026 = vmatprep.mubr.bf16.mxu0 %v3619
    %4027 = vmatmul.mubr.bf16.gmra.mrb[0].mxu0 %v3618
    %v4028 = vpop.f32.mrb[0].mxu0
    %v4029 = vadd.f32 %v3272, %v4028
    %v4030 = vpop.f32.mrb[0].mxu0
    %v4031 = vpop.f32.mrb[0].mxu0
    %v4032 = vadd.f32 %v3272, %v4031
    %v4033 = vpop.f32.mrb[0].mxu0
    %4034 = vmatprep.mubr.bf16.mxu0 %v3622
    %4035 = vmatmul.mubr.bf16.gmra.mrb[0].mxu0 %v3621
    %v4036 = vpop.f32.mrb[0].mxu0
    %v4037 = vadd.f32 %v3272, %v4036
    %v4038 = vpop.f32.mrb[0].mxu0
    %v4039 = vpop.f32.mrb[0].mxu0
    %v4040 = vadd.f32 %v3272, %v4039
    %v4041 = vpop.f32.mrb[0].mxu0
    %4042 = vmatprep.mubr.bf16.mxu0 %v3625
    %4043 = vmatmul.mubr.bf16.gmra.mrb[0].mxu0 %v3624
    %v4044 = vpop.f32.mrb[0].mxu0
    %v4045 = vadd.f32 %v3272, %v4044
    %v4046 = vpop.f32.mrb[0].mxu0
    %v4047 = vpop.f32.mrb[0].mxu0
    %v4048 = vadd.f32 %v3272, %v4047
    %v4049 = vpop.f32.mrb[0].mxu0
    %4050 = vmatprep.mubr.bf16.mxu0 %v3628
    %4051 = vmatmul.mubr.bf16.gmra.mrb[0].mxu0 %v3627
    %v4052 = vpop.f32.mrb[0].mxu0
    %v4053 = vadd.f32 %v3272, %v4052
    %v4054 = vpop.f32.mrb[0].mxu0
    %v4055 = vpop.f32.mrb[0].mxu0
    %v4056 = vadd.f32 %v3272, %v4055
    %v4057 = vpop.f32.mrb[0].mxu0
    %4058 = vmatprep.mubr.bf16.mxu0 %v3631
    %4059 = vmatmul.mubr.bf16.gmra.mrb[0].mxu0 %v3630
    %v4060 = vpop.f32.mrb[0].mxu0
    %v4061 = vadd.f32 %v3272, %v4060
    %v4062 = vpop.f32.mrb[0].mxu0
    %v4063 = vpop.f32.mrb[0].mxu0
    %v4064 = vadd.f32 %v3272, %v4063
    %v4065 = vpop.f32.mrb[0].mxu0
    %4066 = vmatprep.mubr.bf16.mxu0 %v3634
    %4067 = vmatmul.mubr.bf16.gmra.mrb[0].mxu0 %v3633
    %v4068 = vpop.f32.mrb[0].mxu0
    %v4069 = vadd.f32 %v3272, %v4068
    %v4070 = vpop.f32.mrb[0].mxu0
    %v4071 = vpop.f32.mrb[0].mxu0
    %v4072 = vadd.f32 %v3272, %v4071
    %v4073 = vpop.f32.mrb[0].mxu0
    %4074 = vmatprep.mubr.bf16.mxu0 %v3637
    %4075 = vmatmul.mubr.bf16.gmra.mrb[0].mxu0 %v3636
    %v4076 = vpop.f32.mrb[0].mxu0
    %v4077 = vadd.f32 %v3272, %v4076
    %v4078 = vpop.f32.mrb[0].mxu0
    %v4079 = vpop.f32.mrb[0].mxu0
    %v4080 = vadd.f32 %v3272, %v4079
    %v4081 = vpop.f32.mrb[0].mxu0
    %4082 = vmatprep.mubr.bf16.mxu0 %v3640
    %4083 = vmatmul.mubr.bf16.gmra.mrb[0].mxu0 %v3639
    %v4084 = vpop.f32.mrb[0].mxu0
    %v4085 = vadd.f32 %v3272, %v4084
    %v4086 = vpop.f32.mrb[0].mxu0
    %v4087 = vpop.f32.mrb[0].mxu0
    %v4088 = vadd.f32 %v3272, %v4087
    %v4089 = vpop.f32.mrb[0].mxu0
    %4090 = vmatprep.mubr.bf16.mxu0 %v3643
    %4091 = vmatmul.mubr.bf16.gmra.mrb[0].mxu0 %v3642
    %v4092 = vpop.f32.mrb[0].mxu0
    %v4093 = vadd.f32 %v3272, %v4092
    %v4094 = vpop.f32.mrb[0].mxu0
    %v4095 = vpop.f32.mrb[0].mxu0
    %v4096 = vadd.f32 %v3272, %v4095
    %v4097 = vpop.f32.mrb[0].mxu0
    %4098 = vmatprep.mubr.bf16.mxu0 %v3646
    %4099 = vmatmul.mubr.bf16.gmra.mrb[0].mxu0 %v3645
    %v4100 = vpop.f32.mrb[0].mxu0
    %v4101 = vadd.f32 %v3272, %v4100
    %v4102 = vpop.f32.mrb[0].mxu0
    %v4103 = vpop.f32.mrb[0].mxu0
    %v4104 = vadd.f32 %v3272, %v4103
    %v4105 = vpop.f32.mrb[0].mxu0
    %4106 = vmatprep.mubr.bf16.mxu0 %v3649
    %4107 = vmatmul.mubr.bf16.gmra.mrb[0].mxu0 %v3648
    %v4108 = vpop.f32.mrb[0].mxu0
    %v4109 = vadd.f32 %v3272, %v4108
    %v4110 = vpop.f32.mrb[0].mxu0
    %v4111 = vpop.f32.mrb[0].mxu0
    %v4112 = vadd.f32 %v3272, %v4111
    %v4113 = vpop.f32.mrb[0].mxu0
    %4114 = vmatprep.mubr.bf16.mxu0 %v3652
    %4115 = vmatmul.mubr.bf16.gmra.mrb[0].mxu0 %v3651
    %v4116 = vpop.f32.mrb[0].mxu0
    %v4117 = vadd.f32 %v3272, %v4116
    %v4118 = vpop.f32.mrb[0].mxu0
    %v4119 = vpop.f32.mrb[0].mxu0
    %v4120 = vadd.f32 %v3272, %v4119
    %v4121 = vpop.f32.mrb[0].mxu0
    %4122 = vmatprep.mubr.bf16.mxu0 %v3655
    %4123 = vmatmul.mubr.bf16.gmra.mrb[0].mxu0 %v3654
    %v4124 = vpop.f32.mrb[0].mxu0
    %v4125 = vadd.f32 %v3272, %v4124
    %v4126 = vpop.f32.mrb[0].mxu0
    %v4127 = vpop.f32.mrb[0].mxu0
    %v4128 = vadd.f32 %v3272, %v4127
    %v4129 = vpop.f32.mrb[0].mxu0
    %4130 = vmatprep.mubr.bf16.mxu0 %v3658
    %4131 = vmatmul.mubr.bf16.gmra.mrb[0].mxu0 %v3657
    %v4132 = vpop.f32.mrb[0].mxu0
    %v4133 = vadd.f32 %v3272, %v4132
    %v4134 = vpop.f32.mrb[0].mxu0
    %v4135 = vpop.f32.mrb[0].mxu0
    %v4136 = vadd.f32 %v3272, %v4135
    %v4137 = vpop.f32.mrb[0].mxu0
    %4138 = vmatprep.mubr.bf16.mxu0 %v3661
    %4139 = vmatmul.mubr.bf16.gmra.mrb[0].mxu0 %v3660
    %v4140 = vpop.f32.mrb[0].mxu0
    %v4141 = vadd.f32 %v3272, %v4140
    %v4142 = vpop.f32.mrb[0].mxu0
    %v4143 = vpop.f32.mrb[0].mxu0
    %v4144 = vadd.f32 %v3272, %v4143
    %v4145 = vpop.f32.mrb[0].mxu0
    %4146 = vmatprep.mubr.bf16.mxu0 %v3664
    %4147 = vmatmul.mubr.bf16.gmra.mrb[0].mxu0 %v3663
    %v4148 = vpop.f32.mrb[0].mxu0
    %v4149 = vadd.f32 %v3272, %v4148
    %v4150 = vpop.f32.mrb[0].mxu0
    %v4151 = vpop.f32.mrb[0].mxu0
    %v4152 = vadd.f32 %v3272, %v4151
    %v4153 = vpop.f32.mrb[0].mxu0
    %4154 = vmatprep.mubr.bf16.mxu0 %v3667
    %4155 = vmatmul.mubr.bf16.gmra.mrb[0].mxu0 %v3666
    %v4156 = vpop.f32.mrb[0].mxu0
    %v4157 = vadd.f32 %v3272, %v4156
    %v4158 = vpop.f32.mrb[0].mxu0
    %v4159 = vpop.f32.mrb[0].mxu0
    %v4160 = vadd.f32 %v3272, %v4159
    %v4161 = vpop.f32.mrb[0].mxu0
    %4162 = vmatprep.mubr.bf16.mxu0 %v3670
    %4163 = vmatmul.mubr.bf16.gmra.mrb[0].mxu0 %v3669
    %v4164 = vpop.f32.mrb[0].mxu0
    %v4165 = vadd.f32 %v3272, %v4164
    %v4166 = vpop.f32.mrb[0].mxu0
    %v4167 = vpop.f32.mrb[0].mxu0
    %v4168 = vadd.f32 %v3272, %v4167
    %v4169 = vpop.f32.mrb[0].mxu0
    %4170 = vmatprep.mubr.bf16.mxu0 %v3673
    %4171 = vmatmul.mubr.bf16.gmra.mrb[0].mxu0 %v3672
    %v4172 = vpop.f32.mrb[0].mxu0
    %v4173 = vadd.f32 %v3272, %v4172
    %v4174 = vpop.f32.mrb[0].mxu0
    %v4175 = vpop.f32.mrb[0].mxu0
    %v4176 = vadd.f32 %v3272, %v4175
    %v4177 = vpop.f32.mrb[0].mxu0
    %4178 = vmatprep.mubr.bf16.mxu0 %v3676
    %4179 = vmatmul.mubr.bf16.gmra.mrb[0].mxu0 %v3675
    %v4180 = vpop.f32.mrb[0].mxu0
    %v4181 = vadd.f32 %v3272, %v4180
    %v4182 = vpop.f32.mrb[0].mxu0
    %v4183 = vpop.f32.mrb[0].mxu0
    %v4184 = vadd.f32 %v3272, %v4183
    %v4185 = vpop.f32.mrb[0].mxu0
    %4186 = vmatprep.mubr.bf16.mxu0 %v3679
    %4187 = vmatmul.mubr.bf16.gmra.mrb[0].mxu0 %v3678
    %v4188 = vpop.f32.mrb[0].mxu0
    %v4189 = vadd.f32 %v3272, %v4188
    %v4190 = vpop.f32.mrb[0].mxu0
    %v4191 = vpop.f32.mrb[0].mxu0
    %v4192 = vadd.f32 %v3272, %v4191
    %v4193 = vpop.f32.mrb[0].mxu0
    %4194 = vmatprep.mubr.bf16.mxu0 %v3682
    %4195 = vmatmul.mubr.bf16.gmra.mrb[0].mxu0 %v3681
    %v4196 = vpop.f32.mrb[0].mxu0
    %v4197 = vadd.f32 %v3272, %v4196
    %v4198 = vpop.f32.mrb[0].mxu0
    %v4199 = vpop.f32.mrb[0].mxu0
    %v4200 = vadd.f32 %v3272, %v4199
    %v4201 = vpop.f32.mrb[0].mxu0
    %4202 = vmatprep.mubr.bf16.mxu0 %v3685
    %4203 = vmatmul.mubr.bf16.gmra.mrb[0].mxu0 %v3684
    %v4204 = vpop.f32.mrb[0].mxu0
    %v4205 = vadd.f32 %v3272, %v4204
    %v4206 = vpop.f32.mrb[0].mxu0
    %v4207 = vpop.f32.mrb[0].mxu0
    %v4208 = vadd.f32 %v3272, %v4207
    %v4209 = vpop.f32.mrb[0].mxu0
    %4210 = vmatprep.mubr.bf16.mxu0 %v3688
    %4211 = vmatmul.mubr.bf16.gmra.mrb[0].mxu0 %v3687
    %v4212 = vpop.f32.mrb[0].mxu0
    %v4213 = vadd.f32 %v3272, %v4212
    %v4214 = vpop.f32.mrb[0].mxu0
    %v4215 = vpop.f32.mrb[0].mxu0
    %v4216 = vadd.f32 %v3272, %v4215
    %v4217 = vpop.f32.mrb[0].mxu0
    %4218 = vdwg.mxu0
    %4219 = vmatprep.subr.bf16.mxu0 0
    %4220 = vmatpush1.bf16.msra.mxu0 %v3898
    %4221 = vmatprep.subr.bf16.mxu0 0
    %4222 = vmatpush1.bf16.msra.mxu0 %v3899
    %4223 = vmatprep.subr.bf16.mxu0 0
    %4224 = vmatpush1.bf16.msra.mxu0 %v3900
    %4225 = vmatprep.subr.bf16.mxu0 0
    %4226 = vmatpush1.bf16.msra.mxu0 %v3901
    %4227 = vmatprep.subr.bf16.mxu0 0
    %4228 = vmatpush1.bf16.msra.mxu0 %v3902
    %4229 = vmatprep.subr.bf16.mxu0 0
    %4230 = vmatpush1.bf16.msra.mxu0 %v3903
    %4231 = vmatprep.subr.bf16.mxu0 0
    %4232 = vmatpush1.bf16.msra.mxu0 %v3904
    %4233 = vmatprep.subr.bf16.mxu0 0
    %4234 = vmatpush1.bf16.msra.mxu0 %v3905
    %4235 = vmatprep.subr.bf16.mxu0 0
    %4236 = vmatpush1.bf16.msra.mxu0 0
    %4237 = vmatprep.subr.bf16.mxu0 0
    %4238 = vmatpush1.bf16.msra.mxu0 0
    %4239 = vmatprep.subr.bf16.mxu0 0
    %4240 = vmatpush1.bf16.msra.mxu0 0
    %4241 = vmatprep.subr.bf16.mxu0 0
    %4242 = vmatpush1.bf16.msra.mxu0 0
    %4243 = vmatprep.subr.bf16.mxu0 0
    %4244 = vmatpush1.bf16.msra.mxu0 0
    %4245 = vmatprep.subr.bf16.mxu0 0
    %4246 = vmatpush1.bf16.msra.mxu0 0
    %4247 = vmatprep.subr.bf16.mxu0 0
    %4248 = vmatpush1.bf16.msra.mxu0 0
    %4249 = vmatprep.subr.bf16.mxu0 0
    %4250 = vmatpush1.bf16.msra.mxu0 0
    %4251 = vmatprep.mubr.bf16.mxu0 0
    %4252 = vmatmul.mubr.bf16.gmra.mrb[0].mxu0 %v3596
    %v4253 = vpop.f32.mrb[0].mxu0
    %v4254 = vadd.f32 %v3965, %v4253
    %v4255 = vpop.f32.mrb[0].mxu0
    %v4256 = vpop.f32.mrb[0].mxu0
    %v4257 = vadd.f32 %v3968, %v4256
    %v4258 = vpop.f32.mrb[0].mxu0
    %4259 = vmatprep.mubr.bf16.mxu0 0
    %4260 = vmatmul.mubr.bf16.gmra.mrb[0].mxu0 %v3599
    %v4261 = vpop.f32.mrb[0].mxu0
    %v4262 = vadd.f32 %v3973, %v4261
    %v4263 = vpop.f32.mrb[0].mxu0
    %v4264 = vpop.f32.mrb[0].mxu0
    %v4265 = vadd.f32 %v3976, %v4264
    %v4266 = vpop.f32.mrb[0].mxu0
    %4267 = vmatprep.mubr.bf16.mxu0 0
    %4268 = vmatmul.mubr.bf16.gmra.mrb[0].mxu0 %v3602
    %v4269 = vpop.f32.mrb[0].mxu0
    %v4270 = vadd.f32 %v3981, %v4269
    %v4271 = vpop.f32.mrb[0].mxu0
    %v4272 = vpop.f32.mrb[0].mxu0
    %v4273 = vadd.f32 %v3984, %v4272
    %v4274 = vpop.f32.mrb[0].mxu0
    %4275 = vmatprep.mubr.bf16.mxu0 0
    %4276 = vmatmul.mubr.bf16.gmra.mrb[0].mxu0 %v3605
    %v4277 = vpop.f32.mrb[0].mxu0
    %v4278 = vadd.f32 %v3989, %v4277
    %v4279 = vpop.f32.mrb[0].mxu0
    %v4280 = vpop.f32.mrb[0].mxu0
    %v4281 = vadd.f32 %v3992, %v4280
    %v4282 = vpop.f32.mrb[0].mxu0
    %4283 = vmatprep.mubr.bf16.mxu0 0
    %4284 = vmatmul.mubr.bf16.gmra.mrb[0].mxu0 %v3608
    %v4285 = vpop.f32.mrb[0].mxu0
    %v4286 = vadd.f32 %v3997, %v4285
    %v4287 = vpop.f32.mrb[0].mxu0
    %v4288 = vpop.f32.mrb[0].mxu0
    %v4289 = vadd.f32 %v4000, %v4288
    %v4290 = vpop.f32.mrb[0].mxu0
    %4291 = vmatprep.mubr.bf16.mxu0 0
    %4292 = vmatmul.mubr.bf16.gmra.mrb[0].mxu0 %v3611
    %v4293 = vpop.f32.mrb[0].mxu0
    %v4294 = vadd.f32 %v4005, %v4293
    %v4295 = vpop.f32.mrb[0].mxu0
    %v4296 = vpop.f32.mrb[0].mxu0
    %v4297 = vadd.f32 %v4008, %v4296
    %v4298 = vpop.f32.mrb[0].mxu0
    %4299 = vmatprep.mubr.bf16.mxu0 0
    %4300 = vmatmul.mubr.bf16.gmra.mrb[0].mxu0 %v3614
    %v4301 = vpop.f32.mrb[0].mxu0
    %v4302 = vadd.f32 %v4013, %v4301
    %v4303 = vpop.f32.mrb[0].mxu0
    %v4304 = vpop.f32.mrb[0].mxu0
    %v4305 = vadd.f32 %v4016, %v4304
    %v4306 = vpop.f32.mrb[0].mxu0
    %4307 = vmatprep.mubr.bf16.mxu0 0
    %4308 = vmatmul.mubr.bf16.gmra.mrb[0].mxu0 %v3617
    %v4309 = vpop.f32.mrb[0].mxu0
    %v4310 = vadd.f32 %v4021, %v4309
    %v4311 = vpop.f32.mrb[0].mxu0
    %v4312 = vpop.f32.mrb[0].mxu0
    %v4313 = vadd.f32 %v4024, %v4312
    %v4314 = vpop.f32.mrb[0].mxu0
    %4315 = vmatprep.mubr.bf16.mxu0 0
    %4316 = vmatmul.mubr.bf16.gmra.mrb[0].mxu0 %v3620
    %v4317 = vpop.f32.mrb[0].mxu0
    %v4318 = vadd.f32 %v4029, %v4317
    %v4319 = vpop.f32.mrb[0].mxu0
    %v4320 = vpop.f32.mrb[0].mxu0
    %v4321 = vadd.f32 %v4032, %v4320
    %v4322 = vpop.f32.mrb[0].mxu0
    %4323 = vmatprep.mubr.bf16.mxu0 0
    %4324 = vmatmul.mubr.bf16.gmra.mrb[0].mxu0 %v3623
    %v4325 = vpop.f32.mrb[0].mxu0
    %v4326 = vadd.f32 %v4037, %v4325
    %v4327 = vpop.f32.mrb[0].mxu0
    %v4328 = vpop.f32.mrb[0].mxu0
    %v4329 = vadd.f32 %v4040, %v4328
    %v4330 = vpop.f32.mrb[0].mxu0
    %4331 = vmatprep.mubr.bf16.mxu0 0
    %4332 = vmatmul.mubr.bf16.gmra.mrb[0].mxu0 %v3626
    %v4333 = vpop.f32.mrb[0].mxu0
    %v4334 = vadd.f32 %v4045, %v4333
    %v4335 = vpop.f32.mrb[0].mxu0
    %v4336 = vpop.f32.mrb[0].mxu0
    %v4337 = vadd.f32 %v4048, %v4336
    %v4338 = vpop.f32.mrb[0].mxu0
    %4339 = vmatprep.mubr.bf16.mxu0 0
    %4340 = vmatmul.mubr.bf16.gmra.mrb[0].mxu0 %v3629
    %v4341 = vpop.f32.mrb[0].mxu0
    %v4342 = vadd.f32 %v4053, %v4341
    %v4343 = vpop.f32.mrb[0].mxu0
    %v4344 = vpop.f32.mrb[0].mxu0
    %v4345 = vadd.f32 %v4056, %v4344
    %v4346 = vpop.f32.mrb[0].mxu0
    %4347 = vmatprep.mubr.bf16.mxu0 0
    %4348 = vmatmul.mubr.bf16.gmra.mrb[0].mxu0 %v3632
    %v4349 = vpop.f32.mrb[0].mxu0
    %v4350 = vadd.f32 %v4061, %v4349
    %v4351 = vpop.f32.mrb[0].mxu0
    %v4352 = vpop.f32.mrb[0].mxu0
    %v4353 = vadd.f32 %v4064, %v4352
    %v4354 = vpop.f32.mrb[0].mxu0
    %4355 = vmatprep.mubr.bf16.mxu0 0
    %4356 = vmatmul.mubr.bf16.gmra.mrb[0].mxu0 %v3635
    %v4357 = vpop.f32.mrb[0].mxu0
    %v4358 = vadd.f32 %v4069, %v4357
    %v4359 = vpop.f32.mrb[0].mxu0
    %v4360 = vpop.f32.mrb[0].mxu0
    %v4361 = vadd.f32 %v4072, %v4360
    %v4362 = vpop.f32.mrb[0].mxu0
    %4363 = vmatprep.mubr.bf16.mxu0 0
    %4364 = vmatmul.mubr.bf16.gmra.mrb[0].mxu0 %v3638
    %v4365 = vpop.f32.mrb[0].mxu0
    %v4366 = vadd.f32 %v4077, %v4365
    %v4367 = vpop.f32.mrb[0].mxu0
    %v4368 = vpop.f32.mrb[0].mxu0
    %v4369 = vadd.f32 %v4080, %v4368
    %v4370 = vpop.f32.mrb[0].mxu0
    %4371 = vmatprep.mubr.bf16.mxu0 0
    %4372 = vmatmul.mubr.bf16.gmra.mrb[0].mxu0 %v3641
    %v4373 = vpop.f32.mrb[0].mxu0
    %v4374 = vadd.f32 %v4085, %v4373
    %v4375 = vpop.f32.mrb[0].mxu0
    %v4376 = vpop.f32.mrb[0].mxu0
    %v4377 = vadd.f32 %v4088, %v4376
    %v4378 = vpop.f32.mrb[0].mxu0
    %4379 = vmatprep.mubr.bf16.mxu0 0
    %4380 = vmatmul.mubr.bf16.gmra.mrb[0].mxu0 %v3644
    %v4381 = vpop.f32.mrb[0].mxu0
    %v4382 = vadd.f32 %v4093, %v4381
    %v4383 = vpop.f32.mrb[0].mxu0
    %v4384 = vpop.f32.mrb[0].mxu0
    %v4385 = vadd.f32 %v4096, %v4384
    %v4386 = vpop.f32.mrb[0].mxu0
    %4387 = vmatprep.mubr.bf16.mxu0 0
    %4388 = vmatmul.mubr.bf16.gmra.mrb[0].mxu0 %v3647
    %v4389 = vpop.f32.mrb[0].mxu0
    %v4390 = vadd.f32 %v4101, %v4389
    %v4391 = vpop.f32.mrb[0].mxu0
    %v4392 = vpop.f32.mrb[0].mxu0
    %v4393 = vadd.f32 %v4104, %v4392
    %v4394 = vpop.f32.mrb[0].mxu0
    %4395 = vmatprep.mubr.bf16.mxu0 0
    %4396 = vmatmul.mubr.bf16.gmra.mrb[0].mxu0 %v3650
    %v4397 = vpop.f32.mrb[0].mxu0
    %v4398 = vadd.f32 %v4109, %v4397
    %v4399 = vpop.f32.mrb[0].mxu0
    %v4400 = vpop.f32.mrb[0].mxu0
    %v4401 = vadd.f32 %v4112, %v4400
    %v4402 = vpop.f32.mrb[0].mxu0
    %4403 = vmatprep.mubr.bf16.mxu0 0
    %4404 = vmatmul.mubr.bf16.gmra.mrb[0].mxu0 %v3653
    %v4405 = vpop.f32.mrb[0].mxu0
    %v4406 = vadd.f32 %v4117, %v4405
    %v4407 = vpop.f32.mrb[0].mxu0
    %v4408 = vpop.f32.mrb[0].mxu0
    %v4409 = vadd.f32 %v4120, %v4408
    %v4410 = vpop.f32.mrb[0].mxu0
    %4411 = vmatprep.mubr.bf16.mxu0 0
    %4412 = vmatmul.mubr.bf16.gmra.mrb[0].mxu0 %v3656
    %v4413 = vpop.f32.mrb[0].mxu0
    %v4414 = vadd.f32 %v4125, %v4413
    %v4415 = vpop.f32.mrb[0].mxu0
    %v4416 = vpop.f32.mrb[0].mxu0
    %v4417 = vadd.f32 %v4128, %v4416
    %v4418 = vpop.f32.mrb[0].mxu0
    %4419 = vmatprep.mubr.bf16.mxu0 0
    %4420 = vmatmul.mubr.bf16.gmra.mrb[0].mxu0 %v3659
    %v4421 = vpop.f32.mrb[0].mxu0
    %v4422 = vadd.f32 %v4133, %v4421
    %v4423 = vpop.f32.mrb[0].mxu0
    %v4424 = vpop.f32.mrb[0].mxu0
    %v4425 = vadd.f32 %v4136, %v4424
    %v4426 = vpop.f32.mrb[0].mxu0
    %4427 = vmatprep.mubr.bf16.mxu0 0
    %4428 = vmatmul.mubr.bf16.gmra.mrb[0].mxu0 %v3662
    %v4429 = vpop.f32.mrb[0].mxu0
    %v4430 = vadd.f32 %v4141, %v4429
    %v4431 = vpop.f32.mrb[0].mxu0
    %v4432 = vpop.f32.mrb[0].mxu0
    %v4433 = vadd.f32 %v4144, %v4432
    %v4434 = vpop.f32.mrb[0].mxu0
    %4435 = vmatprep.mubr.bf16.mxu0 0
    %4436 = vmatmul.mubr.bf16.gmra.mrb[0].mxu0 %v3665
    %v4437 = vpop.f32.mrb[0].mxu0
    %v4438 = vadd.f32 %v4149, %v4437
    %v4439 = vpop.f32.mrb[0].mxu0
    %v4440 = vpop.f32.mrb[0].mxu0
    %v4441 = vadd.f32 %v4152, %v4440
    %v4442 = vpop.f32.mrb[0].mxu0
    %4443 = vmatprep.mubr.bf16.mxu0 0
    %4444 = vmatmul.mubr.bf16.gmra.mrb[0].mxu0 %v3668
    %v4445 = vpop.f32.mrb[0].mxu0
    %v4446 = vadd.f32 %v4157, %v4445
    %v4447 = vpop.f32.mrb[0].mxu0
    %v4448 = vpop.f32.mrb[0].mxu0
    %v4449 = vadd.f32 %v4160, %v4448
    %v4450 = vpop.f32.mrb[0].mxu0
    %4451 = vmatprep.mubr.bf16.mxu0 0
    %4452 = vmatmul.mubr.bf16.gmra.mrb[0].mxu0 %v3671
    %v4453 = vpop.f32.mrb[0].mxu0
    %v4454 = vadd.f32 %v4165, %v4453
    %v4455 = vpop.f32.mrb[0].mxu0
    %v4456 = vpop.f32.mrb[0].mxu0
    %v4457 = vadd.f32 %v4168, %v4456
    %v4458 = vpop.f32.mrb[0].mxu0
    %4459 = vmatprep.mubr.bf16.mxu0 0
    %4460 = vmatmul.mubr.bf16.gmra.mrb[0].mxu0 %v3674
    %v4461 = vpop.f32.mrb[0].mxu0
    %v4462 = vadd.f32 %v4173, %v4461
    %v4463 = vpop.f32.mrb[0].mxu0
    %v4464 = vpop.f32.mrb[0].mxu0
    %v4465 = vadd.f32 %v4176, %v4464
    %v4466 = vpop.f32.mrb[0].mxu0
    %4467 = vmatprep.mubr.bf16.mxu0 0
    %4468 = vmatmul.mubr.bf16.gmra.mrb[0].mxu0 %v3677
    %v4469 = vpop.f32.mrb[0].mxu0
    %v4470 = vadd.f32 %v4181, %v4469
    %v4471 = vpop.f32.mrb[0].mxu0
    %v4472 = vpop.f32.mrb[0].mxu0
    %v4473 = vadd.f32 %v4184, %v4472
    %v4474 = vpop.f32.mrb[0].mxu0
    %4475 = vmatprep.mubr.bf16.mxu0 0
    %4476 = vmatmul.mubr.bf16.gmra.mrb[0].mxu0 %v3680
    %v4477 = vpop.f32.mrb[0].mxu0
    %v4478 = vadd.f32 %v4189, %v4477
    %v4479 = vpop.f32.mrb[0].mxu0
    %v4480 = vpop.f32.mrb[0].mxu0
    %v4481 = vadd.f32 %v4192, %v4480
    %v4482 = vpop.f32.mrb[0].mxu0
    %4483 = vmatprep.mubr.bf16.mxu0 0
    %4484 = vmatmul.mubr.bf16.gmra.mrb[0].mxu0 %v3683
    %v4485 = vpop.f32.mrb[0].mxu0
    %v4486 = vadd.f32 %v4197, %v4485
    %v4487 = vpop.f32.mrb[0].mxu0
    %v4488 = vpop.f32.mrb[0].mxu0
    %v4489 = vadd.f32 %v4200, %v4488
    %v4490 = vpop.f32.mrb[0].mxu0
    %4491 = vmatprep.mubr.bf16.mxu0 0
    %4492 = vmatmul.mubr.bf16.gmra.mrb[0].mxu0 %v3686
    %v4493 = vpop.f32.mrb[0].mxu0
    %v4494 = vadd.f32 %v4205, %v4493
    %v4495 = vpop.f32.mrb[0].mxu0
    %v4496 = vpop.f32.mrb[0].mxu0
    %v4497 = vadd.f32 %v4208, %v4496
    %v4498 = vpop.f32.mrb[0].mxu0
    %4499 = vmatprep.mubr.bf16.mxu0 0
    %4500 = vmatmul.mubr.bf16.gmra.mrb[0].mxu0 %v3689
    %v4501 = vpop.f32.mrb[0].mxu0
    %v4502 = vadd.f32 %v4213, %v4501
    %v4503 = vpop.f32.mrb[0].mxu0
    %v4504 = vpop.f32.mrb[0].mxu0
    %v4505 = vadd.f32 %v4216, %v4504
    %v4506 = vpop.f32.mrb[0].mxu0
    %4507 = vdwg.mxu0
    %v4508 = vpack.c.bf16 %v4257, %v4254
    %v4509 = vpack.c.bf16 %v4265, %v4262
    %v4510 = vpack.c.bf16 %v4273, %v4270
    %v4511 = vpack.c.bf16 %v4281, %v4278
    %v4512 = vpack.c.bf16 %v4289, %v4286
    %v4513 = vpack.c.bf16 %v4297, %v4294
    %v4514 = vpack.c.bf16 %v4305, %v4302
    %v4515 = vpack.c.bf16 %v4313, %v4310
    %v4516 = vpack.c.bf16 %v4321, %v4318
    %v4517 = vpack.c.bf16 %v4329, %v4326
    %v4518 = vpack.c.bf16 %v4337, %v4334
    %v4519 = vpack.c.bf16 %v4345, %v4342
    %v4520 = vpack.c.bf16 %v4353, %v4350
    %v4521 = vpack.c.bf16 %v4361, %v4358
    %v4522 = vpack.c.bf16 %v4369, %v4366
    %v4523 = vpack.c.bf16 %v4377, %v4374
    %v4524 = vpack.c.bf16 %v4385, %v4382
    %v4525 = vpack.c.bf16 %v4393, %v4390
    %v4526 = vpack.c.bf16 %v4401, %v4398
    %v4527 = vpack.c.bf16 %v4409, %v4406
    %v4528 = vpack.c.bf16 %v4417, %v4414
    %v4529 = vpack.c.bf16 %v4425, %v4422
    %v4530 = vpack.c.bf16 %v4433, %v4430
    %v4531 = vpack.c.bf16 %v4441, %v4438
    %v4532 = vpack.c.bf16 %v4449, %v4446
    %v4533 = vpack.c.bf16 %v4457, %v4454
    %v4534 = vpack.c.bf16 %v4465, %v4462
    %v4535 = vpack.c.bf16 %v4473, %v4470
    %v4536 = vpack.c.bf16 %v4481, %v4478
    %v4537 = vpack.c.bf16 %v4489, %v4486
    %v4538 = vpack.c.bf16 %v4497, %v4494
    %v4539 = vpack.c.bf16 %v4505, %v4502
    %v4572 = vunpack.c.l.b16 %v4508
    %v4573 = vunpack.c.h.b16 %v4508
    %v4574 = vunpack.c.l.b16 %v4509
    %v4575 = vunpack.c.h.b16 %v4509
    %v4576 = vunpack.c.l.b16 %v4510
    %v4577 = vunpack.c.h.b16 %v4510
    %v4578 = vunpack.c.l.b16 %v4511
    %v4579 = vunpack.c.h.b16 %v4511
    %v4580 = vunpack.c.l.b16 %v4512
    %v4581 = vunpack.c.h.b16 %v4512
    %v4582 = vunpack.c.l.b16 %v4513
    %v4583 = vunpack.c.h.b16 %v4513
    %v4584 = vunpack.c.l.b16 %v4514
    %v4585 = vunpack.c.h.b16 %v4514
    %v4586 = vunpack.c.l.b16 %v4515
    %v4587 = vunpack.c.h.b16 %v4515
    %v4588 = vunpack.c.l.b16 %v4516
    %v4589 = vunpack.c.h.b16 %v4516
    %v4590 = vunpack.c.l.b16 %v4517
    %v4591 = vunpack.c.h.b16 %v4517
    %v4592 = vunpack.c.l.b16 %v4518
    %v4593 = vunpack.c.h.b16 %v4518
    %v4594 = vunpack.c.l.b16 %v4519
    %v4595 = vunpack.c.h.b16 %v4519
    %v4596 = vunpack.c.l.b16 %v4520
    %v4597 = vunpack.c.h.b16 %v4520
    %v4598 = vunpack.c.l.b16 %v4521
    %v4599 = vunpack.c.h.b16 %v4521
    %v4600 = vunpack.c.l.b16 %v4522
    %v4601 = vunpack.c.h.b16 %v4522
    %v4602 = vunpack.c.l.b16 %v4523
    %v4603 = vunpack.c.h.b16 %v4523
    %v4604 = vunpack.c.l.b16 %v4524
    %v4605 = vunpack.c.h.b16 %v4524
    %v4606 = vunpack.c.l.b16 %v4525
    %v4607 = vunpack.c.h.b16 %v4525
    %v4608 = vunpack.c.l.b16 %v4526
    %v4609 = vunpack.c.h.b16 %v4526
    %v4610 = vunpack.c.l.b16 %v4527
    %v4611 = vunpack.c.h.b16 %v4527
    %v4612 = vunpack.c.l.b16 %v4528
    %v4613 = vunpack.c.h.b16 %v4528
    %v4614 = vunpack.c.l.b16 %v4529
    %v4615 = vunpack.c.h.b16 %v4529
    %v4616 = vunpack.c.l.b16 %v4530
    %v4617 = vunpack.c.h.b16 %v4530
    %v4618 = vunpack.c.l.b16 %v4531
    %v4619 = vunpack.c.h.b16 %v4531
    %v4620 = vunpack.c.l.b16 %v4532
    %v4621 = vunpack.c.h.b16 %v4532
    %v4622 = vunpack.c.l.b16 %v4533
    %v4623 = vunpack.c.h.b16 %v4533
    %v4624 = vunpack.c.l.b16 %v4534
    %v4625 = vunpack.c.h.b16 %v4534
    %v4626 = vunpack.c.l.b16 %v4535
    %v4627 = vunpack.c.h.b16 %v4535
    %v4628 = vunpack.c.l.b16 %v4536
    %v4629 = vunpack.c.h.b16 %v4536
    %v4630 = vunpack.c.l.b16 %v4537
    %v4631 = vunpack.c.h.b16 %v4537
    %v4632 = vunpack.c.l.b16 %v4538
    %v4633 = vunpack.c.h.b16 %v4538
    %v4634 = vunpack.c.l.b16 %v4539
    %v4635 = vunpack.c.h.b16 %v4539
    %v4636 = vpack.c.b16 %v4572, %v4572
    %v4637 = vpack.c.b16 %v4573, %v4573
    %v4638 = vpack.c.b16 %v4574, %v4574
    %v4639 = vpack.c.b16 %v4575, %v4575
    %v4640 = vpack.c.b16 %v4576, %v4576
    %v4641 = vpack.c.b16 %v4577, %v4577
    %v4642 = vpack.c.b16 %v4578, %v4578
    %v4643 = vpack.c.b16 %v4579, %v4579
    %v4644 = vpack.c.b16 %v4580, %v4580
    %v4645 = vpack.c.b16 %v4581, %v4581
    %v4646 = vpack.c.b16 %v4582, %v4582
    %v4647 = vpack.c.b16 %v4583, %v4583
    %v4648 = vpack.c.b16 %v4584, %v4584
    %v4649 = vpack.c.b16 %v4585, %v4585
    %v4650 = vpack.c.b16 %v4586, %v4586
    %v4651 = vpack.c.b16 %v4587, %v4587
    %v4652 = vpack.c.b16 %v4588, %v4588
    %v4653 = vpack.c.b16 %v4589, %v4589
    %v4654 = vpack.c.b16 %v4590, %v4590
    %v4655 = vpack.c.b16 %v4591, %v4591
    %v4656 = vpack.c.b16 %v4592, %v4592
    %v4657 = vpack.c.b16 %v4593, %v4593
    %v4658 = vpack.c.b16 %v4594, %v4594
    %v4659 = vpack.c.b16 %v4595, %v4595
    %v4660 = vpack.c.b16 %v4596, %v4596
    %v4661 = vpack.c.b16 %v4597, %v4597
    %v4662 = vpack.c.b16 %v4598, %v4598
    %v4663 = vpack.c.b16 %v4599, %v4599
    %v4664 = vpack.c.b16 %v4600, %v4600
    %v4665 = vpack.c.b16 %v4601, %v4601
    %v4666 = vpack.c.b16 %v4602, %v4602
    %v4667 = vpack.c.b16 %v4603, %v4603
    %v4668 = vpack.c.b16 %v4604, %v4604
    %v4669 = vpack.c.b16 %v4605, %v4605
    %v4670 = vpack.c.b16 %v4606, %v4606
    %v4671 = vpack.c.b16 %v4607, %v4607
    %v4672 = vpack.c.b16 %v4608, %v4608
    %v4673 = vpack.c.b16 %v4609, %v4609
    %v4674 = vpack.c.b16 %v4610, %v4610
    %v4675 = vpack.c.b16 %v4611, %v4611
    %v4676 = vpack.c.b16 %v4612, %v4612
    %v4677 = vpack.c.b16 %v4613, %v4613
    %v4678 = vpack.c.b16 %v4614, %v4614
    %v4679 = vpack.c.b16 %v4615, %v4615
    %v4680 = vpack.c.b16 %v4616, %v4616
    %v4681 = vpack.c.b16 %v4617, %v4617
    %v4682 = vpack.c.b16 %v4618, %v4618
    %v4683 = vpack.c.b16 %v4619, %v4619
    %v4684 = vpack.c.b16 %v4620, %v4620
    %v4685 = vpack.c.b16 %v4621, %v4621
    %v4686 = vpack.c.b16 %v4622, %v4622
    %v4687 = vpack.c.b16 %v4623, %v4623
    %v4688 = vpack.c.b16 %v4624, %v4624
    %v4689 = vpack.c.b16 %v4625, %v4625
    %v4690 = vpack.c.b16 %v4626, %v4626
    %v4691 = vpack.c.b16 %v4627, %v4627
    %v4692 = vpack.c.b16 %v4628, %v4628
    %v4693 = vpack.c.b16 %v4629, %v4629
    %v4694 = vpack.c.b16 %v4630, %v4630
    %v4695 = vpack.c.b16 %v4631, %v4631
    %v4696 = vpack.c.b16 %v4632, %v4632
    %v4697 = vpack.c.b16 %v4633, %v4633
    %v4698 = vpack.c.b16 %v4634, %v4634
    %v4699 = vpack.c.b16 %v4635, %v4635
    %4764 = vst [vmem:[%s4] sm:$0xf] %v4636
    %4765 = vst [vmem:[%s4 + $0x4] sm:$0xf] %v4637
    %4766 = vst [vmem:[%s4 + $0x8] sm:$0xf] %v4638
    %4767 = vst [vmem:[%s4 + $0xc] sm:$0xf] %v4639
    %4768 = vst [vmem:[%s4 + $0x10] sm:$0xf] %v4640
    %4769 = vst [vmem:[%s4 + $0x14] sm:$0xf] %v4641
    %4770 = vst [vmem:[%s4 + $0x18] sm:$0xf] %v4642
    %4771 = vst [vmem:[%s4 + $0x1c] sm:$0xf] %v4643
    %4772 = vst [vmem:[%s4 + $0x20] sm:$0xf] %v4644
    %4773 = vst [vmem:[%s4 + $0x24] sm:$0xf] %v4645
    %4774 = vst [vmem:[%s4 + $0x28] sm:$0xf] %v4646
    %4775 = vst [vmem:[%s4 + $0x2c] sm:$0xf] %v4647
    %4776 = vst [vmem:[%s4 + $0x30] sm:$0xf] %v4648
    %4777 = vst [vmem:[%s4 + $0x34] sm:$0xf] %v4649
    %4778 = vst [vmem:[%s4 + $0x38] sm:$0xf] %v4650
    %4779 = vst [vmem:[%s4 + $0x3c] sm:$0xf] %v4651
    %4780 = vst [vmem:[%s4 + $0x40] sm:$0xf] %v4652
    %4781 = vst [vmem:[%s4 + $0x44] sm:$0xf] %v4653
    %4782 = vst [vmem:[%s4 + $0x48] sm:$0xf] %v4654
    %4783 = vst [vmem:[%s4 + $0x4c] sm:$0xf] %v4655
    %4784 = vst [vmem:[%s4 + $0x50] sm:$0xf] %v4656
    %4785 = vst [vmem:[%s4 + $0x54] sm:$0xf] %v4657
    %4786 = vst [vmem:[%s4 + $0x58] sm:$0xf] %v4658
    %4787 = vst [vmem:[%s4 + $0x5c] sm:$0xf] %v4659
    %4788 = vst [vmem:[%s4 + $0x60] sm:$0xf] %v4660
    %4789 = vst [vmem:[%s4 + $0x64] sm:$0xf] %v4661
    %4790 = vst [vmem:[%s4 + $0x68] sm:$0xf] %v4662
    %4791 = vst [vmem:[%s4 + $0x6c] sm:$0xf] %v4663
    %4792 = vst [vmem:[%s4 + $0x70] sm:$0xf] %v4664
    %4793 = vst [vmem:[%s4 + $0x74] sm:$0xf] %v4665
    %4794 = vst [vmem:[%s4 + $0x78] sm:$0xf] %v4666
    %4795 = vst [vmem:[%s4 + $0x7c] sm:$0xf] %v4667
    %4796 = vst [vmem:[%s4 + $0x80] sm:$0xf] %v4668
    %4797 = vst [vmem:[%s4 + $0x84] sm:$0xf] %v4669
    %4798 = vst [vmem:[%s4 + $0x88] sm:$0xf] %v4670
    %4799 = vst [vmem:[%s4 + $0x8c] sm:$0xf] %v4671
    %4800 = vst [vmem:[%s4 + $0x90] sm:$0xf] %v4672
    %4801 = vst [vmem:[%s4 + $0x94] sm:$0xf] %v4673
    %4802 = vst [vmem:[%s4 + $0x98] sm:$0xf] %v4674
    %4803 = vst [vmem:[%s4 + $0x9c] sm:$0xf] %v4675
    %4804 = vst [vmem:[%s4 + $0xa0] sm:$0xf] %v4676
    %4805 = vst [vmem:[%s4 + $0xa4] sm:$0xf] %v4677
    %4806 = vst [vmem:[%s4 + $0xa8] sm:$0xf] %v4678
    %4807 = vst [vmem:[%s4 + $0xac] sm:$0xf] %v4679
    %4808 = vst [vmem:[%s4 + $0xb0] sm:$0xf] %v4680
    %4809 = vst [vmem:[%s4 + $0xb4] sm:$0xf] %v4681
    %4810 = vst [vmem:[%s4 + $0xb8] sm:$0xf] %v4682
    %4811 = vst [vmem:[%s4 + $0xbc] sm:$0xf] %v4683
    %4812 = vst [vmem:[%s4 + $0xc0] sm:$0xf] %v4684
    %4813 = vst [vmem:[%s4 + $0xc4] sm:$0xf] %v4685
    %4814 = vst [vmem:[%s4 + $0xc8] sm:$0xf] %v4686
    %4815 = vst [vmem:[%s4 + $0xcc] sm:$0xf] %v4687
    %4816 = vst [vmem:[%s4 + $0xd0] sm:$0xf] %v4688
    %4817 = vst [vmem:[%s4 + $0xd4] sm:$0xf] %v4689
    %4818 = vst [vmem:[%s4 + $0xd8] sm:$0xf] %v4690
    %4819 = vst [vmem:[%s4 + $0xdc] sm:$0xf] %v4691
    %4820 = vst [vmem:[%s4 + $0xe0] sm:$0xf] %v4692
    %4821 = vst [vmem:[%s4 + $0xe4] sm:$0xf] %v4693
    %4822 = vst [vmem:[%s4 + $0xe8] sm:$0xf] %v4694
    %4823 = vst [vmem:[%s4 + $0xec] sm:$0xf] %v4695
    %4824 = vst [vmem:[%s4 + $0xf0] sm:$0xf] %v4696
    %4825 = vst [vmem:[%s4 + $0xf4] sm:$0xf] %v4697
    %4826 = vst [vmem:[%s4 + $0xf8] sm:$0xf] %v4698
    %4827 = vst [vmem:[%s4 + $0xfc] sm:$0xf] %v4699
    // Predicated region
    $region14: #{rpn_forward.2} parent=1 // pred_check
      _
    $region15: #{rpn_forward.2} parent=1 // pred_check_branch
      %4829 = sbr.rel (0) target = $region17
    $region16: #{rpn_forward.2} parent=1 // pred_region
      _
    $region17: #{rpn_forward.2} parent=1 // pred_fallthru
      _
    // Predicated region
    $region18: #{rpn_forward.2} parent=1 // pred_check
      _
    $region19: #{rpn_forward.2} parent=1 // pred_check_branch
      %4831 = sbr.rel (0) target = $region21
    $region20: #{rpn_forward.2} parent=1 // pred_region
      _
    $region21: #{rpn_forward.2} parent=1 // pred_fallthru
      _

</llo_original>
